<compile_context>
chip_gen: v6e
topology: v6e:2x2x1
jax: 0.10.0
libtpu: 0.0.40
codegen_flags: <defaults>
</compile_context>

<pallas_src>
import jax
import jax.numpy as jnp
from jax import lax
from jax.experimental import pallas as pl
from jax.experimental.pallas import tpu as pltpu


def _conv_row_matrices(w_hwio, W):
    """Expand a 3x3 HWIO conv weight into per-kernel-row band matrices.

    Returns (3, W*Cin, W*Cout).  For kernel row kh the matrix M satisfies
        y[h, w*Cout + co] = sum_kh  x_row[h - 1 + kh, :] @ M[kh]
    where x_row[r] is the (W-unpadded) input row r flattened as [w*Cin + ci]
    (rows outside [0, H) are zero) and y[h] is the output row flattened as
    [w*Cout + co].  All three kw taps and the width zero-padding are baked
    into the band structure, so a 3x3 conv becomes 3 large K = W*Cin matmuls
    instead of 9 tiny K = Cin matmuls.
    """
    KH, KW, Cin, Cout = w_hwio.shape
    Wp = W + 2
    cols = jnp.arange(W)
    mats = []
    for kh in range(KH):
        # base[w, w', ci, co] = w_hwio[kh, w'-w, ci, co]  when 0 <= w'-w < KW
        # (w' indexes the width-padded input).
        base = jnp.zeros((W, Wp, Cin, Cout), w_hwio.dtype)
        for kw in range(KW):
            base = base.at[cols, cols + kw].set(w_hwio[kh, kw])
        m = jnp.transpose(base, (1, 2, 0, 3))            # (Wp, Cin, W, Cout)
        m = m[1:W + 1]                                   # drop the W-pad rows
        mats.append(m.reshape(W * Cin, W * Cout))
    return jnp.stack(mats)                               # (3, W*Cin, W*Cout)


def prepare_basic_block_params(params, W, eps=1e-5):
    """Fold eval-mode BatchNorm into the conv weights and pre-expand the banded
    bf16 matmul matrices.  Call once per parameter set (hoisted out of the
    per-forward hot path)."""
    (w1, g1, be1, m1, v1, w2, g2, be2, m2, v2) = params
    Cout = w1.shape[-1]
    WC = W * Cout
    inv1 = g1 / jnp.sqrt(v1 + eps)
    inv2 = g2 / jnp.sqrt(v2 + eps)
    w1m = _conv_row_matrices(w1 * inv1, W).astype(jnp.bfloat16)   # (3, WC, WC)
    w2m = _conv_row_matrices(w2 * inv2, W).astype(jnp.bfloat16)   # (3, WC, WC)
    b1row = jnp.tile(be1 - m1 * inv1, W).reshape(1, WC).astype(jnp.float32)
    b2row = jnp.tile(be2 - m2 * inv2, W).reshape(1, WC).astype(jnp.float32)
    return w1m, b1row, w2m, b2row


def basic_block_kernel(xpad_ref, w1_ref, b1_ref, w2_ref, b2_ref, out_ref, mid_ref):
    # xpad_ref: (NB, H+2, W*Cin)   f32  H-padded (not W-padded) input, lane dense
    # w1_ref  : (3, W*Cin, W*Cout) bf16 conv1 band matrices (BN1 scale folded in)
    # b1_ref  : (1, W*Cout)        f32  folded BN1 bias, tiled over w
    # w2_ref  : (3, W*Cout, W*Cout) bf16 conv2 band matrices (BN2 scale folded in)
    # b2_ref  : (1, W*Cout)        f32
    # out_ref : (NB, H, W*Cout)    f32
    # mid_ref : VMEM scratch (NB, H+2, W*Cout) bf16 -- conv1 output with a
    #           1-row zero border per image (provides conv2's H padding)
    NB, Hp2, WC = xpad_ref.shape
    H = Hp2 - 2
    M = NB * H

    # ---- conv1 (+ folded BN1 scale): 3 row matmuls.  Slabs are read straight
    #      from the ref per kh so only one (M, WC) slab is live at a time. ----
    def conv1_slab(kh):
        return xpad_ref[:, kh:kh + H, :].astype(jnp.bfloat16).reshape(M, WC)

    acc1 = jnp.dot(conv1_slab(0), w1_ref[0], preferred_element_type=jnp.float32)
    acc1 += jnp.dot(conv1_slab(1), w1_ref[1], preferred_element_type=jnp.float32)
    acc1 += jnp.dot(conv1_slab(2), w1_ref[2], preferred_element_type=jnp.float32)

    # ---- BN1 bias + ReLU; single f32 -> bf16 cast for conv2 ----
    y_bf = jnp.maximum(acc1 + b1_ref[...], 0.0).astype(jnp.bfloat16)   # (M, WC)

    # Stash conv1 output with a 1-row zero border per image so conv2 sees its
    # H padding.  Only the two border rows are zeroed each step (cheap, lane
    # dense); no full-buffer re-zero.  (Do NOT hoist this init behind
    # program_id == 0: with a 'parallel' grid the other TensorCore never runs
    # step 0.)
    zrow = jnp.zeros((NB, 1, WC), jnp.bfloat16)
    mid_ref[:, 0:1, :] = zrow
    mid_ref[:, H + 1:H + 2, :] = zrow
    mid_ref[:, 1:H + 1, :] = y_bf.reshape(NB, H, WC)

    # ---- conv2 (+ folded BN2 scale): center row fed from the live bf16 value,
    #      top/bottom rows straight from the bf16 scratch (already MXU dtype) ----
    acc2 = jnp.dot(y_bf, w2_ref[1], preferred_element_type=jnp.float32)
    acc2 += jnp.dot(mid_ref[:, 0:H, :].reshape(M, WC), w2_ref[0],
                    preferred_element_type=jnp.float32)
    acc2 += jnp.dot(mid_ref[:, 2:H + 2, :].reshape(M, WC), w2_ref[2],
                    preferred_element_type=jnp.float32)

    # ---- BN2 bias + identity residual (read in f32 from the same input
    #      block, keeps accuracy) + ReLU; lane-dense f32 store ----
    res = xpad_ref[:, 1:H + 1, :].reshape(M, WC)
    z = acc2 + b2_ref[...] + res
    out_ref[...] = jnp.maximum(z, 0.0).reshape(NB, H, WC)


def _pick_images_per_step(N, H):
    """Smallest divisor of N giving M = NB*H >= 128 while keeping >= 2 grid
    steps (so both v7x TensorCores / megacore halves get work)."""
    target = max(1, -(-128 // H))
    divisors = [d for d in range(1, N + 1) if N % d == 0]
    two_step = [d for d in divisors if N // d >= 2]
    pool = two_step if two_step else divisors
    ge = [d for d in pool if d >= target]
    return min(ge) if ge else max(pool)


def basic_block_forward(x_nhwc, prepared, images_per_step=None):
    """BasicBlock forward (stride=1, identity shortcut), eval-mode BN folded."""
    # TODO(synk): stride>1 / downsample branch of BasicBlock is not implemented
    # (downsample is None in the configuration exercised here).
    w1m, b1row, w2m, b2row = prepared
    N, H, W, Cin = x_nhwc.shape
    WC = w1m.shape[-1]
    Cout = WC // W
    assert Cin == Cout, "identity residual requires in_channels == out_channels"
    assert w1m.shape[1] == W * Cin

    NB = _pick_images_per_step(N, H) if images_per_step is None else images_per_step
    assert N % NB == 0, "batch must be divisible by images_per_step"

    # Single lane-dense activation stream: H-padded only, W folded into lanes.
    xpad = jnp.pad(x_nhwc, ((0, 0), (1, 1), (0, 0), (0, 0))).reshape(N, H + 2, W * Cin)

    out = pl.pallas_call(
        basic_block_kernel,
        out_shape=jax.ShapeDtypeStruct((N, H, WC), jnp.float32),
        grid_spec=pltpu.PrefetchScalarGridSpec(
            num_scalar_prefetch=0,
            grid=(N // NB,),
            in_specs=[
                pl.BlockSpec((NB, H + 2, W * Cin), lambda n: (n, 0, 0)),
                # NOTE: the weight/bias streams below are grid-invariant
                # (constant index_map, fetched once); they could be marked
                # pipeline_mode=pl.Buffered(1) for ~0.8 MiB of extra VMEM
                # headroom if NB is ever pushed toward the scoped limit.
                pl.BlockSpec((3, WC, WC), lambda n: (0, 0, 0)),
                pl.BlockSpec((1, WC), lambda n: (0, 0)),
                pl.BlockSpec((3, WC, WC), lambda n: (0, 0, 0)),
                pl.BlockSpec((1, WC), lambda n: (0, 0)),
            ],
            out_specs=pl.BlockSpec((NB, H, WC), lambda n: (n, 0, 0)),
            scratch_shapes=[pltpu.VMEM((NB, H + 2, WC), jnp.bfloat16)],
        ),
        compiler_params=pltpu.CompilerParams(
            dimension_semantics=("parallel",)),
    )(xpad, w1m, b1row, w2m, b2row)
    return out.reshape(N, H, W, Cout)


def _reference(x_nhwc, params, eps=1e-5):
    """Pure-JAX reference (same math as the PyTorch module, eval-mode BN)."""
    (w1, g1, be1, m1, v1, w2, g2, be2, m2, v2) = params
    dn = ("NHWC", "HWIO", "NHWC")
    y = lax.conv_general_dilated(x_nhwc, w1, (1, 1), "SAME", dimension_numbers=dn)
    y = (y - m1) / jnp.sqrt(v1 + eps) * g1 + be1
    y = jnp.maximum(y, 0.0)
    z = lax.conv_general_dilated(y, w2, (1, 1), "SAME", dimension_numbers=dn)
    z = (z - m2) / jnp.sqrt(v2 + eps) * g2 + be2
    return jnp.maximum(z + x_nhwc, 0.0)


if __name__ == "__main__":
    # Small but MXU-friendly test: 16 images so the auto-picked NB=8 gives
    # M = 8*16 = 128 matmul rows per step with a 2-step grid.
    N, C, H, W = 16, 16, 16, 16          # in_channels == out_channels, stride=1
    key = jax.random.PRNGKey(0)
    keys = jax.random.split(key, 11)

    x_nchw = jax.random.normal(keys[0], (N, C, H, W), jnp.float32)
    x_nhwc = jnp.transpose(x_nchw, (0, 2, 3, 1))

    w1 = jax.random.normal(keys[1], (3, 3, C, C), jnp.float32) * 0.05   # HWIO
    w2 = jax.random.normal(keys[2], (3, 3, C, C), jnp.float32) * 0.05   # HWIO
    g1 = 1.0 + 0.1 * jax.random.normal(keys[3], (C,), jnp.float32)
    be1 = 0.1 * jax.random.normal(keys[4], (C,), jnp.float32)
    m1 = 0.1 * jax.random.normal(keys[5], (C,), jnp.float32)
    v1 = 1.0 + 0.1 * jnp.abs(jax.random.normal(keys[6], (C,), jnp.float32))
    g2 = 1.0 + 0.1 * jax.random.normal(keys[7], (C,), jnp.float32)
    be2 = 0.1 * jax.random.normal(keys[8], (C,), jnp.float32)
    m2 = 0.1 * jax.random.normal(keys[9], (C,), jnp.float32)
    v2 = 1.0 + 0.1 * jnp.abs(jax.random.normal(keys[10], (C,), jnp.float32))

    params = (w1, g1, be1, m1, v1, w2, g2, be2, m2, v2)

    # BN fold + band-matrix expansion hoisted out of the forward hot path.
    prepared = jax.block_until_ready(prepare_basic_block_params(params, W))

    out = jax.block_until_ready(basic_block_forward(x_nhwc, prepared))
    ref = jax.block_until_ready(_reference(x_nhwc, params))

    assert out.shape == (N, H, W, C)
    # bf16 matmul inputs (f32 accumulation, f32 residual) -> loosened tolerance.
    assert bool(jnp.allclose(out, ref, atol=2e-2, rtol=2e-2)), (
        "mismatch vs reference: max abs diff = "
        f"{float(jnp.max(jnp.abs(out - ref)))}")

    print("KERNEL_OK")
</pallas_src>

<mosaic_0001>
module attributes {stable_mosaic.version = 11 : i64} {
  func.func @basic_block_kernel(%arg0: i32, %arg1: memref<8x18x256xf32, #tpu.memory_space<vmem>>, %arg2: memref<3x256x256xbf16, #tpu.memory_space<vmem>>, %arg3: memref<1x256xf32, #tpu.memory_space<vmem>>, %arg4: memref<3x256x256xbf16, #tpu.memory_space<vmem>>, %arg5: memref<1x256xf32, #tpu.memory_space<vmem>>, %arg6: memref<8x16x256xf32, #tpu.memory_space<vmem>>, %arg7: memref<8x18x256xbf16, #tpu.memory_space<vmem>>) attributes {dimension_semantics = [#tpu.dimension_semantics<parallel>], iteration_bounds = array<i64: 2>, scalar_prefetch = 0 : i64, scratch_operands = 1 : i64, tpu.core_type = #tpu.core_type<tc>, window_params = [{transform_indices = @transform_0, window_bounds = array<i64: 8, 18, 256>}, {pipeline_mode = #tpu.pipeline_mode<synchronous>, transform_indices = @transform_1, window_bounds = array<i64: 3, 256, 256>}, {pipeline_mode = #tpu.pipeline_mode<synchronous>, transform_indices = @transform_2, window_bounds = array<i64: 1, 256>}, {pipeline_mode = #tpu.pipeline_mode<synchronous>, transform_indices = @transform_3, window_bounds = array<i64: 3, 256, 256>}, {pipeline_mode = #tpu.pipeline_mode<synchronous>, transform_indices = @transform_4, window_bounds = array<i64: 1, 256>}, {transform_indices = @transform_5, window_bounds = array<i64: 8, 16, 256>}]} {
    %c0 = arith.constant 0 : index
    %c0_0 = arith.constant 0 : index
    %c0_1 = arith.constant 0 : index
    %0 = vector.load %arg1[%c0, %c0_0, %c0_1] : memref<8x18x256xf32, #tpu.memory_space<vmem>>, vector<8x16x256xf32>
    %1 = arith.truncf %0 : vector<8x16x256xf32> to vector<8x16x256xbf16>
    %2 = vector.shape_cast %1 : vector<8x16x256xbf16> to vector<128x256xbf16>
    %c0_2 = arith.constant 0 : index
    %c0_3 = arith.constant 0 : index
    %c0_4 = arith.constant 0 : index
    %3 = vector.load %arg2[%c0_2, %c0_3, %c0_4] : memref<3x256x256xbf16, #tpu.memory_space<vmem>>, vector<1x256x256xbf16>
    %4 = vector.shape_cast %3 : vector<1x256x256xbf16> to vector<256x256xbf16>
    %cst = arith.constant dense<0.000000e+00> : vector<128x256xf32>
    %5 = tpu.matmul %2, %4, %cst {dimension_numbers = #tpu.dot_dimension_numbers<[1], [0], [0], [1], [0, 0, 1, 1], [], []>} : vector<128x256xbf16>, vector<256x256xbf16>, vector<128x256xf32> -> vector<128x256xf32>
    %c0_5 = arith.constant 0 : index
    %c1 = arith.constant 1 : index
    %c0_6 = arith.constant 0 : index
    %6 = vector.load %arg1[%c0_5, %c1, %c0_6] : memref<8x18x256xf32, #tpu.memory_space<vmem>>, vector<8x16x256xf32>
    %7 = arith.truncf %6 : vector<8x16x256xf32> to vector<8x16x256xbf16>
    %8 = vector.shape_cast %7 : vector<8x16x256xbf16> to vector<128x256xbf16>
    %c1_7 = arith.constant 1 : index
    %c0_8 = arith.constant 0 : index
    %c0_9 = arith.constant 0 : index
    %9 = vector.load %arg2[%c1_7, %c0_8, %c0_9] : memref<3x256x256xbf16, #tpu.memory_space<vmem>>, vector<1x256x256xbf16>
    %10 = vector.shape_cast %9 : vector<1x256x256xbf16> to vector<256x256xbf16>
    %cst_10 = arith.constant dense<0.000000e+00> : vector<128x256xf32>
    %11 = tpu.matmul %8, %10, %cst_10 {dimension_numbers = #tpu.dot_dimension_numbers<[1], [0], [0], [1], [0, 0, 1, 1], [], []>} : vector<128x256xbf16>, vector<256x256xbf16>, vector<128x256xf32> -> vector<128x256xf32>
    %12 = arith.addf %5, %11 : vector<128x256xf32>
    %c0_11 = arith.constant 0 : index
    %c2 = arith.constant 2 : index
    %c0_12 = arith.constant 0 : index
    %13 = vector.load %arg1[%c0_11, %c2, %c0_12] : memref<8x18x256xf32, #tpu.memory_space<vmem>>, vector<8x16x256xf32>
    %14 = arith.truncf %13 : vector<8x16x256xf32> to vector<8x16x256xbf16>
    %15 = vector.shape_cast %14 : vector<8x16x256xbf16> to vector<128x256xbf16>
    %c2_13 = arith.constant 2 : index
    %c0_14 = arith.constant 0 : index
    %c0_15 = arith.constant 0 : index
    %16 = vector.load %arg2[%c2_13, %c0_14, %c0_15] : memref<3x256x256xbf16, #tpu.memory_space<vmem>>, vector<1x256x256xbf16>
    %17 = vector.shape_cast %16 : vector<1x256x256xbf16> to vector<256x256xbf16>
    %cst_16 = arith.constant dense<0.000000e+00> : vector<128x256xf32>
    %18 = tpu.matmul %15, %17, %cst_16 {dimension_numbers = #tpu.dot_dimension_numbers<[1], [0], [0], [1], [0, 0, 1, 1], [], []>} : vector<128x256xbf16>, vector<256x256xbf16>, vector<128x256xf32> -> vector<128x256xf32>
    %19 = arith.addf %12, %18 : vector<128x256xf32>
    %c0_17 = arith.constant 0 : index
    %c0_18 = arith.constant 0 : index
    %20 = vector.load %arg3[%c0_17, %c0_18] : memref<1x256xf32, #tpu.memory_space<vmem>>, vector<1x256xf32>
    %21 = vector.broadcast %20 : vector<1x256xf32> to vector<128x256xf32>
    %22 = arith.addf %19, %21 : vector<128x256xf32>
    %cst_19 = arith.constant 0.000000e+00 : f32
    %23 = vector.broadcast %cst_19 : f32 to vector<128x256xf32>
    %24 = arith.maximumf %22, %23 : vector<128x256xf32>
    %25 = arith.truncf %24 : vector<128x256xf32> to vector<128x256xbf16>
    %cst_20 = arith.constant 0.000000e+00 : bf16
    %26 = vector.broadcast %cst_20 : bf16 to vector<8x1x256xbf16>
    %c0_21 = arith.constant 0 : index
    %c0_22 = arith.constant 0 : index
    %c0_23 = arith.constant 0 : index
    %27 = vector.load %arg7[%c0_21, %c0_22, %c0_23] : memref<8x18x256xbf16, #tpu.memory_space<vmem>>, vector<8x1x256xbf16>
    tpu.vector_store %arg7[%c0_21, %c0_22, %c0_23], %26 {strides = array<i32>} : memref<8x18x256xbf16, #tpu.memory_space<vmem>>, vector<8x1x256xbf16>,
    %c0_24 = arith.constant 0 : index
    %c17 = arith.constant 17 : index
    %c0_25 = arith.constant 0 : index
    %28 = vector.load %arg7[%c0_24, %c17, %c0_25] : memref<8x18x256xbf16, #tpu.memory_space<vmem>>, vector<8x1x256xbf16>
    tpu.vector_store %arg7[%c0_24, %c17, %c0_25], %26 {strides = array<i32>} : memref<8x18x256xbf16, #tpu.memory_space<vmem>>, vector<8x1x256xbf16>,
    %29 = vector.shape_cast %25 : vector<128x256xbf16> to vector<8x16x256xbf16>
    %c0_26 = arith.constant 0 : index
    %c1_27 = arith.constant 1 : index
    %c0_28 = arith.constant 0 : index
    %30 = vector.load %arg7[%c0_26, %c1_27, %c0_28] : memref<8x18x256xbf16, #tpu.memory_space<vmem>>, vector<8x16x256xbf16>
    tpu.vector_store %arg7[%c0_26, %c1_27, %c0_28], %29 {strides = array<i32>} : memref<8x18x256xbf16, #tpu.memory_space<vmem>>, vector<8x16x256xbf16>,
    %c1_29 = arith.constant 1 : index
    %c0_30 = arith.constant 0 : index
    %c0_31 = arith.constant 0 : index
    %31 = vector.load %arg4[%c1_29, %c0_30, %c0_31] : memref<3x256x256xbf16, #tpu.memory_space<vmem>>, vector<1x256x256xbf16>
    %32 = vector.shape_cast %31 : vector<1x256x256xbf16> to vector<256x256xbf16>
    %cst_32 = arith.constant dense<0.000000e+00> : vector<128x256xf32>
    %33 = tpu.matmul %25, %32, %cst_32 {dimension_numbers = #tpu.dot_dimension_numbers<[1], [0], [0], [1], [0, 0, 1, 1], [], []>} : vector<128x256xbf16>, vector<256x256xbf16>, vector<128x256xf32> -> vector<128x256xf32>
    %c0_33 = arith.constant 0 : index
    %c0_34 = arith.constant 0 : index
    %c0_35 = arith.constant 0 : index
    %34 = vector.load %arg7[%c0_33, %c0_34, %c0_35] : memref<8x18x256xbf16, #tpu.memory_space<vmem>>, vector<8x16x256xbf16>
    %35 = vector.shape_cast %34 : vector<8x16x256xbf16> to vector<128x256xbf16>
    %c0_36 = arith.constant 0 : index
    %c0_37 = arith.constant 0 : index
    %c0_38 = arith.constant 0 : index
    %36 = vector.load %arg4[%c0_36, %c0_37, %c0_38] : memref<3x256x256xbf16, #tpu.memory_space<vmem>>, vector<1x256x256xbf16>
    %37 = vector.shape_cast %36 : vector<1x256x256xbf16> to vector<256x256xbf16>
    %cst_39 = arith.constant dense<0.000000e+00> : vector<128x256xf32>
    %38 = tpu.matmul %35, %37, %cst_39 {dimension_numbers = #tpu.dot_dimension_numbers<[1], [0], [0], [1], [0, 0, 1, 1], [], []>} : vector<128x256xbf16>, vector<256x256xbf16>, vector<128x256xf32> -> vector<128x256xf32>
    %39 = arith.addf %33, %38 : vector<128x256xf32>
    %c0_40 = arith.constant 0 : index
    %c2_41 = arith.constant 2 : index
    %c0_42 = arith.constant 0 : index
    %40 = vector.load %arg7[%c0_40, %c2_41, %c0_42] : memref<8x18x256xbf16, #tpu.memory_space<vmem>>, vector<8x16x256xbf16>
    %41 = vector.shape_cast %40 : vector<8x16x256xbf16> to vector<128x256xbf16>
    %c2_43 = arith.constant 2 : index
    %c0_44 = arith.constant 0 : index
    %c0_45 = arith.constant 0 : index
    %42 = vector.load %arg4[%c2_43, %c0_44, %c0_45] : memref<3x256x256xbf16, #tpu.memory_space<vmem>>, vector<1x256x256xbf16>
    %43 = vector.shape_cast %42 : vector<1x256x256xbf16> to vector<256x256xbf16>
    %cst_46 = arith.constant dense<0.000000e+00> : vector<128x256xf32>
    %44 = tpu.matmul %41, %43, %cst_46 {dimension_numbers = #tpu.dot_dimension_numbers<[1], [0], [0], [1], [0, 0, 1, 1], [], []>} : vector<128x256xbf16>, vector<256x256xbf16>, vector<128x256xf32> -> vector<128x256xf32>
    %45 = arith.addf %39, %44 : vector<128x256xf32>
    %c0_47 = arith.constant 0 : index
    %c1_48 = arith.constant 1 : index
    %c0_49 = arith.constant 0 : index
    %46 = vector.load %arg1[%c0_47, %c1_48, %c0_49] : memref<8x18x256xf32, #tpu.memory_space<vmem>>, vector<8x16x256xf32>
    %47 = vector.shape_cast %46 : vector<8x16x256xf32> to vector<128x256xf32>
    %c0_50 = arith.constant 0 : index
    %c0_51 = arith.constant 0 : index
    %48 = vector.load %arg5[%c0_50, %c0_51] : memref<1x256xf32, #tpu.memory_space<vmem>>, vector<1x256xf32>
    %49 = vector.broadcast %48 : vector<1x256xf32> to vector<128x256xf32>
    %50 = arith.addf %45, %49 : vector<128x256xf32>
    %51 = arith.addf %50, %47 : vector<128x256xf32>
    %cst_52 = arith.constant 0.000000e+00 : f32
    %52 = vector.broadcast %cst_52 : f32 to vector<128x256xf32>
    %53 = arith.maximumf %51, %52 : vector<128x256xf32>
    %54 = vector.shape_cast %53 : vector<128x256xf32> to vector<8x16x256xf32>
    %c0_53 = arith.constant 0 : index
    %c0_54 = arith.constant 0 : index
    %c0_55 = arith.constant 0 : index
    %55 = vector.load %arg6[%c0_53, %c0_54, %c0_55] : memref<8x16x256xf32, #tpu.memory_space<vmem>>, vector<8x16x256xf32>
    tpu.vector_store %arg6[%c0_53, %c0_54, %c0_55], %54 {strides = array<i32>} : memref<8x16x256xf32, #tpu.memory_space<vmem>>, vector<8x16x256xf32>,
    return
  }
  func.func @transform_0(%arg0: i32) -> (i32, i32, i32) {
    %c0_i32 = arith.constant 0 : i32
    %c0_i32_0 = arith.constant 0 : i32
    %c0_i32_1 = arith.constant 0 : i32
    return %arg0, %c0_i32, %c0_i32_0 : i32, i32, i32
  }
  func.func @transform_1(%arg0: i32) -> (i32, i32, i32) {
    %c0_i32 = arith.constant 0 : i32
    %c0_i32_0 = arith.constant 0 : i32
    %c0_i32_1 = arith.constant 0 : i32
    %c0_i32_2 = arith.constant 0 : i32
    return %c0_i32, %c0_i32_0, %c0_i32_1 : i32, i32, i32
  }
  func.func @transform_2(%arg0: i32) -> (i32, i32) {
    %c0_i32 = arith.constant 0 : i32
    %c0_i32_0 = arith.constant 0 : i32
    %c0_i32_1 = arith.constant 0 : i32
    return %c0_i32, %c0_i32_0 : i32, i32
  }
  func.func @transform_3(%arg0: i32) -> (i32, i32, i32) {
    %c0_i32 = arith.constant 0 : i32
    %c0_i32_0 = arith.constant 0 : i32
    %c0_i32_1 = arith.constant 0 : i32
    %c0_i32_2 = arith.constant 0 : i32
    return %c0_i32, %c0_i32_0, %c0_i32_1 : i32, i32, i32
  }
  func.func @transform_4(%arg0: i32) -> (i32, i32) {
    %c0_i32 = arith.constant 0 : i32
    %c0_i32_0 = arith.constant 0 : i32
    %c0_i32_1 = arith.constant 0 : i32
    return %c0_i32, %c0_i32_0 : i32, i32
  }
  func.func @transform_5(%arg0: i32) -> (i32, i32, i32) {
    %c0_i32 = arith.constant 0 : i32
    %c0_i32_0 = arith.constant 0 : i32
    %c0_i32_1 = arith.constant 0 : i32
    return %arg0, %c0_i32, %c0_i32_0 : i32, i32, i32
  }
}

</mosaic_0001>

<llo_original>
// kernel: tpu_custom_call.1
$region0: #{tpu_custom_call.1}
  #allocation0 [shape = 'u32[]', space=smem, size = 0x4, offset = 0x4, fixed_abs, tag = 'smem constant byte address 0x4 - core index']
  #allocation1 [shape = 'u32[144,128]{1,0:T(1,128)}', space=vmem, size = 0x12000, scoped, tag = 'internal scratch']
  #allocation2 [shape = 'bf16[8,18,256]{2,1,0:T(8,128)(2,1)}', space=vmem, size = 0x18000, scoped, tag = 'scratch operand']
  %s0 = inlined_call_operand.vmem [shape: f32[16,18,256], index: 0, kind: input, shape index: {}]
  %s1 = inlined_call_operand.vmem [shape: bf16[3,256,256], index: 1, kind: input, shape index: {}]
  %s2 = inlined_call_operand.vmem [shape: f32[1,256], index: 2, kind: input, shape index: {}]
  %s3 = inlined_call_operand.hbm [shape: bf16[3,256,256], index: 3, kind: input, shape index: {}]
  %s4 = inlined_call_operand.vmem [shape: f32[1,256], index: 4, kind: input, shape index: {}]
  %s5 = inlined_call_operand.hbm [shape: f32[16,16,256], index: 5, kind: output, shape index: {}]
  %s6 = sld [smem:[#allocation0]]
  $region57: #{tpu_custom_call.1} parent=0
    _
  %s8 = ssub.s32 1, %s6
  %s9 = scalar_select 0, %s8, %s6
  $region1: #{tpu_custom_call.1} parent=0
    #allocation3 [shape = 'u8[393216]{0}', space=vmem, size = 0x60000, scoped, tag = 'input window, operand 3, single buffered']
    #allocation4 [shape = 's32[2]{0}', space=sflag, size = 0x8, scoped, tag = 'scoped memory for tpu_custom_call.1']
    #allocation5 [shape = 's32[2]{0}', space=sflag, size = 0x8, scoped, tag = 'scoped memory for tpu_custom_call.1']
    #allocation6 [shape = 'u8[262144]{0}', space=vmem, size = 0x40000, scoped, tag = 'output window, operand 0']
    %10 = vsyncpa [#allocation4], 0
    %11 = vsyncpa [#allocation5], 0
    %s12 = scalar_lea.sflag [#allocation5], 1
    %13 = vsyncpa %s12, 0
    loop: start=0, step=1, limit=4
    $region2: #{tpu_custom_call.1} parent=1 // loop_pre_header
      _
    $region3: #{tpu_custom_call.1} parent=1 // loop_header
      %s15 = sphi 0, %s19
      %p16 = scmp.ge.s32.totalorder %s15, 4
      %s25 = sphi 0, %s27
      %s28 = sphi 0, %s25
      %s29 = sphi 0, %s28
      %s45 = sphi 0, %s29
      %s49 = sphi 0, %s49
      %s51 = sphi 0, %s49
      %s52 = sphi 0, %s51
      %s66 = sphi 0, %s52
      %s70 = sphi 0, %s70
      %s72 = sphi 0, %s70
      %s73 = sphi 0, %s72
      %s87 = sphi 0, %s73
      %s91 = sphi 0, %s91
      %s93 = sphi 0, %s91
      %s94 = sphi 0, %s93
      %s108 = sphi 0, %s94
      %s112 = sphi 0, %s112
      %s114 = sphi 0, %s112
      %s115 = sphi 0, %s114
      %s129 = sphi 0, %s115
      %s135 = sphi 0, %s137
      %s138 = sphi 0, %s135
      %s139 = sphi 0, %s138
      %s155 = sphi 0, %s139
    $region4: #{tpu_custom_call.1} parent=1 // loop_header_branch
      %18 = sbr.rel (%p16) target = $region8
    $region5: #{tpu_custom_call.1} parent=1 // loop_body
      %s20 = ssub.s32 %s15, 1
      %s21 = ssub.s32 %s15, 2
      %s22 = sadd.s32 %s15, 1
      %s23 = ssub.s32 %s15, %s22
      %p24 = scmp.eq.s32.totalorder %s23, 0
      %s26 = sadd.s32 %s25, 1
      %s27 = scalar_select %p24, %s25, %s26
      %p30 = pneg %p24
      %p31 = scmp.eq.s32.totalorder %s15, 1
      %p32 = por %p30, %p31
      %p33 = scmp.ne.s32.totalorder %s25, %s28
      %p34 = scmp.eq.s32.totalorder %s15, 0
      %p35 = por %p33, %p34
      %p36 = scmp.ne.s32.totalorder %s25, %s28
      %p37 = scmp.eq.s32.totalorder %s20, 1
      %p38 = por %p36, %p37
      %p39 = scmp.ne.s32.totalorder %s28, %s29
      %p40 = scmp.eq.s32.totalorder %s20, 0
      %p41 = por %p39, %p40
      %p42 = scmp.ne.s32.totalorder %s28, %s29
      %p43 = scmp.eq.s32.totalorder %s21, 1
      %p44 = por %p42, %p43
      %p46 = scmp.ne.s32.totalorder %s29, %s45
      %p47 = scmp.eq.s32.totalorder %s21, 0
      %p48 = por %p46, %p47
      %s50 = sadd.s32 %s49, 1
      %p53 = scmp.eq.s32.totalorder %s15, 1
      %p54 = scmp.ne.s32.totalorder %s49, %s51
      %p55 = scmp.eq.s32.totalorder %s15, 0
      %p56 = por %p54, %p55
      %p57 = scmp.ne.s32.totalorder %s49, %s51
      %p58 = scmp.eq.s32.totalorder %s20, 1
      %p59 = por %p57, %p58
      %p60 = scmp.ne.s32.totalorder %s51, %s52
      %p61 = scmp.eq.s32.totalorder %s20, 0
      %p62 = por %p60, %p61
      %p63 = scmp.ne.s32.totalorder %s51, %s52
      %p64 = scmp.eq.s32.totalorder %s21, 1
      %p65 = por %p63, %p64
      %p67 = scmp.ne.s32.totalorder %s52, %s66
      %p68 = scmp.eq.s32.totalorder %s21, 0
      %p69 = por %p67, %p68
      %s71 = sadd.s32 %s70, 1
      %p74 = scmp.eq.s32.totalorder %s15, 1
      %p75 = scmp.ne.s32.totalorder %s70, %s72
      %p76 = scmp.eq.s32.totalorder %s15, 0
      %p77 = por %p75, %p76
      %p78 = scmp.ne.s32.totalorder %s70, %s72
      %p79 = scmp.eq.s32.totalorder %s20, 1
      %p80 = por %p78, %p79
      %p81 = scmp.ne.s32.totalorder %s72, %s73
      %p82 = scmp.eq.s32.totalorder %s20, 0
      %p83 = por %p81, %p82
      %p84 = scmp.ne.s32.totalorder %s72, %s73
      %p85 = scmp.eq.s32.totalorder %s21, 1
      %p86 = por %p84, %p85
      %p88 = scmp.ne.s32.totalorder %s73, %s87
      %p89 = scmp.eq.s32.totalorder %s21, 0
      %p90 = por %p88, %p89
      %s92 = sadd.s32 %s91, 1
      %p95 = scmp.eq.s32.totalorder %s15, 1
      %p96 = scmp.ne.s32.totalorder %s91, %s93
      %p97 = scmp.eq.s32.totalorder %s15, 0
      %p98 = por %p96, %p97
      %p99 = scmp.ne.s32.totalorder %s91, %s93
      %p100 = scmp.eq.s32.totalorder %s20, 1
      %p101 = por %p99, %p100
      %p102 = scmp.ne.s32.totalorder %s93, %s94
      %p103 = scmp.eq.s32.totalorder %s20, 0
      %p104 = por %p102, %p103
      %p105 = scmp.ne.s32.totalorder %s93, %s94
      %p106 = scmp.eq.s32.totalorder %s21, 1
      %p107 = por %p105, %p106
      %p109 = scmp.ne.s32.totalorder %s94, %s108
      %p110 = scmp.eq.s32.totalorder %s21, 0
      %p111 = por %p109, %p110
      %s113 = sadd.s32 %s112, 1
      %p116 = scmp.eq.s32.totalorder %s15, 1
      %p117 = scmp.ne.s32.totalorder %s112, %s114
      %p118 = scmp.eq.s32.totalorder %s15, 0
      %p119 = por %p117, %p118
      %p120 = scmp.ne.s32.totalorder %s112, %s114
      %p121 = scmp.eq.s32.totalorder %s20, 1
      %p122 = por %p120, %p121
      %p123 = scmp.ne.s32.totalorder %s114, %s115
      %p124 = scmp.eq.s32.totalorder %s20, 0
      %p125 = por %p123, %p124
      %p126 = scmp.ne.s32.totalorder %s114, %s115
      %p127 = scmp.eq.s32.totalorder %s21, 1
      %p128 = por %p126, %p127
      %p130 = scmp.ne.s32.totalorder %s115, %s129
      %p131 = scmp.eq.s32.totalorder %s21, 0
      %p132 = por %p130, %p131
      %s133 = ssub.s32 %s15, %s22
      %p134 = scmp.eq.s32.totalorder %s133, 0
      %s136 = sadd.s32 %s135, 1
      %s137 = scalar_select %p134, %s135, %s136
      %p140 = pneg %p134
      %p141 = scmp.eq.s32.totalorder %s15, 1
      %p142 = por %p140, %p141
      %p143 = scmp.ne.s32.totalorder %s135, %s138
      %p144 = scmp.eq.s32.totalorder %s15, 0
      %p145 = por %p143, %p144
      %p146 = scmp.ne.s32.totalorder %s135, %s138
      %p147 = scmp.eq.s32.totalorder %s20, 1
      %p148 = por %p146, %p147
      %p149 = scmp.ne.s32.totalorder %s138, %s139
      %p150 = scmp.eq.s32.totalorder %s20, 0
      %p151 = por %p149, %p150
      %p152 = scmp.ne.s32.totalorder %s138, %s139
      %p153 = scmp.eq.s32.totalorder %s21, 1
      %p154 = por %p152, %p153
      %p156 = scmp.ne.s32.totalorder %s139, %s155
      %p157 = scmp.eq.s32.totalorder %s21, 0
      %p158 = por %p156, %p157
      %p159 = scmp.le.s32.totalorder 1, %s15
      %p160 = scmp.lt.s32.totalorder %s15, 3
      %p161 = pnand %p159, %p160
      %p162 = pneg %p161
      // Predicated region
      $region9: #{tpu_custom_call.1} parent=5 // pred_check
        _
      $region10: #{tpu_custom_call.1} parent=5 // pred_check_branch
        %164 = sbr.rel (%p161) target = $region12
      $region11: #{tpu_custom_call.1} parent=5 // pred_region
        %s165 = ssub.s32 %s15, 1
        // Predicated region
        $region13: #{tpu_custom_call.1} parent=11 // pred_check
          %p166 = pneg %p62
        $region14: #{tpu_custom_call.1} parent=11 // pred_check_branch
          %168 = sbr.rel (%p166) target = $region16
        $region15: #{tpu_custom_call.1} parent=11 // pred_region
          _
        $region16: #{tpu_custom_call.1} parent=11 // pred_fallthru
          _
        // Predicated region
        $region17: #{tpu_custom_call.1} parent=11 // pred_check
          %p169 = pneg %p83
        $region18: #{tpu_custom_call.1} parent=11 // pred_check_branch
          %171 = sbr.rel (%p169) target = $region20
        $region19: #{tpu_custom_call.1} parent=11 // pred_region
          _
        $region20: #{tpu_custom_call.1} parent=11 // pred_fallthru
          _
        // Predicated region
        $region21: #{tpu_custom_call.1} parent=11 // pred_check
          %p172 = pneg %p104
        $region22: #{tpu_custom_call.1} parent=11 // pred_check_branch
          %174 = sbr.rel (%p172) target = $region24
        $region23: #{tpu_custom_call.1} parent=11 // pred_region
          %s176 = ssub.s32 12288, 12288
          %177 = vsyncadd [#allocation4], %s176
          %s178 = sshll.u32 [#allocation3], 4
          %s179 = int_to_ptr.vmem [resolvable:$true] %s178
          %184 = dma.hbm_to_vmem [thread:$0]  %s3, 12288, %s179, [#allocation4], 128, 128, 8
        $region24: #{tpu_custom_call.1} parent=11 // pred_fallthru
          _
        // Predicated region
        $region25: #{tpu_custom_call.1} parent=11 // pred_check
          %p185 = pneg %p125
        $region26: #{tpu_custom_call.1} parent=11 // pred_check_branch
          %187 = sbr.rel (%p185) target = $region28
        $region27: #{tpu_custom_call.1} parent=11 // pred_region
          _
        $region28: #{tpu_custom_call.1} parent=11 // pred_fallthru
          _
      $region12: #{tpu_custom_call.1} parent=5 // pred_fallthru
        _
      %p188 = scmp.lt.s32.totalorder %s15, 2
      // Predicated region
      $region29: #{tpu_custom_call.1} parent=5 // pred_check
        %p189 = pneg %p188
      $region30: #{tpu_custom_call.1} parent=5 // pred_check_branch
        %191 = sbr.rel (%p189) target = $region32
      $region31: #{tpu_custom_call.1} parent=5 // pred_region
        // Predicated region
        $region33: #{tpu_custom_call.1} parent=31 // pred_check
          %p192 = pneg %p35
        $region34: #{tpu_custom_call.1} parent=31 // pred_check_branch
          %194 = sbr.rel (%p192) target = $region36
        $region35: #{tpu_custom_call.1} parent=31 // pred_region
          %s195 = smul.u32 8, %s15
          %p196 = scmp.lt.s32.totalorder %s195, 15
          %s197 = scalar_select %p196, %s195, 15
          %s198 = smul.addr %s197, 6
          %s199 = smul.addr %s198, 8
          %s200 = scalar_lea.vmem %s0, %s199
          %s201 = smul.u32 8, %s15
        $region36: #{tpu_custom_call.1} parent=31 // pred_fallthru
          _
      $region32: #{tpu_custom_call.1} parent=5 // pred_fallthru
        _
      %p202 = scmp.le.s32.totalorder 1, %s15
      %p203 = scmp.lt.s32.totalorder %s15, 3
      %p204 = pnand %p202, %p203
      %p205 = pneg %p204
      // Predicated region
      $region37: #{tpu_custom_call.1} parent=5 // pred_check
        _
      $region38: #{tpu_custom_call.1} parent=5 // pred_check_branch
        %207 = sbr.rel (%p204) target = $region40
      $region39: #{tpu_custom_call.1} parent=5 // pred_region
        %s208 = ssub.s32 %s15, 1
        // Predicated region
        $region41: #{tpu_custom_call.1} parent=39 // pred_check
          %p209 = pneg %p104
        $region42: #{tpu_custom_call.1} parent=39 // pred_check_branch
          %211 = sbr.rel (%p209) target = $region44
        $region43: #{tpu_custom_call.1} parent=39 // pred_region
          %212 = dma.done [#allocation4], 12288
        $region44: #{tpu_custom_call.1} parent=39 // pred_fallthru
          _
        %s213 = smul.u32 8, %s20
        %p214 = scmp.lt.s32.totalorder %s213, 15
        %s215 = scalar_select %p214, %s213, 15
        %s216 = smul.addr %s215, 6
        %s217 = smul.addr %s216, 8
        %s218 = scalar_lea.vmem %s0, %s217
        %p219 = pneg %p41
        %p220 = pneg %p38
        %p221 = pneg %p62
        %p222 = pneg %p59
        %p223 = pneg %p83
        %p224 = pneg %p80
        %p225 = pneg %p104
        %p226 = pneg %p101
        %p227 = pneg %p125
        %p228 = pneg %p122
        %p229 = pneg %p151
        %p230 = pneg %p148
        %s231 = sand.u32 %s138, 1
        %s232 = scalar_lea.sflag [#allocation5], %s231
        %s233 = sand.u32 %s138, 1
        %s234 = smul.addr %s233, 256
        %s235 = scalar_lea.vmem [#allocation6], %s234
        %s236 = smul.u32 8, %s20
        %p237 = scmp.lt.s32.totalorder %s236, 15
        %s238 = scalar_select %p237, %s236, 15
        %s239 = smul.addr %s238, 6
        %s240 = smul.addr %s239, 8
        %s241 = scalar_lea.vmem %s0, %s240
        %s242 = smul.u32 8, %s20
        %s243 = smul.u32 8, %s20
        %v245 = vld [vmem:[%s241] sm:$0xff]
        %v246 = vld [vmem:[%s241 + $0x8] sm:$0xff]
        %v247 = vld [vmem:[%s241 + $0x10] sm:$0xff]
        %v248 = vld [vmem:[%s241 + $0x18] sm:$0xff]
        %v249 = vld [vmem:[%s241 + $0x30] sm:$0xff]
        %v250 = vld [vmem:[%s241 + $0x38] sm:$0xff]
        %v251 = vld [vmem:[%s241 + $0x40] sm:$0xff]
        %v252 = vld [vmem:[%s241 + $0x48] sm:$0xff]
        %v253 = vld [vmem:[%s241 + $0x60] sm:$0xff]
        %v254 = vld [vmem:[%s241 + $0x68] sm:$0xff]
        %v255 = vld [vmem:[%s241 + $0x70] sm:$0xff]
        %v256 = vld [vmem:[%s241 + $0x78] sm:$0xff]
        %v257 = vld [vmem:[%s241 + $0x90] sm:$0xff]
        %v258 = vld [vmem:[%s241 + $0x98] sm:$0xff]
        %v259 = vld [vmem:[%s241 + $0xa0] sm:$0xff]
        %v260 = vld [vmem:[%s241 + $0xa8] sm:$0xff]
        %v261 = vld [vmem:[%s241 + $0xc0] sm:$0xff]
        %v262 = vld [vmem:[%s241 + $0xc8] sm:$0xff]
        %v263 = vld [vmem:[%s241 + $0xd0] sm:$0xff]
        %v264 = vld [vmem:[%s241 + $0xd8] sm:$0xff]
        %v265 = vld [vmem:[%s241 + $0xf0] sm:$0xff]
        %v266 = vld [vmem:[%s241 + $0xf8] sm:$0xff]
        %v267 = vld [vmem:[%s241 + $0x100] sm:$0xff]
        %v268 = vld [vmem:[%s241 + $0x108] sm:$0xff]
        %v269 = vld [vmem:[%s241 + $0x120] sm:$0xff]
        %v270 = vld [vmem:[%s241 + $0x128] sm:$0xff]
        %v271 = vld [vmem:[%s241 + $0x130] sm:$0xff]
        %v272 = vld [vmem:[%s241 + $0x138] sm:$0xff]
        %v273 = vld [vmem:[%s241 + $0x150] sm:$0xff]
        %v274 = vld [vmem:[%s241 + $0x158] sm:$0xff]
        %v275 = vld [vmem:[%s241 + $0x160] sm:$0xff]
        %v276 = vld [vmem:[%s241 + $0x168] sm:$0xff]
        %v277 = vpack.c.bf16 %v247, %v245
        %v278 = vpack.c.bf16 %v248, %v246
        %v279 = vpack.c.bf16 %v251, %v249
        %v280 = vpack.c.bf16 %v252, %v250
        %v281 = vpack.c.bf16 %v255, %v253
        %v282 = vpack.c.bf16 %v256, %v254
        %v283 = vpack.c.bf16 %v259, %v257
        %v284 = vpack.c.bf16 %v260, %v258
        %v285 = vpack.c.bf16 %v263, %v261
        %v286 = vpack.c.bf16 %v264, %v262
        %v287 = vpack.c.bf16 %v267, %v265
        %v288 = vpack.c.bf16 %v268, %v266
        %v289 = vpack.c.bf16 %v271, %v269
        %v290 = vpack.c.bf16 %v272, %v270
        %v291 = vpack.c.bf16 %v275, %v273
        %v292 = vpack.c.bf16 %v276, %v274
        %v293 = vld [vmem:[%s1] sm:$0xff]
        %v294 = vld [vmem:[%s1 + $0x8] sm:$0xff]
        %v295 = vld [vmem:[%s1 + $0x10] sm:$0xff]
        %v296 = vld [vmem:[%s1 + $0x18] sm:$0xff]
        %v297 = vld [vmem:[%s1 + $0x20] sm:$0xff]
        %v298 = vld [vmem:[%s1 + $0x28] sm:$0xff]
        %v299 = vld [vmem:[%s1 + $0x30] sm:$0xff]
        %v300 = vld [vmem:[%s1 + $0x38] sm:$0xff]
        %v301 = vld [vmem:[%s1 + $0x40] sm:$0xff]
        %v302 = vld [vmem:[%s1 + $0x48] sm:$0xff]
        %v303 = vld [vmem:[%s1 + $0x50] sm:$0xff]
        %v304 = vld [vmem:[%s1 + $0x58] sm:$0xff]
        %v305 = vld [vmem:[%s1 + $0x60] sm:$0xff]
        %v306 = vld [vmem:[%s1 + $0x68] sm:$0xff]
        %v307 = vld [vmem:[%s1 + $0x70] sm:$0xff]
        %v308 = vld [vmem:[%s1 + $0x78] sm:$0xff]
        %v309 = vld [vmem:[%s1 + $0x80] sm:$0xff]
        %v310 = vld [vmem:[%s1 + $0x88] sm:$0xff]
        %v311 = vld [vmem:[%s1 + $0x90] sm:$0xff]
        %v312 = vld [vmem:[%s1 + $0x98] sm:$0xff]
        %v313 = vld [vmem:[%s1 + $0xa0] sm:$0xff]
        %v314 = vld [vmem:[%s1 + $0xa8] sm:$0xff]
        %v315 = vld [vmem:[%s1 + $0xb0] sm:$0xff]
        %v316 = vld [vmem:[%s1 + $0xb8] sm:$0xff]
        %v317 = vld [vmem:[%s1 + $0xc0] sm:$0xff]
        %v318 = vld [vmem:[%s1 + $0xc8] sm:$0xff]
        %v319 = vld [vmem:[%s1 + $0xd0] sm:$0xff]
        %v320 = vld [vmem:[%s1 + $0xd8] sm:$0xff]
        %v321 = vld [vmem:[%s1 + $0xe0] sm:$0xff]
        %v322 = vld [vmem:[%s1 + $0xe8] sm:$0xff]
        %v323 = vld [vmem:[%s1 + $0xf0] sm:$0xff]
        %v324 = vld [vmem:[%s1 + $0xf8] sm:$0xff]
        %v325 = vld [vmem:[%s241] sm:$0xfe]
        %v326 = vld [vmem:[%s241 + $0x8] sm:$0xfe]
        %v327 = vld [vmem:[%s241 + $0x20] sm:$0x1]
        %v328 = vld [vmem:[%s241 + $0x28] sm:$0x1]
        %v329 = vld [vmem:[%s241 + $0x30] sm:$0xfe]
        %v330 = vld [vmem:[%s241 + $0x38] sm:$0xfe]
        %v331 = vld [vmem:[%s241 + $0x50] sm:$0x1]
        %v332 = vld [vmem:[%s241 + $0x58] sm:$0x1]
        %v333 = vld [vmem:[%s241 + $0x60] sm:$0xfe]
        %v334 = vld [vmem:[%s241 + $0x68] sm:$0xfe]
        %v335 = vld [vmem:[%s241 + $0x80] sm:$0x1]
        %v336 = vld [vmem:[%s241 + $0x88] sm:$0x1]
        %v337 = vld [vmem:[%s241 + $0x90] sm:$0xfe]
        %v338 = vld [vmem:[%s241 + $0x98] sm:$0xfe]
        %v339 = vld [vmem:[%s241 + $0xb0] sm:$0x1]
        %v340 = vld [vmem:[%s241 + $0xb8] sm:$0x1]
        %v341 = vld [vmem:[%s241 + $0xc0] sm:$0xfe]
        %v342 = vld [vmem:[%s241 + $0xc8] sm:$0xfe]
        %v343 = vld [vmem:[%s241 + $0xe0] sm:$0x1]
        %v344 = vld [vmem:[%s241 + $0xe8] sm:$0x1]
        %v345 = vld [vmem:[%s241 + $0xf0] sm:$0xfe]
        %v346 = vld [vmem:[%s241 + $0xf8] sm:$0xfe]
        %v347 = vld [vmem:[%s241 + $0x110] sm:$0x1]
        %v348 = vld [vmem:[%s241 + $0x118] sm:$0x1]
        %v349 = vld [vmem:[%s241 + $0x120] sm:$0xfe]
        %v350 = vld [vmem:[%s241 + $0x128] sm:$0xfe]
        %v351 = vld [vmem:[%s241 + $0x140] sm:$0x1]
        %v352 = vld [vmem:[%s241 + $0x148] sm:$0x1]
        %v353 = vld [vmem:[%s241 + $0x150] sm:$0xfe]
        %v354 = vld [vmem:[%s241 + $0x158] sm:$0xfe]
        %v355 = vld [vmem:[%s241 + $0x170] sm:$0x1]
        %v356 = vld [vmem:[%s241 + $0x178] sm:$0x1]
        %v357 = vpack.c.bf16 %v247, %v325
        %v358 = vpack.c.bf16 %v248, %v326
        %v359 = vpack.c.bf16 %v327, %v327
        %v360 = vpack.c.bf16 %v328, %v328
        %v361 = vpack.c.bf16 %v251, %v329
        %v362 = vpack.c.bf16 %v252, %v330
        %v363 = vpack.c.bf16 %v331, %v331
        %v364 = vpack.c.bf16 %v332, %v332
        %v365 = vpack.c.bf16 %v255, %v333
        %v366 = vpack.c.bf16 %v256, %v334
        %v367 = vpack.c.bf16 %v335, %v335
        %v368 = vpack.c.bf16 %v336, %v336
        %v369 = vpack.c.bf16 %v259, %v337
        %v370 = vpack.c.bf16 %v260, %v338
        %v371 = vpack.c.bf16 %v339, %v339
        %v372 = vpack.c.bf16 %v340, %v340
        %v373 = vpack.c.bf16 %v263, %v341
        %v374 = vpack.c.bf16 %v264, %v342
        %v375 = vpack.c.bf16 %v343, %v343
        %v376 = vpack.c.bf16 %v344, %v344
        %v377 = vpack.c.bf16 %v267, %v345
        %v378 = vpack.c.bf16 %v268, %v346
        %v379 = vpack.c.bf16 %v347, %v347
        %v380 = vpack.c.bf16 %v348, %v348
        %v381 = vpack.c.bf16 %v271, %v349
        %v382 = vpack.c.bf16 %v272, %v350
        %v383 = vpack.c.bf16 %v351, %v351
        %v384 = vpack.c.bf16 %v352, %v352
        %v385 = vpack.c.bf16 %v275, %v353
        %v386 = vpack.c.bf16 %v276, %v354
        %v387 = vpack.c.bf16 %v355, %v355
        %v388 = vpack.c.bf16 %v356, %v356
        %vm389 = vsmask.f32 7424
        %v391 = vshrl.u32 %v357, 16
        %v393 = vshll.u32 %v357, 16
        %v395 = vrot.slane %v393, 1
        %v396 = vor.u32 %v391, %v395
        %v398 = vshll.u32 %v359, 16
        %v400 = vrot.slane %v398, 1
        %v401 = vsel %vm389, %v396, %v400
        %v403 = vshrl.u32 %v358, 16
        %v405 = vshll.u32 %v358, 16
        %v407 = vrot.slane %v405, 1
        %v408 = vor.u32 %v403, %v407
        %v410 = vshll.u32 %v360, 16
        %v412 = vrot.slane %v410, 1
        %v413 = vsel %vm389, %v408, %v412
        %v415 = vshrl.u32 %v361, 16
        %v417 = vshll.u32 %v361, 16
        %v419 = vrot.slane %v417, 1
        %v420 = vor.u32 %v415, %v419
        %v422 = vshll.u32 %v363, 16
        %v424 = vrot.slane %v422, 1
        %v425 = vsel %vm389, %v420, %v424
        %v427 = vshrl.u32 %v362, 16
        %v429 = vshll.u32 %v362, 16
        %v431 = vrot.slane %v429, 1
        %v432 = vor.u32 %v427, %v431
        %v434 = vshll.u32 %v364, 16
        %v436 = vrot.slane %v434, 1
        %v437 = vsel %vm389, %v432, %v436
        %v439 = vshrl.u32 %v365, 16
        %v441 = vshll.u32 %v365, 16
        %v443 = vrot.slane %v441, 1
        %v444 = vor.u32 %v439, %v443
        %v446 = vshll.u32 %v367, 16
        %v448 = vrot.slane %v446, 1
        %v449 = vsel %vm389, %v444, %v448
        %v451 = vshrl.u32 %v366, 16
        %v453 = vshll.u32 %v366, 16
        %v455 = vrot.slane %v453, 1
        %v456 = vor.u32 %v451, %v455
        %v458 = vshll.u32 %v368, 16
        %v460 = vrot.slane %v458, 1
        %v461 = vsel %vm389, %v456, %v460
        %v463 = vshrl.u32 %v369, 16
        %v465 = vshll.u32 %v369, 16
        %v467 = vrot.slane %v465, 1
        %v468 = vor.u32 %v463, %v467
        %v470 = vshll.u32 %v371, 16
        %v472 = vrot.slane %v470, 1
        %v473 = vsel %vm389, %v468, %v472
        %v475 = vshrl.u32 %v370, 16
        %v477 = vshll.u32 %v370, 16
        %v479 = vrot.slane %v477, 1
        %v480 = vor.u32 %v475, %v479
        %v482 = vshll.u32 %v372, 16
        %v484 = vrot.slane %v482, 1
        %v485 = vsel %vm389, %v480, %v484
        %v487 = vshrl.u32 %v373, 16
        %v489 = vshll.u32 %v373, 16
        %v491 = vrot.slane %v489, 1
        %v492 = vor.u32 %v487, %v491
        %v494 = vshll.u32 %v375, 16
        %v496 = vrot.slane %v494, 1
        %v497 = vsel %vm389, %v492, %v496
        %v499 = vshrl.u32 %v374, 16
        %v501 = vshll.u32 %v374, 16
        %v503 = vrot.slane %v501, 1
        %v504 = vor.u32 %v499, %v503
        %v506 = vshll.u32 %v376, 16
        %v508 = vrot.slane %v506, 1
        %v509 = vsel %vm389, %v504, %v508
        %v511 = vshrl.u32 %v377, 16
        %v513 = vshll.u32 %v377, 16
        %v515 = vrot.slane %v513, 1
        %v516 = vor.u32 %v511, %v515
        %v518 = vshll.u32 %v379, 16
        %v520 = vrot.slane %v518, 1
        %v521 = vsel %vm389, %v516, %v520
        %v523 = vshrl.u32 %v378, 16
        %v525 = vshll.u32 %v378, 16
        %v527 = vrot.slane %v525, 1
        %v528 = vor.u32 %v523, %v527
        %v530 = vshll.u32 %v380, 16
        %v532 = vrot.slane %v530, 1
        %v533 = vsel %vm389, %v528, %v532
        %v535 = vshrl.u32 %v381, 16
        %v537 = vshll.u32 %v381, 16
        %v539 = vrot.slane %v537, 1
        %v540 = vor.u32 %v535, %v539
        %v542 = vshll.u32 %v383, 16
        %v544 = vrot.slane %v542, 1
        %v545 = vsel %vm389, %v540, %v544
        %v547 = vshrl.u32 %v382, 16
        %v549 = vshll.u32 %v382, 16
        %v551 = vrot.slane %v549, 1
        %v552 = vor.u32 %v547, %v551
        %v554 = vshll.u32 %v384, 16
        %v556 = vrot.slane %v554, 1
        %v557 = vsel %vm389, %v552, %v556
        %v559 = vshrl.u32 %v385, 16
        %v561 = vshll.u32 %v385, 16
        %v563 = vrot.slane %v561, 1
        %v564 = vor.u32 %v559, %v563
        %v566 = vshll.u32 %v387, 16
        %v568 = vrot.slane %v566, 1
        %v569 = vsel %vm389, %v564, %v568
        %v571 = vshrl.u32 %v386, 16
        %v573 = vshll.u32 %v386, 16
        %v575 = vrot.slane %v573, 1
        %v576 = vor.u32 %v571, %v575
        %v578 = vshll.u32 %v388, 16
        %v580 = vrot.slane %v578, 1
        %v581 = vsel %vm389, %v576, %v580
        %s598 = scalar_lea.vmem %s1, 256
        %v599 = vld [vmem:[%s598] sm:$0xff]
        %v600 = vld [vmem:[%s598 + $0x8] sm:$0xff]
        %v601 = vld [vmem:[%s598 + $0x10] sm:$0xff]
        %v602 = vld [vmem:[%s598 + $0x18] sm:$0xff]
        %v603 = vld [vmem:[%s598 + $0x20] sm:$0xff]
        %v604 = vld [vmem:[%s598 + $0x28] sm:$0xff]
        %v605 = vld [vmem:[%s598 + $0x30] sm:$0xff]
        %v606 = vld [vmem:[%s598 + $0x38] sm:$0xff]
        %v607 = vld [vmem:[%s598 + $0x40] sm:$0xff]
        %v608 = vld [vmem:[%s598 + $0x48] sm:$0xff]
        %v609 = vld [vmem:[%s598 + $0x50] sm:$0xff]
        %v610 = vld [vmem:[%s598 + $0x58] sm:$0xff]
        %v611 = vld [vmem:[%s598 + $0x60] sm:$0xff]
        %v612 = vld [vmem:[%s598 + $0x68] sm:$0xff]
        %v613 = vld [vmem:[%s598 + $0x70] sm:$0xff]
        %v614 = vld [vmem:[%s598 + $0x78] sm:$0xff]
        %v615 = vld [vmem:[%s598 + $0x80] sm:$0xff]
        %v616 = vld [vmem:[%s598 + $0x88] sm:$0xff]
        %v617 = vld [vmem:[%s598 + $0x90] sm:$0xff]
        %v618 = vld [vmem:[%s598 + $0x98] sm:$0xff]
        %v619 = vld [vmem:[%s598 + $0xa0] sm:$0xff]
        %v620 = vld [vmem:[%s598 + $0xa8] sm:$0xff]
        %v621 = vld [vmem:[%s598 + $0xb0] sm:$0xff]
        %v622 = vld [vmem:[%s598 + $0xb8] sm:$0xff]
        %v623 = vld [vmem:[%s598 + $0xc0] sm:$0xff]
        %v624 = vld [vmem:[%s598 + $0xc8] sm:$0xff]
        %v625 = vld [vmem:[%s598 + $0xd0] sm:$0xff]
        %v626 = vld [vmem:[%s598 + $0xd8] sm:$0xff]
        %v627 = vld [vmem:[%s598 + $0xe0] sm:$0xff]
        %v628 = vld [vmem:[%s598 + $0xe8] sm:$0xff]
        %v629 = vld [vmem:[%s598 + $0xf0] sm:$0xff]
        %v630 = vld [vmem:[%s598 + $0xf8] sm:$0xff]
        %v663 = vunpack.c.l.b16 %v599
        %v664 = vunpack.c.h.b16 %v599
        %v665 = vunpack.c.l.b16 %v600
        %v666 = vunpack.c.h.b16 %v600
        %v667 = vunpack.c.l.b16 %v601
        %v668 = vunpack.c.h.b16 %v601
        %v669 = vunpack.c.l.b16 %v602
        %v670 = vunpack.c.h.b16 %v602
        %v671 = vunpack.c.l.b16 %v603
        %v672 = vunpack.c.h.b16 %v603
        %v673 = vunpack.c.l.b16 %v604
        %v674 = vunpack.c.h.b16 %v604
        %v675 = vunpack.c.l.b16 %v605
        %v676 = vunpack.c.h.b16 %v605
        %v677 = vunpack.c.l.b16 %v606
        %v678 = vunpack.c.h.b16 %v606
        %v679 = vunpack.c.l.b16 %v607
        %v680 = vunpack.c.h.b16 %v607
        %v681 = vunpack.c.l.b16 %v608
        %v682 = vunpack.c.h.b16 %v608
        %v683 = vunpack.c.l.b16 %v609
        %v684 = vunpack.c.h.b16 %v609
        %v685 = vunpack.c.l.b16 %v610
        %v686 = vunpack.c.h.b16 %v610
        %v687 = vunpack.c.l.b16 %v611
        %v688 = vunpack.c.h.b16 %v611
        %v689 = vunpack.c.l.b16 %v612
        %v690 = vunpack.c.h.b16 %v612
        %v691 = vunpack.c.l.b16 %v613
        %v692 = vunpack.c.h.b16 %v613
        %v693 = vunpack.c.l.b16 %v614
        %v694 = vunpack.c.h.b16 %v614
        %v695 = vunpack.c.l.b16 %v615
        %v696 = vunpack.c.h.b16 %v615
        %v697 = vunpack.c.l.b16 %v616
        %v698 = vunpack.c.h.b16 %v616
        %v699 = vunpack.c.l.b16 %v617
        %v700 = vunpack.c.h.b16 %v617
        %v701 = vunpack.c.l.b16 %v618
        %v702 = vunpack.c.h.b16 %v618
        %v703 = vunpack.c.l.b16 %v619
        %v704 = vunpack.c.h.b16 %v619
        %v705 = vunpack.c.l.b16 %v620
        %v706 = vunpack.c.h.b16 %v620
        %v707 = vunpack.c.l.b16 %v621
        %v708 = vunpack.c.h.b16 %v621
        %v709 = vunpack.c.l.b16 %v622
        %v710 = vunpack.c.h.b16 %v622
        %v711 = vunpack.c.l.b16 %v623
        %v712 = vunpack.c.h.b16 %v623
        %v713 = vunpack.c.l.b16 %v624
        %v714 = vunpack.c.h.b16 %v624
        %v715 = vunpack.c.l.b16 %v625
        %v716 = vunpack.c.h.b16 %v625
        %v717 = vunpack.c.l.b16 %v626
        %v718 = vunpack.c.h.b16 %v626
        %v719 = vunpack.c.l.b16 %v627
        %v720 = vunpack.c.h.b16 %v627
        %v721 = vunpack.c.l.b16 %v628
        %v722 = vunpack.c.h.b16 %v628
        %v723 = vunpack.c.l.b16 %v629
        %v724 = vunpack.c.h.b16 %v629
        %v725 = vunpack.c.l.b16 %v630
        %v726 = vunpack.c.h.b16 %v630
        %v727 = vpack.c.b16 %v665, %v663
        %v728 = vpack.c.b16 %v666, %v664
        %v729 = vpack.c.b16 %v669, %v667
        %v730 = vpack.c.b16 %v670, %v668
        %v731 = vpack.c.b16 %v673, %v671
        %v732 = vpack.c.b16 %v674, %v672
        %v733 = vpack.c.b16 %v677, %v675
        %v734 = vpack.c.b16 %v678, %v676
        %v735 = vpack.c.b16 %v681, %v679
        %v736 = vpack.c.b16 %v682, %v680
        %v737 = vpack.c.b16 %v685, %v683
        %v738 = vpack.c.b16 %v686, %v684
        %v739 = vpack.c.b16 %v689, %v687
        %v740 = vpack.c.b16 %v690, %v688
        %v741 = vpack.c.b16 %v693, %v691
        %v742 = vpack.c.b16 %v694, %v692
        %v743 = vpack.c.b16 %v697, %v695
        %v744 = vpack.c.b16 %v698, %v696
        %v745 = vpack.c.b16 %v701, %v699
        %v746 = vpack.c.b16 %v702, %v700
        %v747 = vpack.c.b16 %v705, %v703
        %v748 = vpack.c.b16 %v706, %v704
        %v749 = vpack.c.b16 %v709, %v707
        %v750 = vpack.c.b16 %v710, %v708
        %v751 = vpack.c.b16 %v713, %v711
        %v752 = vpack.c.b16 %v714, %v712
        %v753 = vpack.c.b16 %v717, %v715
        %v754 = vpack.c.b16 %v718, %v716
        %v755 = vpack.c.b16 %v721, %v719
        %v756 = vpack.c.b16 %v722, %v720
        %v757 = vpack.c.b16 %v725, %v723
        %v758 = vpack.c.b16 %v726, %v724
        %791 = vmatprep.subr.bf16.mxu0 %v742
        %792 = vmatpush1.bf16.msra.mxu0 %v741
        %793 = vmatprep.subr.bf16.mxu0 %v740
        %794 = vmatpush1.bf16.msra.mxu0 %v739
        %795 = vmatprep.subr.bf16.mxu0 %v738
        %796 = vmatpush1.bf16.msra.mxu0 %v737
        %797 = vmatprep.subr.bf16.mxu0 %v736
        %798 = vmatpush1.bf16.msra.mxu0 %v735
        %799 = vmatprep.subr.bf16.mxu0 %v734
        %800 = vmatpush1.bf16.msra.mxu0 %v733
        %801 = vmatprep.subr.bf16.mxu0 %v732
        %802 = vmatpush1.bf16.msra.mxu0 %v731
        %803 = vmatprep.subr.bf16.mxu0 %v730
        %804 = vmatpush1.bf16.msra.mxu0 %v729
        %805 = vmatprep.subr.bf16.mxu0 %v728
        %806 = vmatpush1.bf16.msra.mxu0 %v727
        %807 = vmatprep.subr.bf16.mxu0 %v758
        %808 = vmatpush2.bf16.msra.mxu0 %v757
        %809 = vmatprep.subr.bf16.mxu0 %v756
        %810 = vmatpush2.bf16.msra.mxu0 %v755
        %811 = vmatprep.subr.bf16.mxu0 %v754
        %812 = vmatpush2.bf16.msra.mxu0 %v753
        %813 = vmatprep.subr.bf16.mxu0 %v752
        %814 = vmatpush2.bf16.msra.mxu0 %v751
        %815 = vmatprep.subr.bf16.mxu0 %v750
        %816 = vmatpush2.bf16.msra.mxu0 %v749
        %817 = vmatprep.subr.bf16.mxu0 %v748
        %818 = vmatpush2.bf16.msra.mxu0 %v747
        %819 = vmatprep.subr.bf16.mxu0 %v746
        %820 = vmatpush2.bf16.msra.mxu0 %v745
        %821 = vmatprep.subr.bf16.mxu0 %v744
        %822 = vmatpush2.bf16.msra.mxu0 %v743
        %823 = vmatprep.mubr.bf16.mxu0 %v413
        %824 = vmatmul.mubr.bf16.gmra.mxu0 %v401
        %v825 = vpop.f32.mrf.mxu0
        %v826 = vadd.f32 0.0, %v825
        %v827 = vpop.f32.mrf.mxu0
        %v828 = vadd.f32 0.0, %v827
        %v829 = vpop.f32.mrf.mxu0
        %v830 = vadd.f32 0.0, %v829
        %v831 = vpop.f32.mrf.mxu0
        %v832 = vadd.f32 0.0, %v831
        %833 = vmatprep.mubr.bf16.mxu0 %v437
        %834 = vmatmul.mubr.bf16.gmra.mxu0 %v425
        %v835 = vpop.f32.mrf.mxu0
        %v836 = vadd.f32 0.0, %v835
        %v837 = vpop.f32.mrf.mxu0
        %v838 = vadd.f32 0.0, %v837
        %v839 = vpop.f32.mrf.mxu0
        %v840 = vadd.f32 0.0, %v839
        %v841 = vpop.f32.mrf.mxu0
        %v842 = vadd.f32 0.0, %v841
        %843 = vmatprep.mubr.bf16.mxu0 %v461
        %844 = vmatmul.mubr.bf16.gmra.mxu0 %v449
        %v845 = vpop.f32.mrf.mxu0
        %v846 = vadd.f32 0.0, %v845
        %v847 = vpop.f32.mrf.mxu0
        %v848 = vadd.f32 0.0, %v847
        %v849 = vpop.f32.mrf.mxu0
        %v850 = vadd.f32 0.0, %v849
        %v851 = vpop.f32.mrf.mxu0
        %v852 = vadd.f32 0.0, %v851
        %853 = vmatprep.mubr.bf16.mxu0 %v485
        %854 = vmatmul.mubr.bf16.gmra.mxu0 %v473
        %v855 = vpop.f32.mrf.mxu0
        %v856 = vadd.f32 0.0, %v855
        %v857 = vpop.f32.mrf.mxu0
        %v858 = vadd.f32 0.0, %v857
        %v859 = vpop.f32.mrf.mxu0
        %v860 = vadd.f32 0.0, %v859
        %v861 = vpop.f32.mrf.mxu0
        %v862 = vadd.f32 0.0, %v861
        %863 = vmatprep.mubr.bf16.mxu0 %v509
        %864 = vmatmul.mubr.bf16.gmra.mxu0 %v497
        %v865 = vpop.f32.mrf.mxu0
        %v866 = vadd.f32 0.0, %v865
        %v867 = vpop.f32.mrf.mxu0
        %v868 = vadd.f32 0.0, %v867
        %v869 = vpop.f32.mrf.mxu0
        %v870 = vadd.f32 0.0, %v869
        %v871 = vpop.f32.mrf.mxu0
        %v872 = vadd.f32 0.0, %v871
        %873 = vmatprep.mubr.bf16.mxu0 %v533
        %874 = vmatmul.mubr.bf16.gmra.mxu0 %v521
        %v875 = vpop.f32.mrf.mxu0
        %v876 = vadd.f32 0.0, %v875
        %v877 = vpop.f32.mrf.mxu0
        %v878 = vadd.f32 0.0, %v877
        %v879 = vpop.f32.mrf.mxu0
        %v880 = vadd.f32 0.0, %v879
        %v881 = vpop.f32.mrf.mxu0
        %v882 = vadd.f32 0.0, %v881
        %883 = vmatprep.mubr.bf16.mxu0 %v557
        %884 = vmatmul.mubr.bf16.gmra.mxu0 %v545
        %v885 = vpop.f32.mrf.mxu0
        %v886 = vadd.f32 0.0, %v885
        %v887 = vpop.f32.mrf.mxu0
        %v888 = vadd.f32 0.0, %v887
        %v889 = vpop.f32.mrf.mxu0
        %v890 = vadd.f32 0.0, %v889
        %v891 = vpop.f32.mrf.mxu0
        %v892 = vadd.f32 0.0, %v891
        %893 = vmatprep.mubr.bf16.mxu0 %v581
        %894 = vmatmul.mubr.bf16.gmra.mxu0 %v569
        %v895 = vpop.f32.mrf.mxu0
        %v896 = vadd.f32 0.0, %v895
        %v897 = vpop.f32.mrf.mxu0
        %v898 = vadd.f32 0.0, %v897
        %v899 = vpop.f32.mrf.mxu0
        %v900 = vadd.f32 0.0, %v899
        %v901 = vpop.f32.mrf.mxu0
        %v902 = vadd.f32 0.0, %v901
        %903 = vdwg.mxu0
        %v936 = vunpack.c.l.b16 %v293
        %v937 = vunpack.c.h.b16 %v293
        %v938 = vunpack.c.l.b16 %v294
        %v939 = vunpack.c.h.b16 %v294
        %v940 = vunpack.c.l.b16 %v295
        %v941 = vunpack.c.h.b16 %v295
        %v942 = vunpack.c.l.b16 %v296
        %v943 = vunpack.c.h.b16 %v296
        %v944 = vunpack.c.l.b16 %v297
        %v945 = vunpack.c.h.b16 %v297
        %v946 = vunpack.c.l.b16 %v298
        %v947 = vunpack.c.h.b16 %v298
        %v948 = vunpack.c.l.b16 %v299
        %v949 = vunpack.c.h.b16 %v299
        %v950 = vunpack.c.l.b16 %v300
        %v951 = vunpack.c.h.b16 %v300
        %v952 = vunpack.c.l.b16 %v301
        %v953 = vunpack.c.h.b16 %v301
        %v954 = vunpack.c.l.b16 %v302
        %v955 = vunpack.c.h.b16 %v302
        %v956 = vunpack.c.l.b16 %v303
        %v957 = vunpack.c.h.b16 %v303
        %v958 = vunpack.c.l.b16 %v304
        %v959 = vunpack.c.h.b16 %v304
        %v960 = vunpack.c.l.b16 %v305
        %v961 = vunpack.c.h.b16 %v305
        %v962 = vunpack.c.l.b16 %v306
        %v963 = vunpack.c.h.b16 %v306
        %v964 = vunpack.c.l.b16 %v307
        %v965 = vunpack.c.h.b16 %v307
        %v966 = vunpack.c.l.b16 %v308
        %v967 = vunpack.c.h.b16 %v308
        %v968 = vunpack.c.l.b16 %v309
        %v969 = vunpack.c.h.b16 %v309
        %v970 = vunpack.c.l.b16 %v310
        %v971 = vunpack.c.h.b16 %v310
        %v972 = vunpack.c.l.b16 %v311
        %v973 = vunpack.c.h.b16 %v311
        %v974 = vunpack.c.l.b16 %v312
        %v975 = vunpack.c.h.b16 %v312
        %v976 = vunpack.c.l.b16 %v313
        %v977 = vunpack.c.h.b16 %v313
        %v978 = vunpack.c.l.b16 %v314
        %v979 = vunpack.c.h.b16 %v314
        %v980 = vunpack.c.l.b16 %v315
        %v981 = vunpack.c.h.b16 %v315
        %v982 = vunpack.c.l.b16 %v316
        %v983 = vunpack.c.h.b16 %v316
        %v984 = vunpack.c.l.b16 %v317
        %v985 = vunpack.c.h.b16 %v317
        %v986 = vunpack.c.l.b16 %v318
        %v987 = vunpack.c.h.b16 %v318
        %v988 = vunpack.c.l.b16 %v319
        %v989 = vunpack.c.h.b16 %v319
        %v990 = vunpack.c.l.b16 %v320
        %v991 = vunpack.c.h.b16 %v320
        %v992 = vunpack.c.l.b16 %v321
        %v993 = vunpack.c.h.b16 %v321
        %v994 = vunpack.c.l.b16 %v322
        %v995 = vunpack.c.h.b16 %v322
        %v996 = vunpack.c.l.b16 %v323
        %v997 = vunpack.c.h.b16 %v323
        %v998 = vunpack.c.l.b16 %v324
        %v999 = vunpack.c.h.b16 %v324
        %v1000 = vpack.c.b16 %v938, %v936
        %v1001 = vpack.c.b16 %v939, %v937
        %v1002 = vpack.c.b16 %v942, %v940
        %v1003 = vpack.c.b16 %v943, %v941
        %v1004 = vpack.c.b16 %v946, %v944
        %v1005 = vpack.c.b16 %v947, %v945
        %v1006 = vpack.c.b16 %v950, %v948
        %v1007 = vpack.c.b16 %v951, %v949
        %v1008 = vpack.c.b16 %v954, %v952
        %v1009 = vpack.c.b16 %v955, %v953
        %v1010 = vpack.c.b16 %v958, %v956
        %v1011 = vpack.c.b16 %v959, %v957
        %v1012 = vpack.c.b16 %v962, %v960
        %v1013 = vpack.c.b16 %v963, %v961
        %v1014 = vpack.c.b16 %v966, %v964
        %v1015 = vpack.c.b16 %v967, %v965
        %v1016 = vpack.c.b16 %v970, %v968
        %v1017 = vpack.c.b16 %v971, %v969
        %v1018 = vpack.c.b16 %v974, %v972
        %v1019 = vpack.c.b16 %v975, %v973
        %v1020 = vpack.c.b16 %v978, %v976
        %v1021 = vpack.c.b16 %v979, %v977
        %v1022 = vpack.c.b16 %v982, %v980
        %v1023 = vpack.c.b16 %v983, %v981
        %v1024 = vpack.c.b16 %v986, %v984
        %v1025 = vpack.c.b16 %v987, %v985
        %v1026 = vpack.c.b16 %v990, %v988
        %v1027 = vpack.c.b16 %v991, %v989
        %v1028 = vpack.c.b16 %v994, %v992
        %v1029 = vpack.c.b16 %v995, %v993
        %v1030 = vpack.c.b16 %v998, %v996
        %v1031 = vpack.c.b16 %v999, %v997
        %1064 = vmatprep.subr.bf16.mxu0 %v1015
        %1065 = vmatpush1.bf16.msra.mxu0 %v1014
        %1066 = vmatprep.subr.bf16.mxu0 %v1013
        %1067 = vmatpush1.bf16.msra.mxu0 %v1012
        %1068 = vmatprep.subr.bf16.mxu0 %v1011
        %1069 = vmatpush1.bf16.msra.mxu0 %v1010
        %1070 = vmatprep.subr.bf16.mxu0 %v1009
        %1071 = vmatpush1.bf16.msra.mxu0 %v1008
        %1072 = vmatprep.subr.bf16.mxu0 %v1007
        %1073 = vmatpush1.bf16.msra.mxu0 %v1006
        %1074 = vmatprep.subr.bf16.mxu0 %v1005
        %1075 = vmatpush1.bf16.msra.mxu0 %v1004
        %1076 = vmatprep.subr.bf16.mxu0 %v1003
        %1077 = vmatpush1.bf16.msra.mxu0 %v1002
        %1078 = vmatprep.subr.bf16.mxu0 %v1001
        %1079 = vmatpush1.bf16.msra.mxu0 %v1000
        %1080 = vmatprep.subr.bf16.mxu0 %v1031
        %1081 = vmatpush2.bf16.msra.mxu0 %v1030
        %1082 = vmatprep.subr.bf16.mxu0 %v1029
        %1083 = vmatpush2.bf16.msra.mxu0 %v1028
        %1084 = vmatprep.subr.bf16.mxu0 %v1027
        %1085 = vmatpush2.bf16.msra.mxu0 %v1026
        %1086 = vmatprep.subr.bf16.mxu0 %v1025
        %1087 = vmatpush2.bf16.msra.mxu0 %v1024
        %1088 = vmatprep.subr.bf16.mxu0 %v1023
        %1089 = vmatpush2.bf16.msra.mxu0 %v1022
        %1090 = vmatprep.subr.bf16.mxu0 %v1021
        %1091 = vmatpush2.bf16.msra.mxu0 %v1020
        %1092 = vmatprep.subr.bf16.mxu0 %v1019
        %1093 = vmatpush2.bf16.msra.mxu0 %v1018
        %1094 = vmatprep.subr.bf16.mxu0 %v1017
        %1095 = vmatpush2.bf16.msra.mxu0 %v1016
        %1096 = vmatprep.mubr.bf16.mxu0 %v278
        %1097 = vmatmul.mubr.bf16.gmra.mxu0 %v277
        %v1098 = vpop.f32.mrf.mxu0
        %v1099 = vadd.f32 %v826, %v1098
        %v1100 = vpop.f32.mrf.mxu0
        %v1101 = vadd.f32 %v828, %v1100
        %v1102 = vpop.f32.mrf.mxu0
        %v1103 = vadd.f32 %v830, %v1102
        %v1104 = vpop.f32.mrf.mxu0
        %v1105 = vadd.f32 %v832, %v1104
        %1106 = vmatprep.mubr.bf16.mxu0 %v280
        %1107 = vmatmul.mubr.bf16.gmra.mxu0 %v279
        %v1108 = vpop.f32.mrf.mxu0
        %v1109 = vadd.f32 %v836, %v1108
        %v1110 = vpop.f32.mrf.mxu0
        %v1111 = vadd.f32 %v838, %v1110
        %v1112 = vpop.f32.mrf.mxu0
        %v1113 = vadd.f32 %v840, %v1112
        %v1114 = vpop.f32.mrf.mxu0
        %v1115 = vadd.f32 %v842, %v1114
        %1116 = vmatprep.mubr.bf16.mxu0 %v282
        %1117 = vmatmul.mubr.bf16.gmra.mxu0 %v281
        %v1118 = vpop.f32.mrf.mxu0
        %v1119 = vadd.f32 %v846, %v1118
        %v1120 = vpop.f32.mrf.mxu0
        %v1121 = vadd.f32 %v848, %v1120
        %v1122 = vpop.f32.mrf.mxu0
        %v1123 = vadd.f32 %v850, %v1122
        %v1124 = vpop.f32.mrf.mxu0
        %v1125 = vadd.f32 %v852, %v1124
        %1126 = vmatprep.mubr.bf16.mxu0 %v284
        %1127 = vmatmul.mubr.bf16.gmra.mxu0 %v283
        %v1128 = vpop.f32.mrf.mxu0
        %v1129 = vadd.f32 %v856, %v1128
        %v1130 = vpop.f32.mrf.mxu0
        %v1131 = vadd.f32 %v858, %v1130
        %v1132 = vpop.f32.mrf.mxu0
        %v1133 = vadd.f32 %v860, %v1132
        %v1134 = vpop.f32.mrf.mxu0
        %v1135 = vadd.f32 %v862, %v1134
        %1136 = vmatprep.mubr.bf16.mxu0 %v286
        %1137 = vmatmul.mubr.bf16.gmra.mxu0 %v285
        %v1138 = vpop.f32.mrf.mxu0
        %v1139 = vadd.f32 %v866, %v1138
        %v1140 = vpop.f32.mrf.mxu0
        %v1141 = vadd.f32 %v868, %v1140
        %v1142 = vpop.f32.mrf.mxu0
        %v1143 = vadd.f32 %v870, %v1142
        %v1144 = vpop.f32.mrf.mxu0
        %v1145 = vadd.f32 %v872, %v1144
        %1146 = vmatprep.mubr.bf16.mxu0 %v288
        %1147 = vmatmul.mubr.bf16.gmra.mxu0 %v287
        %v1148 = vpop.f32.mrf.mxu0
        %v1149 = vadd.f32 %v876, %v1148
        %v1150 = vpop.f32.mrf.mxu0
        %v1151 = vadd.f32 %v878, %v1150
        %v1152 = vpop.f32.mrf.mxu0
        %v1153 = vadd.f32 %v880, %v1152
        %v1154 = vpop.f32.mrf.mxu0
        %v1155 = vadd.f32 %v882, %v1154
        %1156 = vmatprep.mubr.bf16.mxu0 %v290
        %1157 = vmatmul.mubr.bf16.gmra.mxu0 %v289
        %v1158 = vpop.f32.mrf.mxu0
        %v1159 = vadd.f32 %v886, %v1158
        %v1160 = vpop.f32.mrf.mxu0
        %v1161 = vadd.f32 %v888, %v1160
        %v1162 = vpop.f32.mrf.mxu0
        %v1163 = vadd.f32 %v890, %v1162
        %v1164 = vpop.f32.mrf.mxu0
        %v1165 = vadd.f32 %v892, %v1164
        %1166 = vmatprep.mubr.bf16.mxu0 %v292
        %1167 = vmatmul.mubr.bf16.gmra.mxu0 %v291
        %v1168 = vpop.f32.mrf.mxu0
        %v1169 = vadd.f32 %v896, %v1168
        %v1170 = vpop.f32.mrf.mxu0
        %v1171 = vadd.f32 %v898, %v1170
        %v1172 = vpop.f32.mrf.mxu0
        %v1173 = vadd.f32 %v900, %v1172
        %v1174 = vpop.f32.mrf.mxu0
        %v1175 = vadd.f32 %v902, %v1174
        %1176 = vdwg.mxu0
        %v1177 = vld [vmem:[%s241] sm:$0xfc]
        %v1178 = vld [vmem:[%s241 + $0x8] sm:$0xfc]
        %v1179 = vld [vmem:[%s241 + $0x20] sm:$0x3]
        %v1180 = vld [vmem:[%s241 + $0x28] sm:$0x3]
        %v1181 = vld [vmem:[%s241 + $0x30] sm:$0xfc]
        %v1182 = vld [vmem:[%s241 + $0x38] sm:$0xfc]
        %v1183 = vld [vmem:[%s241 + $0x50] sm:$0x3]
        %v1184 = vld [vmem:[%s241 + $0x58] sm:$0x3]
        %v1185 = vld [vmem:[%s241 + $0x60] sm:$0xfc]
        %v1186 = vld [vmem:[%s241 + $0x68] sm:$0xfc]
        %v1187 = vld [vmem:[%s241 + $0x80] sm:$0x3]
        %v1188 = vld [vmem:[%s241 + $0x88] sm:$0x3]
        %v1189 = vld [vmem:[%s241 + $0x90] sm:$0xfc]
        %v1190 = vld [vmem:[%s241 + $0x98] sm:$0xfc]
        %v1191 = vld [vmem:[%s241 + $0xb0] sm:$0x3]
        %v1192 = vld [vmem:[%s241 + $0xb8] sm:$0x3]
        %v1193 = vld [vmem:[%s241 + $0xc0] sm:$0xfc]
        %v1194 = vld [vmem:[%s241 + $0xc8] sm:$0xfc]
        %v1195 = vld [vmem:[%s241 + $0xe0] sm:$0x3]
        %v1196 = vld [vmem:[%s241 + $0xe8] sm:$0x3]
        %v1197 = vld [vmem:[%s241 + $0xf0] sm:$0xfc]
        %v1198 = vld [vmem:[%s241 + $0xf8] sm:$0xfc]
        %v1199 = vld [vmem:[%s241 + $0x110] sm:$0x3]
        %v1200 = vld [vmem:[%s241 + $0x118] sm:$0x3]
        %v1201 = vld [vmem:[%s241 + $0x120] sm:$0xfc]
        %v1202 = vld [vmem:[%s241 + $0x128] sm:$0xfc]
        %v1203 = vld [vmem:[%s241 + $0x140] sm:$0x3]
        %v1204 = vld [vmem:[%s241 + $0x148] sm:$0x3]
        %v1205 = vld [vmem:[%s241 + $0x150] sm:$0xfc]
        %v1206 = vld [vmem:[%s241 + $0x158] sm:$0xfc]
        %v1207 = vld [vmem:[%s241 + $0x170] sm:$0x3]
        %v1208 = vld [vmem:[%s241 + $0x178] sm:$0x3]
        %v1209 = vpack.c.bf16 %v247, %v1177
        %v1210 = vpack.c.bf16 %v248, %v1178
        %v1211 = vpack.c.bf16 %v1179, %v1179
        %v1212 = vpack.c.bf16 %v1180, %v1180
        %v1213 = vpack.c.bf16 %v251, %v1181
        %v1214 = vpack.c.bf16 %v252, %v1182
        %v1215 = vpack.c.bf16 %v1183, %v1183
        %v1216 = vpack.c.bf16 %v1184, %v1184
        %v1217 = vpack.c.bf16 %v255, %v1185
        %v1218 = vpack.c.bf16 %v256, %v1186
        %v1219 = vpack.c.bf16 %v1187, %v1187
        %v1220 = vpack.c.bf16 %v1188, %v1188
        %v1221 = vpack.c.bf16 %v259, %v1189
        %v1222 = vpack.c.bf16 %v260, %v1190
        %v1223 = vpack.c.bf16 %v1191, %v1191
        %v1224 = vpack.c.bf16 %v1192, %v1192
        %v1225 = vpack.c.bf16 %v263, %v1193
        %v1226 = vpack.c.bf16 %v264, %v1194
        %v1227 = vpack.c.bf16 %v1195, %v1195
        %v1228 = vpack.c.bf16 %v1196, %v1196
        %v1229 = vpack.c.bf16 %v267, %v1197
        %v1230 = vpack.c.bf16 %v268, %v1198
        %v1231 = vpack.c.bf16 %v1199, %v1199
        %v1232 = vpack.c.bf16 %v1200, %v1200
        %v1233 = vpack.c.bf16 %v271, %v1201
        %v1234 = vpack.c.bf16 %v272, %v1202
        %v1235 = vpack.c.bf16 %v1203, %v1203
        %v1236 = vpack.c.bf16 %v1204, %v1204
        %v1237 = vpack.c.bf16 %v275, %v1205
        %v1238 = vpack.c.bf16 %v276, %v1206
        %v1239 = vpack.c.bf16 %v1207, %v1207
        %v1240 = vpack.c.bf16 %v1208, %v1208
        %vm1273 = vcmask 1046528
        %v1274 = vrot.slane %v1209, 1
        %v1275 = vrot.slane %v1211, 1
        %v1276 = vsel %vm1273, %v1274, %v1275
        %v1277 = vrot.slane %v1210, 1
        %v1278 = vrot.slane %v1212, 1
        %v1279 = vsel %vm1273, %v1277, %v1278
        %v1280 = vrot.slane %v1213, 1
        %v1281 = vrot.slane %v1215, 1
        %v1282 = vsel %vm1273, %v1280, %v1281
        %v1283 = vrot.slane %v1214, 1
        %v1284 = vrot.slane %v1216, 1
        %v1285 = vsel %vm1273, %v1283, %v1284
        %v1286 = vrot.slane %v1217, 1
        %v1287 = vrot.slane %v1219, 1
        %v1288 = vsel %vm1273, %v1286, %v1287
        %v1289 = vrot.slane %v1218, 1
        %v1290 = vrot.slane %v1220, 1
        %v1291 = vsel %vm1273, %v1289, %v1290
        %v1292 = vrot.slane %v1221, 1
        %v1293 = vrot.slane %v1223, 1
        %v1294 = vsel %vm1273, %v1292, %v1293
        %v1295 = vrot.slane %v1222, 1
        %v1296 = vrot.slane %v1224, 1
        %v1297 = vsel %vm1273, %v1295, %v1296
        %v1298 = vrot.slane %v1225, 1
        %v1299 = vrot.slane %v1227, 1
        %v1300 = vsel %vm1273, %v1298, %v1299
        %v1301 = vrot.slane %v1226, 1
        %v1302 = vrot.slane %v1228, 1
        %v1303 = vsel %vm1273, %v1301, %v1302
        %v1304 = vrot.slane %v1229, 1
        %v1305 = vrot.slane %v1231, 1
        %v1306 = vsel %vm1273, %v1304, %v1305
        %v1307 = vrot.slane %v1230, 1
        %v1308 = vrot.slane %v1232, 1
        %v1309 = vsel %vm1273, %v1307, %v1308
        %v1310 = vrot.slane %v1233, 1
        %v1311 = vrot.slane %v1235, 1
        %v1312 = vsel %vm1273, %v1310, %v1311
        %v1313 = vrot.slane %v1234, 1
        %v1314 = vrot.slane %v1236, 1
        %v1315 = vsel %vm1273, %v1313, %v1314
        %v1316 = vrot.slane %v1237, 1
        %v1317 = vrot.slane %v1239, 1
        %v1318 = vsel %vm1273, %v1316, %v1317
        %v1319 = vrot.slane %v1238, 1
        %v1320 = vrot.slane %v1240, 1
        %v1321 = vsel %vm1273, %v1319, %v1320
        %s1338 = scalar_lea.vmem %s1, 512
        %v1339 = vld [vmem:[%s1338] sm:$0xff]
        %v1340 = vld [vmem:[%s1338 + $0x8] sm:$0xff]
        %v1341 = vld [vmem:[%s1338 + $0x10] sm:$0xff]
        %v1342 = vld [vmem:[%s1338 + $0x18] sm:$0xff]
        %v1343 = vld [vmem:[%s1338 + $0x20] sm:$0xff]
        %v1344 = vld [vmem:[%s1338 + $0x28] sm:$0xff]
        %v1345 = vld [vmem:[%s1338 + $0x30] sm:$0xff]
        %v1346 = vld [vmem:[%s1338 + $0x38] sm:$0xff]
        %v1347 = vld [vmem:[%s1338 + $0x40] sm:$0xff]
        %v1348 = vld [vmem:[%s1338 + $0x48] sm:$0xff]
        %v1349 = vld [vmem:[%s1338 + $0x50] sm:$0xff]
        %v1350 = vld [vmem:[%s1338 + $0x58] sm:$0xff]
        %v1351 = vld [vmem:[%s1338 + $0x60] sm:$0xff]
        %v1352 = vld [vmem:[%s1338 + $0x68] sm:$0xff]
        %v1353 = vld [vmem:[%s1338 + $0x70] sm:$0xff]
        %v1354 = vld [vmem:[%s1338 + $0x78] sm:$0xff]
        %v1355 = vld [vmem:[%s1338 + $0x80] sm:$0xff]
        %v1356 = vld [vmem:[%s1338 + $0x88] sm:$0xff]
        %v1357 = vld [vmem:[%s1338 + $0x90] sm:$0xff]
        %v1358 = vld [vmem:[%s1338 + $0x98] sm:$0xff]
        %v1359 = vld [vmem:[%s1338 + $0xa0] sm:$0xff]
        %v1360 = vld [vmem:[%s1338 + $0xa8] sm:$0xff]
        %v1361 = vld [vmem:[%s1338 + $0xb0] sm:$0xff]
        %v1362 = vld [vmem:[%s1338 + $0xb8] sm:$0xff]
        %v1363 = vld [vmem:[%s1338 + $0xc0] sm:$0xff]
        %v1364 = vld [vmem:[%s1338 + $0xc8] sm:$0xff]
        %v1365 = vld [vmem:[%s1338 + $0xd0] sm:$0xff]
        %v1366 = vld [vmem:[%s1338 + $0xd8] sm:$0xff]
        %v1367 = vld [vmem:[%s1338 + $0xe0] sm:$0xff]
        %v1368 = vld [vmem:[%s1338 + $0xe8] sm:$0xff]
        %v1369 = vld [vmem:[%s1338 + $0xf0] sm:$0xff]
        %v1370 = vld [vmem:[%s1338 + $0xf8] sm:$0xff]
        %v1403 = vunpack.c.l.b16 %v1339
        %v1404 = vunpack.c.h.b16 %v1339
        %v1405 = vunpack.c.l.b16 %v1340
        %v1406 = vunpack.c.h.b16 %v1340
        %v1407 = vunpack.c.l.b16 %v1341
        %v1408 = vunpack.c.h.b16 %v1341
        %v1409 = vunpack.c.l.b16 %v1342
        %v1410 = vunpack.c.h.b16 %v1342
        %v1411 = vunpack.c.l.b16 %v1343
        %v1412 = vunpack.c.h.b16 %v1343
        %v1413 = vunpack.c.l.b16 %v1344
        %v1414 = vunpack.c.h.b16 %v1344
        %v1415 = vunpack.c.l.b16 %v1345
        %v1416 = vunpack.c.h.b16 %v1345
        %v1417 = vunpack.c.l.b16 %v1346
        %v1418 = vunpack.c.h.b16 %v1346
        %v1419 = vunpack.c.l.b16 %v1347
        %v1420 = vunpack.c.h.b16 %v1347
        %v1421 = vunpack.c.l.b16 %v1348
        %v1422 = vunpack.c.h.b16 %v1348
        %v1423 = vunpack.c.l.b16 %v1349
        %v1424 = vunpack.c.h.b16 %v1349
        %v1425 = vunpack.c.l.b16 %v1350
        %v1426 = vunpack.c.h.b16 %v1350
        %v1427 = vunpack.c.l.b16 %v1351
        %v1428 = vunpack.c.h.b16 %v1351
        %v1429 = vunpack.c.l.b16 %v1352
        %v1430 = vunpack.c.h.b16 %v1352
        %v1431 = vunpack.c.l.b16 %v1353
        %v1432 = vunpack.c.h.b16 %v1353
        %v1433 = vunpack.c.l.b16 %v1354
        %v1434 = vunpack.c.h.b16 %v1354
        %v1435 = vunpack.c.l.b16 %v1355
        %v1436 = vunpack.c.h.b16 %v1355
        %v1437 = vunpack.c.l.b16 %v1356
        %v1438 = vunpack.c.h.b16 %v1356
        %v1439 = vunpack.c.l.b16 %v1357
        %v1440 = vunpack.c.h.b16 %v1357
        %v1441 = vunpack.c.l.b16 %v1358
        %v1442 = vunpack.c.h.b16 %v1358
        %v1443 = vunpack.c.l.b16 %v1359
        %v1444 = vunpack.c.h.b16 %v1359
        %v1445 = vunpack.c.l.b16 %v1360
        %v1446 = vunpack.c.h.b16 %v1360
        %v1447 = vunpack.c.l.b16 %v1361
        %v1448 = vunpack.c.h.b16 %v1361
        %v1449 = vunpack.c.l.b16 %v1362
        %v1450 = vunpack.c.h.b16 %v1362
        %v1451 = vunpack.c.l.b16 %v1363
        %v1452 = vunpack.c.h.b16 %v1363
        %v1453 = vunpack.c.l.b16 %v1364
        %v1454 = vunpack.c.h.b16 %v1364
        %v1455 = vunpack.c.l.b16 %v1365
        %v1456 = vunpack.c.h.b16 %v1365
        %v1457 = vunpack.c.l.b16 %v1366
        %v1458 = vunpack.c.h.b16 %v1366
        %v1459 = vunpack.c.l.b16 %v1367
        %v1460 = vunpack.c.h.b16 %v1367
        %v1461 = vunpack.c.l.b16 %v1368
        %v1462 = vunpack.c.h.b16 %v1368
        %v1463 = vunpack.c.l.b16 %v1369
        %v1464 = vunpack.c.h.b16 %v1369
        %v1465 = vunpack.c.l.b16 %v1370
        %v1466 = vunpack.c.h.b16 %v1370
        %v1467 = vpack.c.b16 %v1405, %v1403
        %v1468 = vpack.c.b16 %v1406, %v1404
        %v1469 = vpack.c.b16 %v1409, %v1407
        %v1470 = vpack.c.b16 %v1410, %v1408
        %v1471 = vpack.c.b16 %v1413, %v1411
        %v1472 = vpack.c.b16 %v1414, %v1412
        %v1473 = vpack.c.b16 %v1417, %v1415
        %v1474 = vpack.c.b16 %v1418, %v1416
        %v1475 = vpack.c.b16 %v1421, %v1419
        %v1476 = vpack.c.b16 %v1422, %v1420
        %v1477 = vpack.c.b16 %v1425, %v1423
        %v1478 = vpack.c.b16 %v1426, %v1424
        %v1479 = vpack.c.b16 %v1429, %v1427
        %v1480 = vpack.c.b16 %v1430, %v1428
        %v1481 = vpack.c.b16 %v1433, %v1431
        %v1482 = vpack.c.b16 %v1434, %v1432
        %v1483 = vpack.c.b16 %v1437, %v1435
        %v1484 = vpack.c.b16 %v1438, %v1436
        %v1485 = vpack.c.b16 %v1441, %v1439
        %v1486 = vpack.c.b16 %v1442, %v1440
        %v1487 = vpack.c.b16 %v1445, %v1443
        %v1488 = vpack.c.b16 %v1446, %v1444
        %v1489 = vpack.c.b16 %v1449, %v1447
        %v1490 = vpack.c.b16 %v1450, %v1448
        %v1491 = vpack.c.b16 %v1453, %v1451
        %v1492 = vpack.c.b16 %v1454, %v1452
        %v1493 = vpack.c.b16 %v1457, %v1455
        %v1494 = vpack.c.b16 %v1458, %v1456
        %v1495 = vpack.c.b16 %v1461, %v1459
        %v1496 = vpack.c.b16 %v1462, %v1460
        %v1497 = vpack.c.b16 %v1465, %v1463
        %v1498 = vpack.c.b16 %v1466, %v1464
        %1531 = vmatprep.subr.bf16.mxu0 %v1482
        %1532 = vmatpush1.bf16.msra.mxu0 %v1481
        %1533 = vmatprep.subr.bf16.mxu0 %v1480
        %1534 = vmatpush1.bf16.msra.mxu0 %v1479
        %1535 = vmatprep.subr.bf16.mxu0 %v1478
        %1536 = vmatpush1.bf16.msra.mxu0 %v1477
        %1537 = vmatprep.subr.bf16.mxu0 %v1476
        %1538 = vmatpush1.bf16.msra.mxu0 %v1475
        %1539 = vmatprep.subr.bf16.mxu0 %v1474
        %1540 = vmatpush1.bf16.msra.mxu0 %v1473
        %1541 = vmatprep.subr.bf16.mxu0 %v1472
        %1542 = vmatpush1.bf16.msra.mxu0 %v1471
        %1543 = vmatprep.subr.bf16.mxu0 %v1470
        %1544 = vmatpush1.bf16.msra.mxu0 %v1469
        %1545 = vmatprep.subr.bf16.mxu0 %v1468
        %1546 = vmatpush1.bf16.msra.mxu0 %v1467
        %1547 = vmatprep.subr.bf16.mxu0 %v1498
        %1548 = vmatpush2.bf16.msra.mxu0 %v1497
        %1549 = vmatprep.subr.bf16.mxu0 %v1496
        %1550 = vmatpush2.bf16.msra.mxu0 %v1495
        %1551 = vmatprep.subr.bf16.mxu0 %v1494
        %1552 = vmatpush2.bf16.msra.mxu0 %v1493
        %1553 = vmatprep.subr.bf16.mxu0 %v1492
        %1554 = vmatpush2.bf16.msra.mxu0 %v1491
        %1555 = vmatprep.subr.bf16.mxu0 %v1490
        %1556 = vmatpush2.bf16.msra.mxu0 %v1489
        %1557 = vmatprep.subr.bf16.mxu0 %v1488
        %1558 = vmatpush2.bf16.msra.mxu0 %v1487
        %1559 = vmatprep.subr.bf16.mxu0 %v1486
        %1560 = vmatpush2.bf16.msra.mxu0 %v1485
        %1561 = vmatprep.subr.bf16.mxu0 %v1484
        %1562 = vmatpush2.bf16.msra.mxu0 %v1483
        %1563 = vmatprep.mubr.bf16.mxu0 %v1279
        %1564 = vmatmul.mubr.bf16.gmra.mxu0 %v1276
        %v1565 = vpop.f32.mrf.mxu0
        %v1566 = vadd.f32 0.0, %v1565
        %v1567 = vpop.f32.mrf.mxu0
        %v1568 = vadd.f32 0.0, %v1567
        %v1569 = vpop.f32.mrf.mxu0
        %v1570 = vadd.f32 0.0, %v1569
        %v1571 = vpop.f32.mrf.mxu0
        %v1572 = vadd.f32 0.0, %v1571
        %1573 = vmatprep.mubr.bf16.mxu0 %v1285
        %1574 = vmatmul.mubr.bf16.gmra.mxu0 %v1282
        %v1575 = vpop.f32.mrf.mxu0
        %v1576 = vadd.f32 0.0, %v1575
        %v1577 = vpop.f32.mrf.mxu0
        %v1578 = vadd.f32 0.0, %v1577
        %v1579 = vpop.f32.mrf.mxu0
        %v1580 = vadd.f32 0.0, %v1579
        %v1581 = vpop.f32.mrf.mxu0
        %v1582 = vadd.f32 0.0, %v1581
        %1583 = vmatprep.mubr.bf16.mxu0 %v1291
        %1584 = vmatmul.mubr.bf16.gmra.mxu0 %v1288
        %v1585 = vpop.f32.mrf.mxu0
        %v1586 = vadd.f32 0.0, %v1585
        %v1587 = vpop.f32.mrf.mxu0
        %v1588 = vadd.f32 0.0, %v1587
        %v1589 = vpop.f32.mrf.mxu0
        %v1590 = vadd.f32 0.0, %v1589
        %v1591 = vpop.f32.mrf.mxu0
        %v1592 = vadd.f32 0.0, %v1591
        %1593 = vmatprep.mubr.bf16.mxu0 %v1297
        %1594 = vmatmul.mubr.bf16.gmra.mxu0 %v1294
        %v1595 = vpop.f32.mrf.mxu0
        %v1596 = vadd.f32 0.0, %v1595
        %v1597 = vpop.f32.mrf.mxu0
        %v1598 = vadd.f32 0.0, %v1597
        %v1599 = vpop.f32.mrf.mxu0
        %v1600 = vadd.f32 0.0, %v1599
        %v1601 = vpop.f32.mrf.mxu0
        %v1602 = vadd.f32 0.0, %v1601
        %1603 = vmatprep.mubr.bf16.mxu0 %v1303
        %1604 = vmatmul.mubr.bf16.gmra.mxu0 %v1300
        %v1605 = vpop.f32.mrf.mxu0
        %v1606 = vadd.f32 0.0, %v1605
        %v1607 = vpop.f32.mrf.mxu0
        %v1608 = vadd.f32 0.0, %v1607
        %v1609 = vpop.f32.mrf.mxu0
        %v1610 = vadd.f32 0.0, %v1609
        %v1611 = vpop.f32.mrf.mxu0
        %v1612 = vadd.f32 0.0, %v1611
        %1613 = vmatprep.mubr.bf16.mxu0 %v1309
        %1614 = vmatmul.mubr.bf16.gmra.mxu0 %v1306
        %v1615 = vpop.f32.mrf.mxu0
        %v1616 = vadd.f32 0.0, %v1615
        %v1617 = vpop.f32.mrf.mxu0
        %v1618 = vadd.f32 0.0, %v1617
        %v1619 = vpop.f32.mrf.mxu0
        %v1620 = vadd.f32 0.0, %v1619
        %v1621 = vpop.f32.mrf.mxu0
        %v1622 = vadd.f32 0.0, %v1621
        %1623 = vmatprep.mubr.bf16.mxu0 %v1315
        %1624 = vmatmul.mubr.bf16.gmra.mxu0 %v1312
        %v1625 = vpop.f32.mrf.mxu0
        %v1626 = vadd.f32 0.0, %v1625
        %v1627 = vpop.f32.mrf.mxu0
        %v1628 = vadd.f32 0.0, %v1627
        %v1629 = vpop.f32.mrf.mxu0
        %v1630 = vadd.f32 0.0, %v1629
        %v1631 = vpop.f32.mrf.mxu0
        %v1632 = vadd.f32 0.0, %v1631
        %1633 = vmatprep.mubr.bf16.mxu0 %v1321
        %1634 = vmatmul.mubr.bf16.gmra.mxu0 %v1318
        %v1635 = vpop.f32.mrf.mxu0
        %v1636 = vadd.f32 0.0, %v1635
        %v1637 = vpop.f32.mrf.mxu0
        %v1638 = vadd.f32 0.0, %v1637
        %v1639 = vpop.f32.mrf.mxu0
        %v1640 = vadd.f32 0.0, %v1639
        %v1641 = vpop.f32.mrf.mxu0
        %v1642 = vadd.f32 0.0, %v1641
        %1643 = vdwg.mxu0
        %v1644 = vadd.f32 %v1099, %v1566
        %v1645 = vadd.f32 %v1101, %v1568
        %v1646 = vadd.f32 %v1103, %v1570
        %v1647 = vadd.f32 %v1105, %v1572
        %v1648 = vadd.f32 %v1109, %v1576
        %v1649 = vadd.f32 %v1111, %v1578
        %v1650 = vadd.f32 %v1113, %v1580
        %v1651 = vadd.f32 %v1115, %v1582
        %v1652 = vadd.f32 %v1119, %v1586
        %v1653 = vadd.f32 %v1121, %v1588
        %v1654 = vadd.f32 %v1123, %v1590
        %v1655 = vadd.f32 %v1125, %v1592
        %v1656 = vadd.f32 %v1129, %v1596
        %v1657 = vadd.f32 %v1131, %v1598
        %v1658 = vadd.f32 %v1133, %v1600
        %v1659 = vadd.f32 %v1135, %v1602
        %v1660 = vadd.f32 %v1139, %v1606
        %v1661 = vadd.f32 %v1141, %v1608
        %v1662 = vadd.f32 %v1143, %v1610
        %v1663 = vadd.f32 %v1145, %v1612
        %v1664 = vadd.f32 %v1149, %v1616
        %v1665 = vadd.f32 %v1151, %v1618
        %v1666 = vadd.f32 %v1153, %v1620
        %v1667 = vadd.f32 %v1155, %v1622
        %v1668 = vadd.f32 %v1159, %v1626
        %v1669 = vadd.f32 %v1161, %v1628
        %v1670 = vadd.f32 %v1163, %v1630
        %v1671 = vadd.f32 %v1165, %v1632
        %v1672 = vadd.f32 %v1169, %v1636
        %v1673 = vadd.f32 %v1171, %v1638
        %v1674 = vadd.f32 %v1173, %v1640
        %v1675 = vadd.f32 %v1175, %v1642
        %v1676 = vld [vmem:[%s2] sm:$0x3]
        %v1678 = vlaneseq
        %v1679 = vshrl.u32 %v1678, 7
        %v1680 = vsub.s32 0, %v1679
        %v1681 = vrot.slane %v1676, %v1680
        %v1682 = vlaneseq
        %v1683 = vshrl.u32 %v1682, 7
        %v1684 = vsub.s32 1, %v1683
        %v1685 = vrot.slane %v1676, %v1684
        %v1688 = vadd.f32 %v1644, %v1681
        %v1689 = vadd.f32 %v1645, %v1685
        %v1690 = vadd.f32 %v1646, %v1681
        %v1691 = vadd.f32 %v1647, %v1685
        %v1692 = vadd.f32 %v1648, %v1681
        %v1693 = vadd.f32 %v1649, %v1685
        %v1694 = vadd.f32 %v1650, %v1681
        %v1695 = vadd.f32 %v1651, %v1685
        %v1696 = vadd.f32 %v1652, %v1681
        %v1697 = vadd.f32 %v1653, %v1685
        %v1698 = vadd.f32 %v1654, %v1681
        %v1699 = vadd.f32 %v1655, %v1685
        %v1700 = vadd.f32 %v1656, %v1681
        %v1701 = vadd.f32 %v1657, %v1685
        %v1702 = vadd.f32 %v1658, %v1681
        %v1703 = vadd.f32 %v1659, %v1685
        %v1704 = vadd.f32 %v1660, %v1681
        %v1705 = vadd.f32 %v1661, %v1685
        %v1706 = vadd.f32 %v1662, %v1681
        %v1707 = vadd.f32 %v1663, %v1685
        %v1708 = vadd.f32 %v1664, %v1681
        %v1709 = vadd.f32 %v1665, %v1685
        %v1710 = vadd.f32 %v1666, %v1681
        %v1711 = vadd.f32 %v1667, %v1685
        %v1712 = vadd.f32 %v1668, %v1681
        %v1713 = vadd.f32 %v1669, %v1685
        %v1714 = vadd.f32 %v1670, %v1681
        %v1715 = vadd.f32 %v1671, %v1685
        %v1716 = vadd.f32 %v1672, %v1681
        %v1717 = vadd.f32 %v1673, %v1685
        %v1718 = vadd.f32 %v1674, %v1681
        %v1719 = vadd.f32 %v1675, %v1685
        %v1720 = vmax.f32 %v1688, 0.0
        %v1721 = vmax.f32 %v1689, 0.0
        %v1722 = vmax.f32 %v1690, 0.0
        %v1723 = vmax.f32 %v1691, 0.0
        %v1724 = vmax.f32 %v1692, 0.0
        %v1725 = vmax.f32 %v1693, 0.0
        %v1726 = vmax.f32 %v1694, 0.0
        %v1727 = vmax.f32 %v1695, 0.0
        %v1728 = vmax.f32 %v1696, 0.0
        %v1729 = vmax.f32 %v1697, 0.0
        %v1730 = vmax.f32 %v1698, 0.0
        %v1731 = vmax.f32 %v1699, 0.0
        %v1732 = vmax.f32 %v1700, 0.0
        %v1733 = vmax.f32 %v1701, 0.0
        %v1734 = vmax.f32 %v1702, 0.0
        %v1735 = vmax.f32 %v1703, 0.0
        %v1736 = vmax.f32 %v1704, 0.0
        %v1737 = vmax.f32 %v1705, 0.0
        %v1738 = vmax.f32 %v1706, 0.0
        %v1739 = vmax.f32 %v1707, 0.0
        %v1740 = vmax.f32 %v1708, 0.0
        %v1741 = vmax.f32 %v1709, 0.0
        %v1742 = vmax.f32 %v1710, 0.0
        %v1743 = vmax.f32 %v1711, 0.0
        %v1744 = vmax.f32 %v1712, 0.0
        %v1745 = vmax.f32 %v1713, 0.0
        %v1746 = vmax.f32 %v1714, 0.0
        %v1747 = vmax.f32 %v1715, 0.0
        %v1748 = vmax.f32 %v1716, 0.0
        %v1749 = vmax.f32 %v1717, 0.0
        %v1750 = vmax.f32 %v1718, 0.0
        %v1751 = vmax.f32 %v1719, 0.0
        %v1752 = vpack.c.bf16 %v1722, %v1720
        %v1753 = vpack.c.bf16 %v1723, %v1721
        %v1754 = vpack.c.bf16 %v1726, %v1724
        %v1755 = vpack.c.bf16 %v1727, %v1725
        %v1756 = vpack.c.bf16 %v1730, %v1728
        %v1757 = vpack.c.bf16 %v1731, %v1729
        %v1758 = vpack.c.bf16 %v1734, %v1732
        %v1759 = vpack.c.bf16 %v1735, %v1733
        %v1760 = vpack.c.bf16 %v1738, %v1736
        %v1761 = vpack.c.bf16 %v1739, %v1737
        %v1762 = vpack.c.bf16 %v1742, %v1740
        %v1763 = vpack.c.bf16 %v1743, %v1741
        %v1764 = vpack.c.bf16 %v1746, %v1744
        %v1765 = vpack.c.bf16 %v1747, %v1745
        %v1766 = vpack.c.bf16 %v1750, %v1748
        %v1767 = vpack.c.bf16 %v1751, %v1749
        %vm1768 = vcmask 1040384
        %vm1769 = vsmask.f32 256
        %vm1770 = vmand %vm1768, %vm1769
        %vm1771 = vcmask 1044484
        %vm1772 = vsmask.f32 4352
        %vm1773 = vmand %vm1771, %vm1772
        %vm1774 = vmor %vm1773, %vm1770
        %v1775 = vld [vmem:[#allocation2] sm:$0x11]
        %v1776 = vsel %vm1774, 0, %v1775
        %1777 = vst [vmem:[#allocation2] sm:$0x11] %v1776
        %v1778 = vld [vmem:[#allocation2 + $0x18] sm:$0x11]
        %v1779 = vsel %vm1774, 0, %v1778
        %1780 = vst [vmem:[#allocation2 + $0x18] sm:$0x11] %v1779
        %v1781 = vld [vmem:[#allocation2 + $0x30] sm:$0x11]
        %v1782 = vsel %vm1774, 0, %v1781
        %1783 = vst [vmem:[#allocation2 + $0x30] sm:$0x11] %v1782
        %v1784 = vld [vmem:[#allocation2 + $0x48] sm:$0x11]
        %v1785 = vsel %vm1774, 0, %v1784
        %1786 = vst [vmem:[#allocation2 + $0x48] sm:$0x11] %v1785
        %v1787 = vld [vmem:[#allocation2 + $0x60] sm:$0x11]
        %v1788 = vsel %vm1774, 0, %v1787
        %1789 = vst [vmem:[#allocation2 + $0x60] sm:$0x11] %v1788
        %v1790 = vld [vmem:[#allocation2 + $0x78] sm:$0x11]
        %v1791 = vsel %vm1774, 0, %v1790
        %1792 = vst [vmem:[#allocation2 + $0x78] sm:$0x11] %v1791
        %v1793 = vld [vmem:[#allocation2 + $0x90] sm:$0x11]
        %v1794 = vsel %vm1774, 0, %v1793
        %1795 = vst [vmem:[#allocation2 + $0x90] sm:$0x11] %v1794
        %v1796 = vld [vmem:[#allocation2 + $0xa8] sm:$0x11]
        %v1797 = vsel %vm1774, 0, %v1796
        %1798 = vst [vmem:[#allocation2 + $0xa8] sm:$0x11] %v1797
        %vm1799 = vsmask.f32 7938
        %vm1800 = vmand %vm1768, %vm1799
        %vm1801 = vsmask.f32 7954
        %vm1802 = vmand %vm1771, %vm1801
        %vm1803 = vmor %vm1802, %vm1800
        %v1804 = vld [vmem:[#allocation2 + $0x10] sm:$0x11]
        %v1805 = vsel %vm1803, 0, %v1804
        %1806 = vst [vmem:[#allocation2 + $0x10] sm:$0x11] %v1805
        %v1807 = vld [vmem:[#allocation2 + $0x28] sm:$0x11]
        %v1808 = vsel %vm1803, 0, %v1807
        %1809 = vst [vmem:[#allocation2 + $0x28] sm:$0x11] %v1808
        %v1810 = vld [vmem:[#allocation2 + $0x40] sm:$0x11]
        %v1811 = vsel %vm1803, 0, %v1810
        %1812 = vst [vmem:[#allocation2 + $0x40] sm:$0x11] %v1811
        %v1813 = vld [vmem:[#allocation2 + $0x58] sm:$0x11]
        %v1814 = vsel %vm1803, 0, %v1813
        %1815 = vst [vmem:[#allocation2 + $0x58] sm:$0x11] %v1814
        %v1816 = vld [vmem:[#allocation2 + $0x70] sm:$0x11]
        %v1817 = vsel %vm1803, 0, %v1816
        %1818 = vst [vmem:[#allocation2 + $0x70] sm:$0x11] %v1817
        %v1819 = vld [vmem:[#allocation2 + $0x88] sm:$0x11]
        %v1820 = vsel %vm1803, 0, %v1819
        %1821 = vst [vmem:[#allocation2 + $0x88] sm:$0x11] %v1820
        %v1822 = vld [vmem:[#allocation2 + $0xa0] sm:$0x11]
        %v1823 = vsel %vm1803, 0, %v1822
        %1824 = vst [vmem:[#allocation2 + $0xa0] sm:$0x11] %v1823
        %v1825 = vld [vmem:[#allocation2 + $0xb8] sm:$0x11]
        %v1826 = vsel %vm1803, 0, %v1825
        %1827 = vst [vmem:[#allocation2 + $0xb8] sm:$0x11] %v1826
        %v1844 = vunpack.c.l.b16 %v1752
        %v1845 = vunpack.c.l.b16 %v1753
        %v1846 = vunpack.c.h.b16 %v1752
        %v1847 = vunpack.c.h.b16 %v1753
        %v1848 = vunpack.c.l.b16 %v1754
        %v1849 = vunpack.c.l.b16 %v1755
        %v1850 = vunpack.c.h.b16 %v1754
        %v1851 = vunpack.c.h.b16 %v1755
        %v1852 = vunpack.c.l.b16 %v1756
        %v1853 = vunpack.c.l.b16 %v1757
        %v1854 = vunpack.c.h.b16 %v1756
        %v1855 = vunpack.c.h.b16 %v1757
        %v1856 = vunpack.c.l.b16 %v1758
        %v1857 = vunpack.c.l.b16 %v1759
        %v1858 = vunpack.c.h.b16 %v1758
        %v1859 = vunpack.c.h.b16 %v1759
        %v1860 = vunpack.c.l.b16 %v1760
        %v1861 = vunpack.c.l.b16 %v1761
        %v1862 = vunpack.c.h.b16 %v1760
        %v1863 = vunpack.c.h.b16 %v1761
        %v1864 = vunpack.c.l.b16 %v1762
        %v1865 = vunpack.c.l.b16 %v1763
        %v1866 = vunpack.c.h.b16 %v1762
        %v1867 = vunpack.c.h.b16 %v1763
        %v1868 = vunpack.c.l.b16 %v1764
        %v1869 = vunpack.c.l.b16 %v1765
        %v1870 = vunpack.c.h.b16 %v1764
        %v1871 = vunpack.c.h.b16 %v1765
        %v1872 = vunpack.c.l.b16 %v1766
        %v1873 = vunpack.c.l.b16 %v1767
        %v1874 = vunpack.c.h.b16 %v1766
        %v1875 = vunpack.c.h.b16 %v1767
        %v1876 = vpack.c.b16 %v1845, %v1844
        %v1877 = vpack.c.b16 %v1847, %v1846
        %v1878 = vpack.c.b16 %v1849, %v1848
        %v1879 = vpack.c.b16 %v1851, %v1850
        %v1880 = vpack.c.b16 %v1853, %v1852
        %v1881 = vpack.c.b16 %v1855, %v1854
        %v1882 = vpack.c.b16 %v1857, %v1856
        %v1883 = vpack.c.b16 %v1859, %v1858
        %v1884 = vpack.c.b16 %v1861, %v1860
        %v1885 = vpack.c.b16 %v1863, %v1862
        %v1886 = vpack.c.b16 %v1865, %v1864
        %v1887 = vpack.c.b16 %v1867, %v1866
        %v1888 = vpack.c.b16 %v1869, %v1868
        %v1889 = vpack.c.b16 %v1871, %v1870
        %v1890 = vpack.c.b16 %v1873, %v1872
        %v1891 = vpack.c.b16 %v1875, %v1874
        %vm1892 = vsmask.f32 4368
        %vm1893 = vmor %vm1769, %vm1892
        %v1895 = vshrl.u32 %v1876, 16
        %v1897 = vrot.slane %v1895, 7
        %v1898 = vshll.u32 %v1876, 16
        %v1900 = vor.u32 %v1897, %v1898
        %v1901 = vrot.slane %v1897, 4
        %v1903 = vshrl.u32 %v1877, 16
        %v1905 = vrot.slane %v1903, 7
        %v1906 = vshll.u32 %v1877, 16
        %v1908 = vor.u32 %v1905, %v1906
        %v1909 = vsel %vm1893, %v1901, %v1908
        %v1910 = vrot.slane %v1905, 4
        %v1912 = vshrl.u32 %v1878, 16
        %v1914 = vrot.slane %v1912, 7
        %v1915 = vshll.u32 %v1878, 16
        %v1917 = vor.u32 %v1914, %v1915
        %v1918 = vrot.slane %v1914, 4
        %v1920 = vshrl.u32 %v1879, 16
        %v1922 = vrot.slane %v1920, 7
        %v1923 = vshll.u32 %v1879, 16
        %v1925 = vor.u32 %v1922, %v1923
        %v1926 = vsel %vm1893, %v1918, %v1925
        %v1927 = vrot.slane %v1922, 4
        %v1929 = vshrl.u32 %v1880, 16
        %v1931 = vrot.slane %v1929, 7
        %v1932 = vshll.u32 %v1880, 16
        %v1934 = vor.u32 %v1931, %v1932
        %v1935 = vrot.slane %v1931, 4
        %v1937 = vshrl.u32 %v1881, 16
        %v1939 = vrot.slane %v1937, 7
        %v1940 = vshll.u32 %v1881, 16
        %v1942 = vor.u32 %v1939, %v1940
        %v1943 = vsel %vm1893, %v1935, %v1942
        %v1944 = vrot.slane %v1939, 4
        %v1946 = vshrl.u32 %v1882, 16
        %v1948 = vrot.slane %v1946, 7
        %v1949 = vshll.u32 %v1882, 16
        %v1951 = vor.u32 %v1948, %v1949
        %v1952 = vrot.slane %v1948, 4
        %v1954 = vshrl.u32 %v1883, 16
        %v1956 = vrot.slane %v1954, 7
        %v1957 = vshll.u32 %v1883, 16
        %v1959 = vor.u32 %v1956, %v1957
        %v1960 = vsel %vm1893, %v1952, %v1959
        %v1961 = vrot.slane %v1956, 4
        %v1963 = vshrl.u32 %v1884, 16
        %v1965 = vrot.slane %v1963, 7
        %v1966 = vshll.u32 %v1884, 16
        %v1968 = vor.u32 %v1965, %v1966
        %v1969 = vrot.slane %v1965, 4
        %v1971 = vshrl.u32 %v1885, 16
        %v1973 = vrot.slane %v1971, 7
        %v1974 = vshll.u32 %v1885, 16
        %v1976 = vor.u32 %v1973, %v1974
        %v1977 = vsel %vm1893, %v1969, %v1976
        %v1978 = vrot.slane %v1973, 4
        %v1980 = vshrl.u32 %v1886, 16
        %v1982 = vrot.slane %v1980, 7
        %v1983 = vshll.u32 %v1886, 16
        %v1985 = vor.u32 %v1982, %v1983
        %v1986 = vrot.slane %v1982, 4
        %v1988 = vshrl.u32 %v1887, 16
        %v1990 = vrot.slane %v1988, 7
        %v1991 = vshll.u32 %v1887, 16
        %v1993 = vor.u32 %v1990, %v1991
        %v1994 = vsel %vm1893, %v1986, %v1993
        %v1995 = vrot.slane %v1990, 4
        %v1997 = vshrl.u32 %v1888, 16
        %v1999 = vrot.slane %v1997, 7
        %v2000 = vshll.u32 %v1888, 16
        %v2002 = vor.u32 %v1999, %v2000
        %v2003 = vrot.slane %v1999, 4
        %v2005 = vshrl.u32 %v1889, 16
        %v2007 = vrot.slane %v2005, 7
        %v2008 = vshll.u32 %v1889, 16
        %v2010 = vor.u32 %v2007, %v2008
        %v2011 = vsel %vm1893, %v2003, %v2010
        %v2012 = vrot.slane %v2007, 4
        %v2014 = vshrl.u32 %v1890, 16
        %v2016 = vrot.slane %v2014, 7
        %v2017 = vshll.u32 %v1890, 16
        %v2019 = vor.u32 %v2016, %v2017
        %v2020 = vrot.slane %v2016, 4
        %v2022 = vshrl.u32 %v1891, 16
        %v2024 = vrot.slane %v2022, 7
        %v2025 = vshll.u32 %v1891, 16
        %v2027 = vor.u32 %v2024, %v2025
        %v2028 = vsel %vm1893, %v2020, %v2027
        %v2029 = vrot.slane %v2024, 4
        %vm2054 = vcmask 1043456
        %vm2055 = vmand %vm2054, %vm1799
        %vm2056 = vcmask 1047556
        %vm2057 = vmand %vm2056, %vm1801
        %vm2058 = vmor %vm2057, %vm2055
        %v2059 = vld [vmem:[#allocation2] sm:$0xff]
        %v2060 = vsel %vm2058, %v1900, %v2059
        %2061 = vst [vmem:[#allocation2] sm:$0xff] %v2060
        %2062 = vst [vmem:[#allocation2 + $0x8] sm:$0xff] %v1909
        %v2063 = vld [vmem:[#allocation2 + $0x10] sm:$0x11]
        %v2064 = vsel %vm1774, %v1910, %v2063
        %2065 = vst [vmem:[#allocation2 + $0x10] sm:$0x11] %v2064
        %v2066 = vld [vmem:[#allocation2 + $0x18] sm:$0xff]
        %v2067 = vsel %vm2058, %v1917, %v2066
        %2068 = vst [vmem:[#allocation2 + $0x18] sm:$0xff] %v2067
        %2069 = vst [vmem:[#allocation2 + $0x20] sm:$0xff] %v1926
        %v2070 = vld [vmem:[#allocation2 + $0x28] sm:$0x11]
        %v2071 = vsel %vm1774, %v1927, %v2070
        %2072 = vst [vmem:[#allocation2 + $0x28] sm:$0x11] %v2071
        %v2073 = vld [vmem:[#allocation2 + $0x30] sm:$0xff]
        %v2074 = vsel %vm2058, %v1934, %v2073
        %2075 = vst [vmem:[#allocation2 + $0x30] sm:$0xff] %v2074
        %2076 = vst [vmem:[#allocation2 + $0x38] sm:$0xff] %v1943
        %v2077 = vld [vmem:[#allocation2 + $0x40] sm:$0x11]
        %v2078 = vsel %vm1774, %v1944, %v2077
        %2079 = vst [vmem:[#allocation2 + $0x40] sm:$0x11] %v2078
        %v2080 = vld [vmem:[#allocation2 + $0x48] sm:$0xff]
        %v2081 = vsel %vm2058, %v1951, %v2080
        %2082 = vst [vmem:[#allocation2 + $0x48] sm:$0xff] %v2081
        %2083 = vst [vmem:[#allocation2 + $0x50] sm:$0xff] %v1960
        %v2084 = vld [vmem:[#allocation2 + $0x58] sm:$0x11]
        %v2085 = vsel %vm1774, %v1961, %v2084
        %2086 = vst [vmem:[#allocation2 + $0x58] sm:$0x11] %v2085
        %v2087 = vld [vmem:[#allocation2 + $0x60] sm:$0xff]
        %v2088 = vsel %vm2058, %v1968, %v2087
        %2089 = vst [vmem:[#allocation2 + $0x60] sm:$0xff] %v2088
        %2090 = vst [vmem:[#allocation2 + $0x68] sm:$0xff] %v1977
        %v2091 = vld [vmem:[#allocation2 + $0x70] sm:$0x11]
        %v2092 = vsel %vm1774, %v1978, %v2091
        %2093 = vst [vmem:[#allocation2 + $0x70] sm:$0x11] %v2092
        %v2094 = vld [vmem:[#allocation2 + $0x78] sm:$0xff]
        %v2095 = vsel %vm2058, %v1985, %v2094
        %2096 = vst [vmem:[#allocation2 + $0x78] sm:$0xff] %v2095
        %2097 = vst [vmem:[#allocation2 + $0x80] sm:$0xff] %v1994
        %v2098 = vld [vmem:[#allocation2 + $0x88] sm:$0x11]
        %v2099 = vsel %vm1774, %v1995, %v2098
        %2100 = vst [vmem:[#allocation2 + $0x88] sm:$0x11] %v2099
        %v2101 = vld [vmem:[#allocation2 + $0x90] sm:$0xff]
        %v2102 = vsel %vm2058, %v2002, %v2101
        %2103 = vst [vmem:[#allocation2 + $0x90] sm:$0xff] %v2102
        %2104 = vst [vmem:[#allocation2 + $0x98] sm:$0xff] %v2011
        %v2105 = vld [vmem:[#allocation2 + $0xa0] sm:$0x11]
        %v2106 = vsel %vm1774, %v2012, %v2105
        %2107 = vst [vmem:[#allocation2 + $0xa0] sm:$0x11] %v2106
        %v2108 = vld [vmem:[#allocation2 + $0xa8] sm:$0xff]
        %v2109 = vsel %vm2058, %v2019, %v2108
        %2110 = vst [vmem:[#allocation2 + $0xa8] sm:$0xff] %v2109
        %2111 = vst [vmem:[#allocation2 + $0xb0] sm:$0xff] %v2028
        %v2112 = vld [vmem:[#allocation2 + $0xb8] sm:$0x11]
        %v2113 = vsel %vm1774, %v2029, %v2112
        %2114 = vst [vmem:[#allocation2 + $0xb8] sm:$0x11] %v2113
        %s2115 = scalar_lea.vmem [#allocation3], 256
        %v2116 = vld [vmem:[%s2115] sm:$0xff]
        %v2117 = vld [vmem:[%s2115 + $0x8] sm:$0xff]
        %v2118 = vld [vmem:[%s2115 + $0x10] sm:$0xff]
        %v2119 = vld [vmem:[%s2115 + $0x18] sm:$0xff]
        %v2120 = vld [vmem:[%s2115 + $0x20] sm:$0xff]
        %v2121 = vld [vmem:[%s2115 + $0x28] sm:$0xff]
        %v2122 = vld [vmem:[%s2115 + $0x30] sm:$0xff]
        %v2123 = vld [vmem:[%s2115 + $0x38] sm:$0xff]
        %v2124 = vld [vmem:[%s2115 + $0x40] sm:$0xff]
        %v2125 = vld [vmem:[%s2115 + $0x48] sm:$0xff]
        %v2126 = vld [vmem:[%s2115 + $0x50] sm:$0xff]
        %v2127 = vld [vmem:[%s2115 + $0x58] sm:$0xff]
        %v2128 = vld [vmem:[%s2115 + $0x60] sm:$0xff]
        %v2129 = vld [vmem:[%s2115 + $0x68] sm:$0xff]
        %v2130 = vld [vmem:[%s2115 + $0x70] sm:$0xff]
        %v2131 = vld [vmem:[%s2115 + $0x78] sm:$0xff]
        %v2132 = vld [vmem:[%s2115 + $0x80] sm:$0xff]
        %v2133 = vld [vmem:[%s2115 + $0x88] sm:$0xff]
        %v2134 = vld [vmem:[%s2115 + $0x90] sm:$0xff]
        %v2135 = vld [vmem:[%s2115 + $0x98] sm:$0xff]
        %v2136 = vld [vmem:[%s2115 + $0xa0] sm:$0xff]
        %v2137 = vld [vmem:[%s2115 + $0xa8] sm:$0xff]
        %v2138 = vld [vmem:[%s2115 + $0xb0] sm:$0xff]
        %v2139 = vld [vmem:[%s2115 + $0xb8] sm:$0xff]
        %v2140 = vld [vmem:[%s2115 + $0xc0] sm:$0xff]
        %v2141 = vld [vmem:[%s2115 + $0xc8] sm:$0xff]
        %v2142 = vld [vmem:[%s2115 + $0xd0] sm:$0xff]
        %v2143 = vld [vmem:[%s2115 + $0xd8] sm:$0xff]
        %v2144 = vld [vmem:[%s2115 + $0xe0] sm:$0xff]
        %v2145 = vld [vmem:[%s2115 + $0xe8] sm:$0xff]
        %v2146 = vld [vmem:[%s2115 + $0xf0] sm:$0xff]
        %v2147 = vld [vmem:[%s2115 + $0xf8] sm:$0xff]
        %v2148 = vld [vmem:[#allocation2] sm:$0xff]
        %v2149 = vld [vmem:[#allocation2 + $0x8] sm:$0xff]
        %v2150 = vld [vmem:[#allocation2 + $0x18] sm:$0xff]
        %v2151 = vld [vmem:[#allocation2 + $0x20] sm:$0xff]
        %v2152 = vld [vmem:[#allocation2 + $0x30] sm:$0xff]
        %v2153 = vld [vmem:[#allocation2 + $0x38] sm:$0xff]
        %v2154 = vld [vmem:[#allocation2 + $0x48] sm:$0xff]
        %v2155 = vld [vmem:[#allocation2 + $0x50] sm:$0xff]
        %v2156 = vld [vmem:[#allocation2 + $0x60] sm:$0xff]
        %v2157 = vld [vmem:[#allocation2 + $0x68] sm:$0xff]
        %v2158 = vld [vmem:[#allocation2 + $0x78] sm:$0xff]
        %v2159 = vld [vmem:[#allocation2 + $0x80] sm:$0xff]
        %v2160 = vld [vmem:[#allocation2 + $0x90] sm:$0xff]
        %v2161 = vld [vmem:[#allocation2 + $0x98] sm:$0xff]
        %v2162 = vld [vmem:[#allocation2 + $0xa8] sm:$0xff]
        %v2163 = vld [vmem:[#allocation2 + $0xb0] sm:$0xff]
        %v2164 = vld [vmem:[#allocation3] sm:$0xff]
        %v2165 = vld [vmem:[#allocation3 + $0x8] sm:$0xff]
        %v2166 = vld [vmem:[#allocation3 + $0x10] sm:$0xff]
        %v2167 = vld [vmem:[#allocation3 + $0x18] sm:$0xff]
        %v2168 = vld [vmem:[#allocation3 + $0x20] sm:$0xff]
        %v2169 = vld [vmem:[#allocation3 + $0x28] sm:$0xff]
        %v2170 = vld [vmem:[#allocation3 + $0x30] sm:$0xff]
        %v2171 = vld [vmem:[#allocation3 + $0x38] sm:$0xff]
        %v2172 = vld [vmem:[#allocation3 + $0x40] sm:$0xff]
        %v2173 = vld [vmem:[#allocation3 + $0x48] sm:$0xff]
        %v2174 = vld [vmem:[#allocation3 + $0x50] sm:$0xff]
        %v2175 = vld [vmem:[#allocation3 + $0x58] sm:$0xff]
        %v2176 = vld [vmem:[#allocation3 + $0x60] sm:$0xff]
        %v2177 = vld [vmem:[#allocation3 + $0x68] sm:$0xff]
        %v2178 = vld [vmem:[#allocation3 + $0x70] sm:$0xff]
        %v2179 = vld [vmem:[#allocation3 + $0x78] sm:$0xff]
        %v2180 = vld [vmem:[#allocation3 + $0x80] sm:$0xff]
        %v2181 = vld [vmem:[#allocation3 + $0x88] sm:$0xff]
        %v2182 = vld [vmem:[#allocation3 + $0x90] sm:$0xff]
        %v2183 = vld [vmem:[#allocation3 + $0x98] sm:$0xff]
        %v2184 = vld [vmem:[#allocation3 + $0xa0] sm:$0xff]
        %v2185 = vld [vmem:[#allocation3 + $0xa8] sm:$0xff]
        %v2186 = vld [vmem:[#allocation3 + $0xb0] sm:$0xff]
        %v2187 = vld [vmem:[#allocation3 + $0xb8] sm:$0xff]
        %v2188 = vld [vmem:[#allocation3 + $0xc0] sm:$0xff]
        %v2189 = vld [vmem:[#allocation3 + $0xc8] sm:$0xff]
        %v2190 = vld [vmem:[#allocation3 + $0xd0] sm:$0xff]
        %v2191 = vld [vmem:[#allocation3 + $0xd8] sm:$0xff]
        %v2192 = vld [vmem:[#allocation3 + $0xe0] sm:$0xff]
        %v2193 = vld [vmem:[#allocation3 + $0xe8] sm:$0xff]
        %v2194 = vld [vmem:[#allocation3 + $0xf0] sm:$0xff]
        %v2195 = vld [vmem:[#allocation3 + $0xf8] sm:$0xff]
        %v2212 = vunpack.c.l.b16 %v2148
        %v2213 = vunpack.c.h.b16 %v2148
        %v2214 = vunpack.c.l.b16 %v2149
        %v2215 = vunpack.c.h.b16 %v2149
        %v2216 = vunpack.c.l.b16 %v2150
        %v2217 = vunpack.c.h.b16 %v2150
        %v2218 = vunpack.c.l.b16 %v2151
        %v2219 = vunpack.c.h.b16 %v2151
        %v2220 = vunpack.c.l.b16 %v2152
        %v2221 = vunpack.c.h.b16 %v2152
        %v2222 = vunpack.c.l.b16 %v2153
        %v2223 = vunpack.c.h.b16 %v2153
        %v2224 = vunpack.c.l.b16 %v2154
        %v2225 = vunpack.c.h.b16 %v2154
        %v2226 = vunpack.c.l.b16 %v2155
        %v2227 = vunpack.c.h.b16 %v2155
        %v2228 = vunpack.c.l.b16 %v2156
        %v2229 = vunpack.c.h.b16 %v2156
        %v2230 = vunpack.c.l.b16 %v2157
        %v2231 = vunpack.c.h.b16 %v2157
        %v2232 = vunpack.c.l.b16 %v2158
        %v2233 = vunpack.c.h.b16 %v2158
        %v2234 = vunpack.c.l.b16 %v2159
        %v2235 = vunpack.c.h.b16 %v2159
        %v2236 = vunpack.c.l.b16 %v2160
        %v2237 = vunpack.c.h.b16 %v2160
        %v2238 = vunpack.c.l.b16 %v2161
        %v2239 = vunpack.c.h.b16 %v2161
        %v2240 = vunpack.c.l.b16 %v2162
        %v2241 = vunpack.c.h.b16 %v2162
        %v2242 = vunpack.c.l.b16 %v2163
        %v2243 = vunpack.c.h.b16 %v2163
        %v2244 = vpack.c.b16 %v2214, %v2212
        %v2245 = vpack.c.b16 %v2215, %v2213
        %v2246 = vpack.c.b16 %v2218, %v2216
        %v2247 = vpack.c.b16 %v2219, %v2217
        %v2248 = vpack.c.b16 %v2222, %v2220
        %v2249 = vpack.c.b16 %v2223, %v2221
        %v2250 = vpack.c.b16 %v2226, %v2224
        %v2251 = vpack.c.b16 %v2227, %v2225
        %v2252 = vpack.c.b16 %v2230, %v2228
        %v2253 = vpack.c.b16 %v2231, %v2229
        %v2254 = vpack.c.b16 %v2234, %v2232
        %v2255 = vpack.c.b16 %v2235, %v2233
        %v2256 = vpack.c.b16 %v2238, %v2236
        %v2257 = vpack.c.b16 %v2239, %v2237
        %v2258 = vpack.c.b16 %v2242, %v2240
        %v2259 = vpack.c.b16 %v2243, %v2241
        %v2308 = vunpack.c.l.b16 %v2164
        %v2309 = vunpack.c.h.b16 %v2164
        %v2310 = vunpack.c.l.b16 %v2165
        %v2311 = vunpack.c.h.b16 %v2165
        %v2312 = vunpack.c.l.b16 %v2166
        %v2313 = vunpack.c.h.b16 %v2166
        %v2314 = vunpack.c.l.b16 %v2167
        %v2315 = vunpack.c.h.b16 %v2167
        %v2316 = vunpack.c.l.b16 %v2168
        %v2317 = vunpack.c.h.b16 %v2168
        %v2318 = vunpack.c.l.b16 %v2169
        %v2319 = vunpack.c.h.b16 %v2169
        %v2320 = vunpack.c.l.b16 %v2170
        %v2321 = vunpack.c.h.b16 %v2170
        %v2322 = vunpack.c.l.b16 %v2171
        %v2323 = vunpack.c.h.b16 %v2171
        %v2324 = vunpack.c.l.b16 %v2172
        %v2325 = vunpack.c.h.b16 %v2172
        %v2326 = vunpack.c.l.b16 %v2173
        %v2327 = vunpack.c.h.b16 %v2173
        %v2328 = vunpack.c.l.b16 %v2174
        %v2329 = vunpack.c.h.b16 %v2174
        %v2330 = vunpack.c.l.b16 %v2175
        %v2331 = vunpack.c.h.b16 %v2175
        %v2332 = vunpack.c.l.b16 %v2176
        %v2333 = vunpack.c.h.b16 %v2176
        %v2334 = vunpack.c.l.b16 %v2177
        %v2335 = vunpack.c.h.b16 %v2177
        %v2336 = vunpack.c.l.b16 %v2178
        %v2337 = vunpack.c.h.b16 %v2178
        %v2338 = vunpack.c.l.b16 %v2179
        %v2339 = vunpack.c.h.b16 %v2179
        %v2340 = vunpack.c.l.b16 %v2180
        %v2341 = vunpack.c.h.b16 %v2180
        %v2342 = vunpack.c.l.b16 %v2181
        %v2343 = vunpack.c.h.b16 %v2181
        %v2344 = vunpack.c.l.b16 %v2182
        %v2345 = vunpack.c.h.b16 %v2182
        %v2346 = vunpack.c.l.b16 %v2183
        %v2347 = vunpack.c.h.b16 %v2183
        %v2348 = vunpack.c.l.b16 %v2184
        %v2349 = vunpack.c.h.b16 %v2184
        %v2350 = vunpack.c.l.b16 %v2185
        %v2351 = vunpack.c.h.b16 %v2185
        %v2352 = vunpack.c.l.b16 %v2186
        %v2353 = vunpack.c.h.b16 %v2186
        %v2354 = vunpack.c.l.b16 %v2187
        %v2355 = vunpack.c.h.b16 %v2187
        %v2356 = vunpack.c.l.b16 %v2188
        %v2357 = vunpack.c.h.b16 %v2188
        %v2358 = vunpack.c.l.b16 %v2189
        %v2359 = vunpack.c.h.b16 %v2189
        %v2360 = vunpack.c.l.b16 %v2190
        %v2361 = vunpack.c.h.b16 %v2190
        %v2362 = vunpack.c.l.b16 %v2191
        %v2363 = vunpack.c.h.b16 %v2191
        %v2364 = vunpack.c.l.b16 %v2192
        %v2365 = vunpack.c.h.b16 %v2192
        %v2366 = vunpack.c.l.b16 %v2193
        %v2367 = vunpack.c.h.b16 %v2193
        %v2368 = vunpack.c.l.b16 %v2194
        %v2369 = vunpack.c.h.b16 %v2194
        %v2370 = vunpack.c.l.b16 %v2195
        %v2371 = vunpack.c.h.b16 %v2195
        %v2372 = vpack.c.b16 %v2310, %v2308
        %v2373 = vpack.c.b16 %v2311, %v2309
        %v2374 = vpack.c.b16 %v2314, %v2312
        %v2375 = vpack.c.b16 %v2315, %v2313
        %v2376 = vpack.c.b16 %v2318, %v2316
        %v2377 = vpack.c.b16 %v2319, %v2317
        %v2378 = vpack.c.b16 %v2322, %v2320
        %v2379 = vpack.c.b16 %v2323, %v2321
        %v2380 = vpack.c.b16 %v2326, %v2324
        %v2381 = vpack.c.b16 %v2327, %v2325
        %v2382 = vpack.c.b16 %v2330, %v2328
        %v2383 = vpack.c.b16 %v2331, %v2329
        %v2384 = vpack.c.b16 %v2334, %v2332
        %v2385 = vpack.c.b16 %v2335, %v2333
        %v2386 = vpack.c.b16 %v2338, %v2336
        %v2387 = vpack.c.b16 %v2339, %v2337
        %v2388 = vpack.c.b16 %v2342, %v2340
        %v2389 = vpack.c.b16 %v2343, %v2341
        %v2390 = vpack.c.b16 %v2346, %v2344
        %v2391 = vpack.c.b16 %v2347, %v2345
        %v2392 = vpack.c.b16 %v2350, %v2348
        %v2393 = vpack.c.b16 %v2351, %v2349
        %v2394 = vpack.c.b16 %v2354, %v2352
        %v2395 = vpack.c.b16 %v2355, %v2353
        %v2396 = vpack.c.b16 %v2358, %v2356
        %v2397 = vpack.c.b16 %v2359, %v2357
        %v2398 = vpack.c.b16 %v2362, %v2360
        %v2399 = vpack.c.b16 %v2363, %v2361
        %v2400 = vpack.c.b16 %v2366, %v2364
        %v2401 = vpack.c.b16 %v2367, %v2365
        %v2402 = vpack.c.b16 %v2370, %v2368
        %v2403 = vpack.c.b16 %v2371, %v2369
        %2436 = vmatprep.subr.bf16.mxu0 %v2387
        %2437 = vmatpush1.bf16.msra.mxu0 %v2386
        %2438 = vmatprep.subr.bf16.mxu0 %v2385
        %2439 = vmatpush1.bf16.msra.mxu0 %v2384
        %2440 = vmatprep.subr.bf16.mxu0 %v2383
        %2441 = vmatpush1.bf16.msra.mxu0 %v2382
        %2442 = vmatprep.subr.bf16.mxu0 %v2381
        %2443 = vmatpush1.bf16.msra.mxu0 %v2380
        %2444 = vmatprep.subr.bf16.mxu0 %v2379
        %2445 = vmatpush1.bf16.msra.mxu0 %v2378
        %2446 = vmatprep.subr.bf16.mxu0 %v2377
        %2447 = vmatpush1.bf16.msra.mxu0 %v2376
        %2448 = vmatprep.subr.bf16.mxu0 %v2375
        %2449 = vmatpush1.bf16.msra.mxu0 %v2374
        %2450 = vmatprep.subr.bf16.mxu0 %v2373
        %2451 = vmatpush1.bf16.msra.mxu0 %v2372
        %2452 = vmatprep.subr.bf16.mxu0 %v2403
        %2453 = vmatpush2.bf16.msra.mxu0 %v2402
        %2454 = vmatprep.subr.bf16.mxu0 %v2401
        %2455 = vmatpush2.bf16.msra.mxu0 %v2400
        %2456 = vmatprep.subr.bf16.mxu0 %v2399
        %2457 = vmatpush2.bf16.msra.mxu0 %v2398
        %2458 = vmatprep.subr.bf16.mxu0 %v2397
        %2459 = vmatpush2.bf16.msra.mxu0 %v2396
        %2460 = vmatprep.subr.bf16.mxu0 %v2395
        %2461 = vmatpush2.bf16.msra.mxu0 %v2394
        %2462 = vmatprep.subr.bf16.mxu0 %v2393
        %2463 = vmatpush2.bf16.msra.mxu0 %v2392
        %2464 = vmatprep.subr.bf16.mxu0 %v2391
        %2465 = vmatpush2.bf16.msra.mxu0 %v2390
        %2466 = vmatprep.subr.bf16.mxu0 %v2389
        %2467 = vmatpush2.bf16.msra.mxu0 %v2388
        %2468 = vmatprep.mubr.bf16.mxu0 %v2245
        %2469 = vmatmul.mubr.bf16.gmra.mxu0 %v2244
        %v2470 = vpop.f32.mrf.mxu0
        %v2471 = vadd.f32 0.0, %v2470
        %v2472 = vpop.f32.mrf.mxu0
        %v2473 = vadd.f32 0.0, %v2472
        %v2474 = vpop.f32.mrf.mxu0
        %v2475 = vadd.f32 0.0, %v2474
        %v2476 = vpop.f32.mrf.mxu0
        %v2477 = vadd.f32 0.0, %v2476
        %2478 = vmatprep.mubr.bf16.mxu0 %v2247
        %2479 = vmatmul.mubr.bf16.gmra.mxu0 %v2246
        %v2480 = vpop.f32.mrf.mxu0
        %v2481 = vadd.f32 0.0, %v2480
        %v2482 = vpop.f32.mrf.mxu0
        %v2483 = vadd.f32 0.0, %v2482
        %v2484 = vpop.f32.mrf.mxu0
        %v2485 = vadd.f32 0.0, %v2484
        %v2486 = vpop.f32.mrf.mxu0
        %v2487 = vadd.f32 0.0, %v2486
        %2488 = vmatprep.mubr.bf16.mxu0 %v2249
        %2489 = vmatmul.mubr.bf16.gmra.mxu0 %v2248
        %v2490 = vpop.f32.mrf.mxu0
        %v2491 = vadd.f32 0.0, %v2490
        %v2492 = vpop.f32.mrf.mxu0
        %v2493 = vadd.f32 0.0, %v2492
        %v2494 = vpop.f32.mrf.mxu0
        %v2495 = vadd.f32 0.0, %v2494
        %v2496 = vpop.f32.mrf.mxu0
        %v2497 = vadd.f32 0.0, %v2496
        %2498 = vmatprep.mubr.bf16.mxu0 %v2251
        %2499 = vmatmul.mubr.bf16.gmra.mxu0 %v2250
        %v2500 = vpop.f32.mrf.mxu0
        %v2501 = vadd.f32 0.0, %v2500
        %v2502 = vpop.f32.mrf.mxu0
        %v2503 = vadd.f32 0.0, %v2502
        %v2504 = vpop.f32.mrf.mxu0
        %v2505 = vadd.f32 0.0, %v2504
        %v2506 = vpop.f32.mrf.mxu0
        %v2507 = vadd.f32 0.0, %v2506
        %2508 = vmatprep.mubr.bf16.mxu0 %v2253
        %2509 = vmatmul.mubr.bf16.gmra.mxu0 %v2252
        %v2510 = vpop.f32.mrf.mxu0
        %v2511 = vadd.f32 0.0, %v2510
        %v2512 = vpop.f32.mrf.mxu0
        %v2513 = vadd.f32 0.0, %v2512
        %v2514 = vpop.f32.mrf.mxu0
        %v2515 = vadd.f32 0.0, %v2514
        %v2516 = vpop.f32.mrf.mxu0
        %v2517 = vadd.f32 0.0, %v2516
        %2518 = vmatprep.mubr.bf16.mxu0 %v2255
        %2519 = vmatmul.mubr.bf16.gmra.mxu0 %v2254
        %v2520 = vpop.f32.mrf.mxu0
        %v2521 = vadd.f32 0.0, %v2520
        %v2522 = vpop.f32.mrf.mxu0
        %v2523 = vadd.f32 0.0, %v2522
        %v2524 = vpop.f32.mrf.mxu0
        %v2525 = vadd.f32 0.0, %v2524
        %v2526 = vpop.f32.mrf.mxu0
        %v2527 = vadd.f32 0.0, %v2526
        %2528 = vmatprep.mubr.bf16.mxu0 %v2257
        %2529 = vmatmul.mubr.bf16.gmra.mxu0 %v2256
        %v2530 = vpop.f32.mrf.mxu0
        %v2531 = vadd.f32 0.0, %v2530
        %v2532 = vpop.f32.mrf.mxu0
        %v2533 = vadd.f32 0.0, %v2532
        %v2534 = vpop.f32.mrf.mxu0
        %v2535 = vadd.f32 0.0, %v2534
        %v2536 = vpop.f32.mrf.mxu0
        %v2537 = vadd.f32 0.0, %v2536
        %2538 = vmatprep.mubr.bf16.mxu0 %v2259
        %2539 = vmatmul.mubr.bf16.gmra.mxu0 %v2258
        %v2540 = vpop.f32.mrf.mxu0
        %v2541 = vadd.f32 0.0, %v2540
        %v2542 = vpop.f32.mrf.mxu0
        %v2543 = vadd.f32 0.0, %v2542
        %v2544 = vpop.f32.mrf.mxu0
        %v2545 = vadd.f32 0.0, %v2544
        %v2546 = vpop.f32.mrf.mxu0
        %v2547 = vadd.f32 0.0, %v2546
        %2548 = vdwg.mxu0
        %v2581 = vunpack.c.l.b16 %v2116
        %v2582 = vunpack.c.h.b16 %v2116
        %v2583 = vunpack.c.l.b16 %v2117
        %v2584 = vunpack.c.h.b16 %v2117
        %v2585 = vunpack.c.l.b16 %v2118
        %v2586 = vunpack.c.h.b16 %v2118
        %v2587 = vunpack.c.l.b16 %v2119
        %v2588 = vunpack.c.h.b16 %v2119
        %v2589 = vunpack.c.l.b16 %v2120
        %v2590 = vunpack.c.h.b16 %v2120
        %v2591 = vunpack.c.l.b16 %v2121
        %v2592 = vunpack.c.h.b16 %v2121
        %v2593 = vunpack.c.l.b16 %v2122
        %v2594 = vunpack.c.h.b16 %v2122
        %v2595 = vunpack.c.l.b16 %v2123
        %v2596 = vunpack.c.h.b16 %v2123
        %v2597 = vunpack.c.l.b16 %v2124
        %v2598 = vunpack.c.h.b16 %v2124
        %v2599 = vunpack.c.l.b16 %v2125
        %v2600 = vunpack.c.h.b16 %v2125
        %v2601 = vunpack.c.l.b16 %v2126
        %v2602 = vunpack.c.h.b16 %v2126
        %v2603 = vunpack.c.l.b16 %v2127
        %v2604 = vunpack.c.h.b16 %v2127
        %v2605 = vunpack.c.l.b16 %v2128
        %v2606 = vunpack.c.h.b16 %v2128
        %v2607 = vunpack.c.l.b16 %v2129
        %v2608 = vunpack.c.h.b16 %v2129
        %v2609 = vunpack.c.l.b16 %v2130
        %v2610 = vunpack.c.h.b16 %v2130
        %v2611 = vunpack.c.l.b16 %v2131
        %v2612 = vunpack.c.h.b16 %v2131
        %v2613 = vunpack.c.l.b16 %v2132
        %v2614 = vunpack.c.h.b16 %v2132
        %v2615 = vunpack.c.l.b16 %v2133
        %v2616 = vunpack.c.h.b16 %v2133
        %v2617 = vunpack.c.l.b16 %v2134
        %v2618 = vunpack.c.h.b16 %v2134
        %v2619 = vunpack.c.l.b16 %v2135
        %v2620 = vunpack.c.h.b16 %v2135
        %v2621 = vunpack.c.l.b16 %v2136
        %v2622 = vunpack.c.h.b16 %v2136
        %v2623 = vunpack.c.l.b16 %v2137
        %v2624 = vunpack.c.h.b16 %v2137
        %v2625 = vunpack.c.l.b16 %v2138
        %v2626 = vunpack.c.h.b16 %v2138
        %v2627 = vunpack.c.l.b16 %v2139
        %v2628 = vunpack.c.h.b16 %v2139
        %v2629 = vunpack.c.l.b16 %v2140
        %v2630 = vunpack.c.h.b16 %v2140
        %v2631 = vunpack.c.l.b16 %v2141
        %v2632 = vunpack.c.h.b16 %v2141
        %v2633 = vunpack.c.l.b16 %v2142
        %v2634 = vunpack.c.h.b16 %v2142
        %v2635 = vunpack.c.l.b16 %v2143
        %v2636 = vunpack.c.h.b16 %v2143
        %v2637 = vunpack.c.l.b16 %v2144
        %v2638 = vunpack.c.h.b16 %v2144
        %v2639 = vunpack.c.l.b16 %v2145
        %v2640 = vunpack.c.h.b16 %v2145
        %v2641 = vunpack.c.l.b16 %v2146
        %v2642 = vunpack.c.h.b16 %v2146
        %v2643 = vunpack.c.l.b16 %v2147
        %v2644 = vunpack.c.h.b16 %v2147
        %v2645 = vpack.c.b16 %v2583, %v2581
        %v2646 = vpack.c.b16 %v2584, %v2582
        %v2647 = vpack.c.b16 %v2587, %v2585
        %v2648 = vpack.c.b16 %v2588, %v2586
        %v2649 = vpack.c.b16 %v2591, %v2589
        %v2650 = vpack.c.b16 %v2592, %v2590
        %v2651 = vpack.c.b16 %v2595, %v2593
        %v2652 = vpack.c.b16 %v2596, %v2594
        %v2653 = vpack.c.b16 %v2599, %v2597
        %v2654 = vpack.c.b16 %v2600, %v2598
        %v2655 = vpack.c.b16 %v2603, %v2601
        %v2656 = vpack.c.b16 %v2604, %v2602
        %v2657 = vpack.c.b16 %v2607, %v2605
        %v2658 = vpack.c.b16 %v2608, %v2606
        %v2659 = vpack.c.b16 %v2611, %v2609
        %v2660 = vpack.c.b16 %v2612, %v2610
        %v2661 = vpack.c.b16 %v2615, %v2613
        %v2662 = vpack.c.b16 %v2616, %v2614
        %v2663 = vpack.c.b16 %v2619, %v2617
        %v2664 = vpack.c.b16 %v2620, %v2618
        %v2665 = vpack.c.b16 %v2623, %v2621
        %v2666 = vpack.c.b16 %v2624, %v2622
        %v2667 = vpack.c.b16 %v2627, %v2625
        %v2668 = vpack.c.b16 %v2628, %v2626
        %v2669 = vpack.c.b16 %v2631, %v2629
        %v2670 = vpack.c.b16 %v2632, %v2630
        %v2671 = vpack.c.b16 %v2635, %v2633
        %v2672 = vpack.c.b16 %v2636, %v2634
        %v2673 = vpack.c.b16 %v2639, %v2637
        %v2674 = vpack.c.b16 %v2640, %v2638
        %v2675 = vpack.c.b16 %v2643, %v2641
        %v2676 = vpack.c.b16 %v2644, %v2642
        %2709 = vmatprep.subr.bf16.mxu0 %v2660
        %2710 = vmatpush1.bf16.msra.mxu0 %v2659
        %2711 = vmatprep.subr.bf16.mxu0 %v2658
        %2712 = vmatpush1.bf16.msra.mxu0 %v2657
        %2713 = vmatprep.subr.bf16.mxu0 %v2656
        %2714 = vmatpush1.bf16.msra.mxu0 %v2655
        %2715 = vmatprep.subr.bf16.mxu0 %v2654
        %2716 = vmatpush1.bf16.msra.mxu0 %v2653
        %2717 = vmatprep.subr.bf16.mxu0 %v2652
        %2718 = vmatpush1.bf16.msra.mxu0 %v2651
        %2719 = vmatprep.subr.bf16.mxu0 %v2650
        %2720 = vmatpush1.bf16.msra.mxu0 %v2649
        %2721 = vmatprep.subr.bf16.mxu0 %v2648
        %2722 = vmatpush1.bf16.msra.mxu0 %v2647
        %2723 = vmatprep.subr.bf16.mxu0 %v2646
        %2724 = vmatpush1.bf16.msra.mxu0 %v2645
        %2725 = vmatprep.subr.bf16.mxu0 %v2676
        %2726 = vmatpush2.bf16.msra.mxu0 %v2675
        %2727 = vmatprep.subr.bf16.mxu0 %v2674
        %2728 = vmatpush2.bf16.msra.mxu0 %v2673
        %2729 = vmatprep.subr.bf16.mxu0 %v2672
        %2730 = vmatpush2.bf16.msra.mxu0 %v2671
        %2731 = vmatprep.subr.bf16.mxu0 %v2670
        %2732 = vmatpush2.bf16.msra.mxu0 %v2669
        %2733 = vmatprep.subr.bf16.mxu0 %v2668
        %2734 = vmatpush2.bf16.msra.mxu0 %v2667
        %2735 = vmatprep.subr.bf16.mxu0 %v2666
        %2736 = vmatpush2.bf16.msra.mxu0 %v2665
        %2737 = vmatprep.subr.bf16.mxu0 %v2664
        %2738 = vmatpush2.bf16.msra.mxu0 %v2663
        %2739 = vmatprep.subr.bf16.mxu0 %v2662
        %2740 = vmatpush2.bf16.msra.mxu0 %v2661
        %2741 = vmatprep.mubr.bf16.mxu0 %v1753
        %2742 = vmatmul.mubr.bf16.gmra.mxu0 %v1752
        %v2743 = vpop.f32.mrf.mxu0
        %v2744 = vadd.f32 %v2471, %v2743
        %v2745 = vpop.f32.mrf.mxu0
        %v2746 = vadd.f32 %v2473, %v2745
        %v2747 = vpop.f32.mrf.mxu0
        %v2748 = vadd.f32 %v2475, %v2747
        %v2749 = vpop.f32.mrf.mxu0
        %v2750 = vadd.f32 %v2477, %v2749
        %2751 = vmatprep.mubr.bf16.mxu0 %v1755
        %2752 = vmatmul.mubr.bf16.gmra.mxu0 %v1754
        %v2753 = vpop.f32.mrf.mxu0
        %v2754 = vadd.f32 %v2481, %v2753
        %v2755 = vpop.f32.mrf.mxu0
        %v2756 = vadd.f32 %v2483, %v2755
        %v2757 = vpop.f32.mrf.mxu0
        %v2758 = vadd.f32 %v2485, %v2757
        %v2759 = vpop.f32.mrf.mxu0
        %v2760 = vadd.f32 %v2487, %v2759
        %2761 = vmatprep.mubr.bf16.mxu0 %v1757
        %2762 = vmatmul.mubr.bf16.gmra.mxu0 %v1756
        %v2763 = vpop.f32.mrf.mxu0
        %v2764 = vadd.f32 %v2491, %v2763
        %v2765 = vpop.f32.mrf.mxu0
        %v2766 = vadd.f32 %v2493, %v2765
        %v2767 = vpop.f32.mrf.mxu0
        %v2768 = vadd.f32 %v2495, %v2767
        %v2769 = vpop.f32.mrf.mxu0
        %v2770 = vadd.f32 %v2497, %v2769
        %2771 = vmatprep.mubr.bf16.mxu0 %v1759
        %2772 = vmatmul.mubr.bf16.gmra.mxu0 %v1758
        %v2773 = vpop.f32.mrf.mxu0
        %v2774 = vadd.f32 %v2501, %v2773
        %v2775 = vpop.f32.mrf.mxu0
        %v2776 = vadd.f32 %v2503, %v2775
        %v2777 = vpop.f32.mrf.mxu0
        %v2778 = vadd.f32 %v2505, %v2777
        %v2779 = vpop.f32.mrf.mxu0
        %v2780 = vadd.f32 %v2507, %v2779
        %2781 = vmatprep.mubr.bf16.mxu0 %v1761
        %2782 = vmatmul.mubr.bf16.gmra.mxu0 %v1760
        %v2783 = vpop.f32.mrf.mxu0
        %v2784 = vadd.f32 %v2511, %v2783
        %v2785 = vpop.f32.mrf.mxu0
        %v2786 = vadd.f32 %v2513, %v2785
        %v2787 = vpop.f32.mrf.mxu0
        %v2788 = vadd.f32 %v2515, %v2787
        %v2789 = vpop.f32.mrf.mxu0
        %v2790 = vadd.f32 %v2517, %v2789
        %2791 = vmatprep.mubr.bf16.mxu0 %v1763
        %2792 = vmatmul.mubr.bf16.gmra.mxu0 %v1762
        %v2793 = vpop.f32.mrf.mxu0
        %v2794 = vadd.f32 %v2521, %v2793
        %v2795 = vpop.f32.mrf.mxu0
        %v2796 = vadd.f32 %v2523, %v2795
        %v2797 = vpop.f32.mrf.mxu0
        %v2798 = vadd.f32 %v2525, %v2797
        %v2799 = vpop.f32.mrf.mxu0
        %v2800 = vadd.f32 %v2527, %v2799
        %2801 = vmatprep.mubr.bf16.mxu0 %v1765
        %2802 = vmatmul.mubr.bf16.gmra.mxu0 %v1764
        %v2803 = vpop.f32.mrf.mxu0
        %v2804 = vadd.f32 %v2531, %v2803
        %v2805 = vpop.f32.mrf.mxu0
        %v2806 = vadd.f32 %v2533, %v2805
        %v2807 = vpop.f32.mrf.mxu0
        %v2808 = vadd.f32 %v2535, %v2807
        %v2809 = vpop.f32.mrf.mxu0
        %v2810 = vadd.f32 %v2537, %v2809
        %2811 = vmatprep.mubr.bf16.mxu0 %v1767
        %2812 = vmatmul.mubr.bf16.gmra.mxu0 %v1766
        %v2813 = vpop.f32.mrf.mxu0
        %v2814 = vadd.f32 %v2541, %v2813
        %v2815 = vpop.f32.mrf.mxu0
        %v2816 = vadd.f32 %v2543, %v2815
        %v2817 = vpop.f32.mrf.mxu0
        %v2818 = vadd.f32 %v2545, %v2817
        %v2819 = vpop.f32.mrf.mxu0
        %v2820 = vadd.f32 %v2547, %v2819
        %2821 = vdwg.mxu0
        %v2822 = vld [vmem:[#allocation2] sm:$0xee]
        %v2823 = vld [vmem:[#allocation2 + $0x8] sm:$0xff]
        %v2824 = vld [vmem:[#allocation2 + $0x10] sm:$0x11]
        %v2825 = vld [vmem:[#allocation2 + $0x18] sm:$0xee]
        %v2826 = vld [vmem:[#allocation2 + $0x20] sm:$0xff]
        %v2827 = vld [vmem:[#allocation2 + $0x28] sm:$0x11]
        %v2828 = vld [vmem:[#allocation2 + $0x30] sm:$0xee]
        %v2829 = vld [vmem:[#allocation2 + $0x38] sm:$0xff]
        %v2830 = vld [vmem:[#allocation2 + $0x40] sm:$0x11]
        %v2831 = vld [vmem:[#allocation2 + $0x48] sm:$0xee]
        %v2832 = vld [vmem:[#allocation2 + $0x50] sm:$0xff]
        %v2833 = vld [vmem:[#allocation2 + $0x58] sm:$0x11]
        %v2834 = vld [vmem:[#allocation2 + $0x60] sm:$0xee]
        %v2835 = vld [vmem:[#allocation2 + $0x68] sm:$0xff]
        %v2836 = vld [vmem:[#allocation2 + $0x70] sm:$0x11]
        %v2837 = vld [vmem:[#allocation2 + $0x78] sm:$0xee]
        %v2838 = vld [vmem:[#allocation2 + $0x80] sm:$0xff]
        %v2839 = vld [vmem:[#allocation2 + $0x88] sm:$0x11]
        %v2840 = vld [vmem:[#allocation2 + $0x90] sm:$0xee]
        %v2841 = vld [vmem:[#allocation2 + $0x98] sm:$0xff]
        %v2842 = vld [vmem:[#allocation2 + $0xa0] sm:$0x11]
        %v2843 = vld [vmem:[#allocation2 + $0xa8] sm:$0xee]
        %v2844 = vld [vmem:[#allocation2 + $0xb0] sm:$0xff]
        %v2845 = vld [vmem:[#allocation2 + $0xb8] sm:$0x11]
        %vm2870 = vcmask 1042432
        %vm2871 = vcmask 1046532
        %vm2872 = vmor %vm2870, %vm2871
        %v2873 = vrot.slane %v2822, 5
        %v2874 = vrot.slane %v2873, 4
        %v2875 = vrot.slane %v2823, 5
        %v2876 = vsel %vm2872, %v2874, %v2875
        %v2877 = vrot.slane %v2875, 4
        %v2878 = vrot.slane %v2824, 5
        %v2879 = vsel %vm2872, %v2877, %v2878
        %v2880 = vrot.slane %v2825, 5
        %v2881 = vrot.slane %v2880, 4
        %v2882 = vrot.slane %v2826, 5
        %v2883 = vsel %vm2872, %v2881, %v2882
        %v2884 = vrot.slane %v2882, 4
        %v2885 = vrot.slane %v2827, 5
        %v2886 = vsel %vm2872, %v2884, %v2885
        %v2887 = vrot.slane %v2828, 5
        %v2888 = vrot.slane %v2887, 4
        %v2889 = vrot.slane %v2829, 5
        %v2890 = vsel %vm2872, %v2888, %v2889
        %v2891 = vrot.slane %v2889, 4
        %v2892 = vrot.slane %v2830, 5
        %v2893 = vsel %vm2872, %v2891, %v2892
        %v2894 = vrot.slane %v2831, 5
        %v2895 = vrot.slane %v2894, 4
        %v2896 = vrot.slane %v2832, 5
        %v2897 = vsel %vm2872, %v2895, %v2896
        %v2898 = vrot.slane %v2896, 4
        %v2899 = vrot.slane %v2833, 5
        %v2900 = vsel %vm2872, %v2898, %v2899
        %v2901 = vrot.slane %v2834, 5
        %v2902 = vrot.slane %v2901, 4
        %v2903 = vrot.slane %v2835, 5
        %v2904 = vsel %vm2872, %v2902, %v2903
        %v2905 = vrot.slane %v2903, 4
        %v2906 = vrot.slane %v2836, 5
        %v2907 = vsel %vm2872, %v2905, %v2906
        %v2908 = vrot.slane %v2837, 5
        %v2909 = vrot.slane %v2908, 4
        %v2910 = vrot.slane %v2838, 5
        %v2911 = vsel %vm2872, %v2909, %v2910
        %v2912 = vrot.slane %v2910, 4
        %v2913 = vrot.slane %v2839, 5
        %v2914 = vsel %vm2872, %v2912, %v2913
        %v2915 = vrot.slane %v2840, 5
        %v2916 = vrot.slane %v2915, 4
        %v2917 = vrot.slane %v2841, 5
        %v2918 = vsel %vm2872, %v2916, %v2917
        %v2919 = vrot.slane %v2917, 4
        %v2920 = vrot.slane %v2842, 5
        %v2921 = vsel %vm2872, %v2919, %v2920
        %v2922 = vrot.slane %v2843, 5
        %v2923 = vrot.slane %v2922, 4
        %v2924 = vrot.slane %v2844, 5
        %v2925 = vsel %vm2872, %v2923, %v2924
        %v2926 = vrot.slane %v2924, 4
        %v2927 = vrot.slane %v2845, 5
        %v2928 = vsel %vm2872, %v2926, %v2927
        %s2929 = scalar_lea.vmem [#allocation3], 512
        %v2930 = vld [vmem:[%s2929] sm:$0xff]
        %v2931 = vld [vmem:[%s2929 + $0x8] sm:$0xff]
        %v2932 = vld [vmem:[%s2929 + $0x10] sm:$0xff]
        %v2933 = vld [vmem:[%s2929 + $0x18] sm:$0xff]
        %v2934 = vld [vmem:[%s2929 + $0x20] sm:$0xff]
        %v2935 = vld [vmem:[%s2929 + $0x28] sm:$0xff]
        %v2936 = vld [vmem:[%s2929 + $0x30] sm:$0xff]
        %v2937 = vld [vmem:[%s2929 + $0x38] sm:$0xff]
        %v2938 = vld [vmem:[%s2929 + $0x40] sm:$0xff]
        %v2939 = vld [vmem:[%s2929 + $0x48] sm:$0xff]
        %v2940 = vld [vmem:[%s2929 + $0x50] sm:$0xff]
        %v2941 = vld [vmem:[%s2929 + $0x58] sm:$0xff]
        %v2942 = vld [vmem:[%s2929 + $0x60] sm:$0xff]
        %v2943 = vld [vmem:[%s2929 + $0x68] sm:$0xff]
        %v2944 = vld [vmem:[%s2929 + $0x70] sm:$0xff]
        %v2945 = vld [vmem:[%s2929 + $0x78] sm:$0xff]
        %v2946 = vld [vmem:[%s2929 + $0x80] sm:$0xff]
        %v2947 = vld [vmem:[%s2929 + $0x88] sm:$0xff]
        %v2948 = vld [vmem:[%s2929 + $0x90] sm:$0xff]
        %v2949 = vld [vmem:[%s2929 + $0x98] sm:$0xff]
        %v2950 = vld [vmem:[%s2929 + $0xa0] sm:$0xff]
        %v2951 = vld [vmem:[%s2929 + $0xa8] sm:$0xff]
        %v2952 = vld [vmem:[%s2929 + $0xb0] sm:$0xff]
        %v2953 = vld [vmem:[%s2929 + $0xb8] sm:$0xff]
        %v2954 = vld [vmem:[%s2929 + $0xc0] sm:$0xff]
        %v2955 = vld [vmem:[%s2929 + $0xc8] sm:$0xff]
        %v2956 = vld [vmem:[%s2929 + $0xd0] sm:$0xff]
        %v2957 = vld [vmem:[%s2929 + $0xd8] sm:$0xff]
        %v2958 = vld [vmem:[%s2929 + $0xe0] sm:$0xff]
        %v2959 = vld [vmem:[%s2929 + $0xe8] sm:$0xff]
        %v2960 = vld [vmem:[%s2929 + $0xf0] sm:$0xff]
        %v2961 = vld [vmem:[%s2929 + $0xf8] sm:$0xff]
        %v2962 = vunpack.c.l.b16 %v2876
        %v2963 = vunpack.c.h.b16 %v2876
        %v2964 = vunpack.c.l.b16 %v2879
        %v2965 = vunpack.c.h.b16 %v2879
        %v2966 = vunpack.c.l.b16 %v2883
        %v2967 = vunpack.c.h.b16 %v2883
        %v2968 = vunpack.c.l.b16 %v2886
        %v2969 = vunpack.c.h.b16 %v2886
        %v2970 = vunpack.c.l.b16 %v2890
        %v2971 = vunpack.c.h.b16 %v2890
        %v2972 = vunpack.c.l.b16 %v2893
        %v2973 = vunpack.c.h.b16 %v2893
        %v2974 = vunpack.c.l.b16 %v2897
        %v2975 = vunpack.c.h.b16 %v2897
        %v2976 = vunpack.c.l.b16 %v2900
        %v2977 = vunpack.c.h.b16 %v2900
        %v2978 = vunpack.c.l.b16 %v2904
        %v2979 = vunpack.c.h.b16 %v2904
        %v2980 = vunpack.c.l.b16 %v2907
        %v2981 = vunpack.c.h.b16 %v2907
        %v2982 = vunpack.c.l.b16 %v2911
        %v2983 = vunpack.c.h.b16 %v2911
        %v2984 = vunpack.c.l.b16 %v2914
        %v2985 = vunpack.c.h.b16 %v2914
        %v2986 = vunpack.c.l.b16 %v2918
        %v2987 = vunpack.c.h.b16 %v2918
        %v2988 = vunpack.c.l.b16 %v2921
        %v2989 = vunpack.c.h.b16 %v2921
        %v2990 = vunpack.c.l.b16 %v2925
        %v2991 = vunpack.c.h.b16 %v2925
        %v2992 = vunpack.c.l.b16 %v2928
        %v2993 = vunpack.c.h.b16 %v2928
        %v2994 = vpack.c.b16 %v2964, %v2962
        %v2995 = vpack.c.b16 %v2965, %v2963
        %v2996 = vpack.c.b16 %v2968, %v2966
        %v2997 = vpack.c.b16 %v2969, %v2967
        %v2998 = vpack.c.b16 %v2972, %v2970
        %v2999 = vpack.c.b16 %v2973, %v2971
        %v3000 = vpack.c.b16 %v2976, %v2974
        %v3001 = vpack.c.b16 %v2977, %v2975
        %v3002 = vpack.c.b16 %v2980, %v2978
        %v3003 = vpack.c.b16 %v2981, %v2979
        %v3004 = vpack.c.b16 %v2984, %v2982
        %v3005 = vpack.c.b16 %v2985, %v2983
        %v3006 = vpack.c.b16 %v2988, %v2986
        %v3007 = vpack.c.b16 %v2989, %v2987
        %v3008 = vpack.c.b16 %v2992, %v2990
        %v3009 = vpack.c.b16 %v2993, %v2991
        %v3058 = vunpack.c.l.b16 %v2930
        %v3059 = vunpack.c.h.b16 %v2930
        %v3060 = vunpack.c.l.b16 %v2931
        %v3061 = vunpack.c.h.b16 %v2931
        %v3062 = vunpack.c.l.b16 %v2932
        %v3063 = vunpack.c.h.b16 %v2932
        %v3064 = vunpack.c.l.b16 %v2933
        %v3065 = vunpack.c.h.b16 %v2933
        %v3066 = vunpack.c.l.b16 %v2934
        %v3067 = vunpack.c.h.b16 %v2934
        %v3068 = vunpack.c.l.b16 %v2935
        %v3069 = vunpack.c.h.b16 %v2935
        %v3070 = vunpack.c.l.b16 %v2936
        %v3071 = vunpack.c.h.b16 %v2936
        %v3072 = vunpack.c.l.b16 %v2937
        %v3073 = vunpack.c.h.b16 %v2937
        %v3074 = vunpack.c.l.b16 %v2938
        %v3075 = vunpack.c.h.b16 %v2938
        %v3076 = vunpack.c.l.b16 %v2939
        %v3077 = vunpack.c.h.b16 %v2939
        %v3078 = vunpack.c.l.b16 %v2940
        %v3079 = vunpack.c.h.b16 %v2940
        %v3080 = vunpack.c.l.b16 %v2941
        %v3081 = vunpack.c.h.b16 %v2941
        %v3082 = vunpack.c.l.b16 %v2942
        %v3083 = vunpack.c.h.b16 %v2942
        %v3084 = vunpack.c.l.b16 %v2943
        %v3085 = vunpack.c.h.b16 %v2943
        %v3086 = vunpack.c.l.b16 %v2944
        %v3087 = vunpack.c.h.b16 %v2944
        %v3088 = vunpack.c.l.b16 %v2945
        %v3089 = vunpack.c.h.b16 %v2945
        %v3090 = vunpack.c.l.b16 %v2946
        %v3091 = vunpack.c.h.b16 %v2946
        %v3092 = vunpack.c.l.b16 %v2947
        %v3093 = vunpack.c.h.b16 %v2947
        %v3094 = vunpack.c.l.b16 %v2948
        %v3095 = vunpack.c.h.b16 %v2948
        %v3096 = vunpack.c.l.b16 %v2949
        %v3097 = vunpack.c.h.b16 %v2949
        %v3098 = vunpack.c.l.b16 %v2950
        %v3099 = vunpack.c.h.b16 %v2950
        %v3100 = vunpack.c.l.b16 %v2951
        %v3101 = vunpack.c.h.b16 %v2951
        %v3102 = vunpack.c.l.b16 %v2952
        %v3103 = vunpack.c.h.b16 %v2952
        %v3104 = vunpack.c.l.b16 %v2953
        %v3105 = vunpack.c.h.b16 %v2953
        %v3106 = vunpack.c.l.b16 %v2954
        %v3107 = vunpack.c.h.b16 %v2954
        %v3108 = vunpack.c.l.b16 %v2955
        %v3109 = vunpack.c.h.b16 %v2955
        %v3110 = vunpack.c.l.b16 %v2956
        %v3111 = vunpack.c.h.b16 %v2956
        %v3112 = vunpack.c.l.b16 %v2957
        %v3113 = vunpack.c.h.b16 %v2957
        %v3114 = vunpack.c.l.b16 %v2958
        %v3115 = vunpack.c.h.b16 %v2958
        %v3116 = vunpack.c.l.b16 %v2959
        %v3117 = vunpack.c.h.b16 %v2959
        %v3118 = vunpack.c.l.b16 %v2960
        %v3119 = vunpack.c.h.b16 %v2960
        %v3120 = vunpack.c.l.b16 %v2961
        %v3121 = vunpack.c.h.b16 %v2961
        %v3122 = vpack.c.b16 %v3060, %v3058
        %v3123 = vpack.c.b16 %v3061, %v3059
        %v3124 = vpack.c.b16 %v3064, %v3062
        %v3125 = vpack.c.b16 %v3065, %v3063
        %v3126 = vpack.c.b16 %v3068, %v3066
        %v3127 = vpack.c.b16 %v3069, %v3067
        %v3128 = vpack.c.b16 %v3072, %v3070
        %v3129 = vpack.c.b16 %v3073, %v3071
        %v3130 = vpack.c.b16 %v3076, %v3074
        %v3131 = vpack.c.b16 %v3077, %v3075
        %v3132 = vpack.c.b16 %v3080, %v3078
        %v3133 = vpack.c.b16 %v3081, %v3079
        %v3134 = vpack.c.b16 %v3084, %v3082
        %v3135 = vpack.c.b16 %v3085, %v3083
        %v3136 = vpack.c.b16 %v3088, %v3086
        %v3137 = vpack.c.b16 %v3089, %v3087
        %v3138 = vpack.c.b16 %v3092, %v3090
        %v3139 = vpack.c.b16 %v3093, %v3091
        %v3140 = vpack.c.b16 %v3096, %v3094
        %v3141 = vpack.c.b16 %v3097, %v3095
        %v3142 = vpack.c.b16 %v3100, %v3098
        %v3143 = vpack.c.b16 %v3101, %v3099
        %v3144 = vpack.c.b16 %v3104, %v3102
        %v3145 = vpack.c.b16 %v3105, %v3103
        %v3146 = vpack.c.b16 %v3108, %v3106
        %v3147 = vpack.c.b16 %v3109, %v3107
        %v3148 = vpack.c.b16 %v3112, %v3110
        %v3149 = vpack.c.b16 %v3113, %v3111
        %v3150 = vpack.c.b16 %v3116, %v3114
        %v3151 = vpack.c.b16 %v3117, %v3115
        %v3152 = vpack.c.b16 %v3120, %v3118
        %v3153 = vpack.c.b16 %v3121, %v3119
        %3186 = vmatprep.subr.bf16.mxu0 %v3137
        %3187 = vmatpush1.bf16.msra.mxu0 %v3136
        %3188 = vmatprep.subr.bf16.mxu0 %v3135
        %3189 = vmatpush1.bf16.msra.mxu0 %v3134
        %3190 = vmatprep.subr.bf16.mxu0 %v3133
        %3191 = vmatpush1.bf16.msra.mxu0 %v3132
        %3192 = vmatprep.subr.bf16.mxu0 %v3131
        %3193 = vmatpush1.bf16.msra.mxu0 %v3130
        %3194 = vmatprep.subr.bf16.mxu0 %v3129
        %3195 = vmatpush1.bf16.msra.mxu0 %v3128
        %3196 = vmatprep.subr.bf16.mxu0 %v3127
        %3197 = vmatpush1.bf16.msra.mxu0 %v3126
        %3198 = vmatprep.subr.bf16.mxu0 %v3125
        %3199 = vmatpush1.bf16.msra.mxu0 %v3124
        %3200 = vmatprep.subr.bf16.mxu0 %v3123
        %3201 = vmatpush1.bf16.msra.mxu0 %v3122
        %3202 = vmatprep.subr.bf16.mxu0 %v3153
        %3203 = vmatpush2.bf16.msra.mxu0 %v3152
        %3204 = vmatprep.subr.bf16.mxu0 %v3151
        %3205 = vmatpush2.bf16.msra.mxu0 %v3150
        %3206 = vmatprep.subr.bf16.mxu0 %v3149
        %3207 = vmatpush2.bf16.msra.mxu0 %v3148
        %3208 = vmatprep.subr.bf16.mxu0 %v3147
        %3209 = vmatpush2.bf16.msra.mxu0 %v3146
        %3210 = vmatprep.subr.bf16.mxu0 %v3145
        %3211 = vmatpush2.bf16.msra.mxu0 %v3144
        %3212 = vmatprep.subr.bf16.mxu0 %v3143
        %3213 = vmatpush2.bf16.msra.mxu0 %v3142
        %3214 = vmatprep.subr.bf16.mxu0 %v3141
        %3215 = vmatpush2.bf16.msra.mxu0 %v3140
        %3216 = vmatprep.subr.bf16.mxu0 %v3139
        %3217 = vmatpush2.bf16.msra.mxu0 %v3138
        %3218 = vmatprep.mubr.bf16.mxu0 %v2995
        %3219 = vmatmul.mubr.bf16.gmra.mxu0 %v2994
        %v3220 = vpop.f32.mrf.mxu0
        %v3221 = vadd.f32 0.0, %v3220
        %v3222 = vpop.f32.mrf.mxu0
        %v3223 = vadd.f32 0.0, %v3222
        %v3224 = vpop.f32.mrf.mxu0
        %v3225 = vadd.f32 0.0, %v3224
        %v3226 = vpop.f32.mrf.mxu0
        %v3227 = vadd.f32 0.0, %v3226
        %3228 = vmatprep.mubr.bf16.mxu0 %v2997
        %3229 = vmatmul.mubr.bf16.gmra.mxu0 %v2996
        %v3230 = vpop.f32.mrf.mxu0
        %v3231 = vadd.f32 0.0, %v3230
        %v3232 = vpop.f32.mrf.mxu0
        %v3233 = vadd.f32 0.0, %v3232
        %v3234 = vpop.f32.mrf.mxu0
        %v3235 = vadd.f32 0.0, %v3234
        %v3236 = vpop.f32.mrf.mxu0
        %v3237 = vadd.f32 0.0, %v3236
        %3238 = vmatprep.mubr.bf16.mxu0 %v2999
        %3239 = vmatmul.mubr.bf16.gmra.mxu0 %v2998
        %v3240 = vpop.f32.mrf.mxu0
        %v3241 = vadd.f32 0.0, %v3240
        %v3242 = vpop.f32.mrf.mxu0
        %v3243 = vadd.f32 0.0, %v3242
        %v3244 = vpop.f32.mrf.mxu0
        %v3245 = vadd.f32 0.0, %v3244
        %v3246 = vpop.f32.mrf.mxu0
        %v3247 = vadd.f32 0.0, %v3246
        %3248 = vmatprep.mubr.bf16.mxu0 %v3001
        %3249 = vmatmul.mubr.bf16.gmra.mxu0 %v3000
        %v3250 = vpop.f32.mrf.mxu0
        %v3251 = vadd.f32 0.0, %v3250
        %v3252 = vpop.f32.mrf.mxu0
        %v3253 = vadd.f32 0.0, %v3252
        %v3254 = vpop.f32.mrf.mxu0
        %v3255 = vadd.f32 0.0, %v3254
        %v3256 = vpop.f32.mrf.mxu0
        %v3257 = vadd.f32 0.0, %v3256
        %3258 = vmatprep.mubr.bf16.mxu0 %v3003
        %3259 = vmatmul.mubr.bf16.gmra.mxu0 %v3002
        %v3260 = vpop.f32.mrf.mxu0
        %v3261 = vadd.f32 0.0, %v3260
        %v3262 = vpop.f32.mrf.mxu0
        %v3263 = vadd.f32 0.0, %v3262
        %v3264 = vpop.f32.mrf.mxu0
        %v3265 = vadd.f32 0.0, %v3264
        %v3266 = vpop.f32.mrf.mxu0
        %v3267 = vadd.f32 0.0, %v3266
        %3268 = vmatprep.mubr.bf16.mxu0 %v3005
        %3269 = vmatmul.mubr.bf16.gmra.mxu0 %v3004
        %v3270 = vpop.f32.mrf.mxu0
        %v3271 = vadd.f32 0.0, %v3270
        %v3272 = vpop.f32.mrf.mxu0
        %v3273 = vadd.f32 0.0, %v3272
        %v3274 = vpop.f32.mrf.mxu0
        %v3275 = vadd.f32 0.0, %v3274
        %v3276 = vpop.f32.mrf.mxu0
        %v3277 = vadd.f32 0.0, %v3276
        %3278 = vmatprep.mubr.bf16.mxu0 %v3007
        %3279 = vmatmul.mubr.bf16.gmra.mxu0 %v3006
        %v3280 = vpop.f32.mrf.mxu0
        %v3281 = vadd.f32 0.0, %v3280
        %v3282 = vpop.f32.mrf.mxu0
        %v3283 = vadd.f32 0.0, %v3282
        %v3284 = vpop.f32.mrf.mxu0
        %v3285 = vadd.f32 0.0, %v3284
        %v3286 = vpop.f32.mrf.mxu0
        %v3287 = vadd.f32 0.0, %v3286
        %3288 = vmatprep.mubr.bf16.mxu0 %v3009
        %3289 = vmatmul.mubr.bf16.gmra.mxu0 %v3008
        %v3290 = vpop.f32.mrf.mxu0
        %v3291 = vadd.f32 0.0, %v3290
        %v3292 = vpop.f32.mrf.mxu0
        %v3293 = vadd.f32 0.0, %v3292
        %v3294 = vpop.f32.mrf.mxu0
        %v3295 = vadd.f32 0.0, %v3294
        %v3296 = vpop.f32.mrf.mxu0
        %v3297 = vadd.f32 0.0, %v3296
        %3298 = vdwg.mxu0
        %v3299 = vadd.f32 %v2744, %v3221
        %v3300 = vadd.f32 %v2746, %v3223
        %v3301 = vadd.f32 %v2748, %v3225
        %v3302 = vadd.f32 %v2750, %v3227
        %v3303 = vadd.f32 %v2754, %v3231
        %v3304 = vadd.f32 %v2756, %v3233
        %v3305 = vadd.f32 %v2758, %v3235
        %v3306 = vadd.f32 %v2760, %v3237
        %v3307 = vadd.f32 %v2764, %v3241
        %v3308 = vadd.f32 %v2766, %v3243
        %v3309 = vadd.f32 %v2768, %v3245
        %v3310 = vadd.f32 %v2770, %v3247
        %v3311 = vadd.f32 %v2774, %v3251
        %v3312 = vadd.f32 %v2776, %v3253
        %v3313 = vadd.f32 %v2778, %v3255
        %v3314 = vadd.f32 %v2780, %v3257
        %v3315 = vadd.f32 %v2784, %v3261
        %v3316 = vadd.f32 %v2786, %v3263
        %v3317 = vadd.f32 %v2788, %v3265
        %v3318 = vadd.f32 %v2790, %v3267
        %v3319 = vadd.f32 %v2794, %v3271
        %v3320 = vadd.f32 %v2796, %v3273
        %v3321 = vadd.f32 %v2798, %v3275
        %v3322 = vadd.f32 %v2800, %v3277
        %v3323 = vadd.f32 %v2804, %v3281
        %v3324 = vadd.f32 %v2806, %v3283
        %v3325 = vadd.f32 %v2808, %v3285
        %v3326 = vadd.f32 %v2810, %v3287
        %v3327 = vadd.f32 %v2814, %v3291
        %v3328 = vadd.f32 %v2816, %v3293
        %v3329 = vadd.f32 %v2818, %v3295
        %v3330 = vadd.f32 %v2820, %v3297
        %v3331 = vld [vmem:[%s241] sm:$0xfe]
        %v3332 = vld [vmem:[%s241 + $0x8] sm:$0xfe]
        %v3333 = vld [vmem:[%s241 + $0x10] sm:$0xff]
        %v3334 = vld [vmem:[%s241 + $0x18] sm:$0xff]
        %v3335 = vld [vmem:[%s241 + $0x20] sm:$0x1]
        %v3336 = vld [vmem:[%s241 + $0x28] sm:$0x1]
        %v3337 = vld [vmem:[%s241 + $0x30] sm:$0xfe]
        %v3338 = vld [vmem:[%s241 + $0x38] sm:$0xfe]
        %v3339 = vld [vmem:[%s241 + $0x40] sm:$0xff]
        %v3340 = vld [vmem:[%s241 + $0x48] sm:$0xff]
        %v3341 = vld [vmem:[%s241 + $0x50] sm:$0x1]
        %v3342 = vld [vmem:[%s241 + $0x58] sm:$0x1]
        %v3343 = vld [vmem:[%s241 + $0x60] sm:$0xfe]
        %v3344 = vld [vmem:[%s241 + $0x68] sm:$0xfe]
        %v3345 = vld [vmem:[%s241 + $0x70] sm:$0xff]
        %v3346 = vld [vmem:[%s241 + $0x78] sm:$0xff]
        %v3347 = vld [vmem:[%s241 + $0x80] sm:$0x1]
        %v3348 = vld [vmem:[%s241 + $0x88] sm:$0x1]
        %v3349 = vld [vmem:[%s241 + $0x90] sm:$0xfe]
        %v3350 = vld [vmem:[%s241 + $0x98] sm:$0xfe]
        %v3351 = vld [vmem:[%s241 + $0xa0] sm:$0xff]
        %v3352 = vld [vmem:[%s241 + $0xa8] sm:$0xff]
        %v3353 = vld [vmem:[%s241 + $0xb0] sm:$0x1]
        %v3354 = vld [vmem:[%s241 + $0xb8] sm:$0x1]
        %v3355 = vld [vmem:[%s241 + $0xc0] sm:$0xfe]
        %v3356 = vld [vmem:[%s241 + $0xc8] sm:$0xfe]
        %v3357 = vld [vmem:[%s241 + $0xd0] sm:$0xff]
        %v3358 = vld [vmem:[%s241 + $0xd8] sm:$0xff]
        %v3359 = vld [vmem:[%s241 + $0xe0] sm:$0x1]
        %v3360 = vld [vmem:[%s241 + $0xe8] sm:$0x1]
        %v3361 = vld [vmem:[%s241 + $0xf0] sm:$0xfe]
        %v3362 = vld [vmem:[%s241 + $0xf8] sm:$0xfe]
        %v3363 = vld [vmem:[%s241 + $0x100] sm:$0xff]
        %v3364 = vld [vmem:[%s241 + $0x108] sm:$0xff]
        %v3365 = vld [vmem:[%s241 + $0x110] sm:$0x1]
        %v3366 = vld [vmem:[%s241 + $0x118] sm:$0x1]
        %v3367 = vld [vmem:[%s241 + $0x120] sm:$0xfe]
        %v3368 = vld [vmem:[%s241 + $0x128] sm:$0xfe]
        %v3369 = vld [vmem:[%s241 + $0x130] sm:$0xff]
        %v3370 = vld [vmem:[%s241 + $0x138] sm:$0xff]
        %v3371 = vld [vmem:[%s241 + $0x140] sm:$0x1]
        %v3372 = vld [vmem:[%s241 + $0x148] sm:$0x1]
        %v3373 = vld [vmem:[%s241 + $0x150] sm:$0xfe]
        %v3374 = vld [vmem:[%s241 + $0x158] sm:$0xfe]
        %v3375 = vld [vmem:[%s241 + $0x160] sm:$0xff]
        %v3376 = vld [vmem:[%s241 + $0x168] sm:$0xff]
        %v3377 = vld [vmem:[%s241 + $0x170] sm:$0x1]
        %v3378 = vld [vmem:[%s241 + $0x178] sm:$0x1]
        %vm3427 = vcmask 1046528
        %v3428 = vrot.slane %v3331, 1
        %v3429 = vrot.slane %v3333, 1
        %v3430 = vsel %vm3427, %v3428, %v3429
        %v3431 = vrot.slane %v3332, 1
        %v3432 = vrot.slane %v3334, 1
        %v3433 = vsel %vm3427, %v3431, %v3432
        %v3434 = vrot.slane %v3335, 1
        %v3435 = vsel %vm3427, %v3429, %v3434
        %v3436 = vrot.slane %v3336, 1
        %v3437 = vsel %vm3427, %v3432, %v3436
        %v3438 = vrot.slane %v3337, 1
        %v3439 = vrot.slane %v3339, 1
        %v3440 = vsel %vm3427, %v3438, %v3439
        %v3441 = vrot.slane %v3338, 1
        %v3442 = vrot.slane %v3340, 1
        %v3443 = vsel %vm3427, %v3441, %v3442
        %v3444 = vrot.slane %v3341, 1
        %v3445 = vsel %vm3427, %v3439, %v3444
        %v3446 = vrot.slane %v3342, 1
        %v3447 = vsel %vm3427, %v3442, %v3446
        %v3448 = vrot.slane %v3343, 1
        %v3449 = vrot.slane %v3345, 1
        %v3450 = vsel %vm3427, %v3448, %v3449
        %v3451 = vrot.slane %v3344, 1
        %v3452 = vrot.slane %v3346, 1
        %v3453 = vsel %vm3427, %v3451, %v3452
        %v3454 = vrot.slane %v3347, 1
        %v3455 = vsel %vm3427, %v3449, %v3454
        %v3456 = vrot.slane %v3348, 1
        %v3457 = vsel %vm3427, %v3452, %v3456
        %v3458 = vrot.slane %v3349, 1
        %v3459 = vrot.slane %v3351, 1
        %v3460 = vsel %vm3427, %v3458, %v3459
        %v3461 = vrot.slane %v3350, 1
        %v3462 = vrot.slane %v3352, 1
        %v3463 = vsel %vm3427, %v3461, %v3462
        %v3464 = vrot.slane %v3353, 1
        %v3465 = vsel %vm3427, %v3459, %v3464
        %v3466 = vrot.slane %v3354, 1
        %v3467 = vsel %vm3427, %v3462, %v3466
        %v3468 = vrot.slane %v3355, 1
        %v3469 = vrot.slane %v3357, 1
        %v3470 = vsel %vm3427, %v3468, %v3469
        %v3471 = vrot.slane %v3356, 1
        %v3472 = vrot.slane %v3358, 1
        %v3473 = vsel %vm3427, %v3471, %v3472
        %v3474 = vrot.slane %v3359, 1
        %v3475 = vsel %vm3427, %v3469, %v3474
        %v3476 = vrot.slane %v3360, 1
        %v3477 = vsel %vm3427, %v3472, %v3476
        %v3478 = vrot.slane %v3361, 1
        %v3479 = vrot.slane %v3363, 1
        %v3480 = vsel %vm3427, %v3478, %v3479
        %v3481 = vrot.slane %v3362, 1
        %v3482 = vrot.slane %v3364, 1
        %v3483 = vsel %vm3427, %v3481, %v3482
        %v3484 = vrot.slane %v3365, 1
        %v3485 = vsel %vm3427, %v3479, %v3484
        %v3486 = vrot.slane %v3366, 1
        %v3487 = vsel %vm3427, %v3482, %v3486
        %v3488 = vrot.slane %v3367, 1
        %v3489 = vrot.slane %v3369, 1
        %v3490 = vsel %vm3427, %v3488, %v3489
        %v3491 = vrot.slane %v3368, 1
        %v3492 = vrot.slane %v3370, 1
        %v3493 = vsel %vm3427, %v3491, %v3492
        %v3494 = vrot.slane %v3371, 1
        %v3495 = vsel %vm3427, %v3489, %v3494
        %v3496 = vrot.slane %v3372, 1
        %v3497 = vsel %vm3427, %v3492, %v3496
        %v3498 = vrot.slane %v3373, 1
        %v3499 = vrot.slane %v3375, 1
        %v3500 = vsel %vm3427, %v3498, %v3499
        %v3501 = vrot.slane %v3374, 1
        %v3502 = vrot.slane %v3376, 1
        %v3503 = vsel %vm3427, %v3501, %v3502
        %v3504 = vrot.slane %v3377, 1
        %v3505 = vsel %vm3427, %v3499, %v3504
        %v3506 = vrot.slane %v3378, 1
        %v3507 = vsel %vm3427, %v3502, %v3506
        %v3540 = vld [vmem:[%s4] sm:$0x3]
        %v3542 = vlaneseq
        %v3543 = vshrl.u32 %v3542, 7
        %v3544 = vsub.s32 0, %v3543
        %v3545 = vrot.slane %v3540, %v3544
        %v3546 = vlaneseq
        %v3547 = vshrl.u32 %v3546, 7
        %v3548 = vsub.s32 1, %v3547
        %v3549 = vrot.slane %v3540, %v3548
        %v3552 = vadd.f32 %v3299, %v3545
        %v3553 = vadd.f32 %v3300, %v3549
        %v3554 = vadd.f32 %v3301, %v3545
        %v3555 = vadd.f32 %v3302, %v3549
        %v3556 = vadd.f32 %v3303, %v3545
        %v3557 = vadd.f32 %v3304, %v3549
        %v3558 = vadd.f32 %v3305, %v3545
        %v3559 = vadd.f32 %v3306, %v3549
        %v3560 = vadd.f32 %v3307, %v3545
        %v3561 = vadd.f32 %v3308, %v3549
        %v3562 = vadd.f32 %v3309, %v3545
        %v3563 = vadd.f32 %v3310, %v3549
        %v3564 = vadd.f32 %v3311, %v3545
        %v3565 = vadd.f32 %v3312, %v3549
        %v3566 = vadd.f32 %v3313, %v3545
        %v3567 = vadd.f32 %v3314, %v3549
        %v3568 = vadd.f32 %v3315, %v3545
        %v3569 = vadd.f32 %v3316, %v3549
        %v3570 = vadd.f32 %v3317, %v3545
        %v3571 = vadd.f32 %v3318, %v3549
        %v3572 = vadd.f32 %v3319, %v3545
        %v3573 = vadd.f32 %v3320, %v3549
        %v3574 = vadd.f32 %v3321, %v3545
        %v3575 = vadd.f32 %v3322, %v3549
        %v3576 = vadd.f32 %v3323, %v3545
        %v3577 = vadd.f32 %v3324, %v3549
        %v3578 = vadd.f32 %v3325, %v3545
        %v3579 = vadd.f32 %v3326, %v3549
        %v3580 = vadd.f32 %v3327, %v3545
        %v3581 = vadd.f32 %v3328, %v3549
        %v3582 = vadd.f32 %v3329, %v3545
        %v3583 = vadd.f32 %v3330, %v3549
        %v3584 = vadd.f32 %v3552, %v3430
        %v3585 = vadd.f32 %v3553, %v3433
        %v3586 = vadd.f32 %v3554, %v3435
        %v3587 = vadd.f32 %v3555, %v3437
        %v3588 = vadd.f32 %v3556, %v3440
        %v3589 = vadd.f32 %v3557, %v3443
        %v3590 = vadd.f32 %v3558, %v3445
        %v3591 = vadd.f32 %v3559, %v3447
        %v3592 = vadd.f32 %v3560, %v3450
        %v3593 = vadd.f32 %v3561, %v3453
        %v3594 = vadd.f32 %v3562, %v3455
        %v3595 = vadd.f32 %v3563, %v3457
        %v3596 = vadd.f32 %v3564, %v3460
        %v3597 = vadd.f32 %v3565, %v3463
        %v3598 = vadd.f32 %v3566, %v3465
        %v3599 = vadd.f32 %v3567, %v3467
        %v3600 = vadd.f32 %v3568, %v3470
        %v3601 = vadd.f32 %v3569, %v3473
        %v3602 = vadd.f32 %v3570, %v3475
        %v3603 = vadd.f32 %v3571, %v3477
        %v3604 = vadd.f32 %v3572, %v3480
        %v3605 = vadd.f32 %v3573, %v3483
        %v3606 = vadd.f32 %v3574, %v3485
        %v3607 = vadd.f32 %v3575, %v3487
        %v3608 = vadd.f32 %v3576, %v3490
        %v3609 = vadd.f32 %v3577, %v3493
        %v3610 = vadd.f32 %v3578, %v3495
        %v3611 = vadd.f32 %v3579, %v3497
        %v3612 = vadd.f32 %v3580, %v3500
        %v3613 = vadd.f32 %v3581, %v3503
        %v3614 = vadd.f32 %v3582, %v3505
        %v3615 = vadd.f32 %v3583, %v3507
        %v3616 = vmax.f32 %v3584, 0.0
        %v3617 = vmax.f32 %v3585, 0.0
        %v3618 = vmax.f32 %v3586, 0.0
        %v3619 = vmax.f32 %v3587, 0.0
        %v3620 = vmax.f32 %v3588, 0.0
        %v3621 = vmax.f32 %v3589, 0.0
        %v3622 = vmax.f32 %v3590, 0.0
        %v3623 = vmax.f32 %v3591, 0.0
        %v3624 = vmax.f32 %v3592, 0.0
        %v3625 = vmax.f32 %v3593, 0.0
        %v3626 = vmax.f32 %v3594, 0.0
        %v3627 = vmax.f32 %v3595, 0.0
        %v3628 = vmax.f32 %v3596, 0.0
        %v3629 = vmax.f32 %v3597, 0.0
        %v3630 = vmax.f32 %v3598, 0.0
        %v3631 = vmax.f32 %v3599, 0.0
        %v3632 = vmax.f32 %v3600, 0.0
        %v3633 = vmax.f32 %v3601, 0.0
        %v3634 = vmax.f32 %v3602, 0.0
        %v3635 = vmax.f32 %v3603, 0.0
        %v3636 = vmax.f32 %v3604, 0.0
        %v3637 = vmax.f32 %v3605, 0.0
        %v3638 = vmax.f32 %v3606, 0.0
        %v3639 = vmax.f32 %v3607, 0.0
        %v3640 = vmax.f32 %v3608, 0.0
        %v3641 = vmax.f32 %v3609, 0.0
        %v3642 = vmax.f32 %v3610, 0.0
        %v3643 = vmax.f32 %v3611, 0.0
        %v3644 = vmax.f32 %v3612, 0.0
        %v3645 = vmax.f32 %v3613, 0.0
        %v3646 = vmax.f32 %v3614, 0.0
        %v3647 = vmax.f32 %v3615, 0.0
        %3648 = vst [vmem:[%s235] sm:$0xff] %v3616
        %3649 = vst [vmem:[%s235 + $0x8] sm:$0xff] %v3617
        %3650 = vst [vmem:[%s235 + $0x10] sm:$0xff] %v3618
        %3651 = vst [vmem:[%s235 + $0x18] sm:$0xff] %v3619
        %3652 = vst [vmem:[%s235 + $0x20] sm:$0xff] %v3620
        %3653 = vst [vmem:[%s235 + $0x28] sm:$0xff] %v3621
        %3654 = vst [vmem:[%s235 + $0x30] sm:$0xff] %v3622
        %3655 = vst [vmem:[%s235 + $0x38] sm:$0xff] %v3623
        %3656 = vst [vmem:[%s235 + $0x40] sm:$0xff] %v3624
        %3657 = vst [vmem:[%s235 + $0x48] sm:$0xff] %v3625
        %3658 = vst [vmem:[%s235 + $0x50] sm:$0xff] %v3626
        %3659 = vst [vmem:[%s235 + $0x58] sm:$0xff] %v3627
        %3660 = vst [vmem:[%s235 + $0x60] sm:$0xff] %v3628
        %3661 = vst [vmem:[%s235 + $0x68] sm:$0xff] %v3629
        %3662 = vst [vmem:[%s235 + $0x70] sm:$0xff] %v3630
        %3663 = vst [vmem:[%s235 + $0x78] sm:$0xff] %v3631
        %3664 = vst [vmem:[%s235 + $0x80] sm:$0xff] %v3632
        %3665 = vst [vmem:[%s235 + $0x88] sm:$0xff] %v3633
        %3666 = vst [vmem:[%s235 + $0x90] sm:$0xff] %v3634
        %3667 = vst [vmem:[%s235 + $0x98] sm:$0xff] %v3635
        %3668 = vst [vmem:[%s235 + $0xa0] sm:$0xff] %v3636
        %3669 = vst [vmem:[%s235 + $0xa8] sm:$0xff] %v3637
        %3670 = vst [vmem:[%s235 + $0xb0] sm:$0xff] %v3638
        %3671 = vst [vmem:[%s235 + $0xb8] sm:$0xff] %v3639
        %3672 = vst [vmem:[%s235 + $0xc0] sm:$0xff] %v3640
        %3673 = vst [vmem:[%s235 + $0xc8] sm:$0xff] %v3641
        %3674 = vst [vmem:[%s235 + $0xd0] sm:$0xff] %v3642
        %3675 = vst [vmem:[%s235 + $0xd8] sm:$0xff] %v3643
        %3676 = vst [vmem:[%s235 + $0xe0] sm:$0xff] %v3644
        %3677 = vst [vmem:[%s235 + $0xe8] sm:$0xff] %v3645
        %3678 = vst [vmem:[%s235 + $0xf0] sm:$0xff] %v3646
        %3679 = vst [vmem:[%s235 + $0xf8] sm:$0xff] %v3647
        %s3680 = sand.u32 %s138, 1
        %s3681 = scalar_lea.sflag [#allocation5], %s3680
        %s3682 = sand.u32 %s138, 1
        %s3683 = smul.addr %s3682, 256
        %s3684 = scalar_lea.vmem [#allocation6], %s3683
        // Predicated region
        $region45: #{tpu_custom_call.1} parent=39 // pred_check
          %p3685 = pneg %p148
        $region46: #{tpu_custom_call.1} parent=39 // pred_check_branch
          %3687 = sbr.rel (%p3685) target = $region48
        $region47: #{tpu_custom_call.1} parent=39 // pred_region
          %s3688 = smul.u32 8, %s20
          %s3690 = ssub.s32 4096, 4096
          %3691 = vsyncadd %s3681, %s3690
          %s3692 = smul.addr %s3688, 4
          %s3693 = smul.addr %s3692, 128
          %s3694 = scalar_lea.hbm %s5, %s3693
          %s3695 = sshll.u32 %s3684, 4
          %s3696 = int_to_ptr.vmem [resolvable:$true] %s3695
          %3701 = dma.vmem_to_hbm [thread:$0]  %s3696, 4096, %s3694, %s3681, 256, 256, 16
        $region48: #{tpu_custom_call.1} parent=39 // pred_fallthru
          _
      $region40: #{tpu_custom_call.1} parent=5 // pred_fallthru
        _
      %p3702 = scmp.le.s32.totalorder 2, %s15
      // Predicated region
      $region49: #{tpu_custom_call.1} parent=5 // pred_check
        %p3703 = pneg %p3702
      $region50: #{tpu_custom_call.1} parent=5 // pred_check_branch
        %3705 = sbr.rel (%p3703) target = $region52
      $region51: #{tpu_custom_call.1} parent=5 // pred_region
        %s3706 = ssub.s32 %s15, 2
        // Predicated region
        $region53: #{tpu_custom_call.1} parent=51 // pred_check
          %p3707 = pneg %p154
        $region54: #{tpu_custom_call.1} parent=51 // pred_check_branch
          %3709 = sbr.rel (%p3707) target = $region56
        $region55: #{tpu_custom_call.1} parent=51 // pred_region
          %s3710 = sand.u32 %s139, 1
          %s3711 = scalar_lea.sflag [#allocation5], %s3710
          %s3712 = sand.u32 %s139, 1
          %s3713 = smul.addr %s3712, 256
          %s3714 = scalar_lea.vmem [#allocation6], %s3713
          %3715 = dma.done %s3711, 4096
        $region56: #{tpu_custom_call.1} parent=51 // pred_fallthru
          _
      $region52: #{tpu_custom_call.1} parent=5 // pred_fallthru
        _
    $region6: #{tpu_custom_call.1} parent=1 // loop_footer
      %s19 = sadd.s32 1, %s15
    $region7: #{tpu_custom_call.1} parent=1 // loop_footer_branch
      %14 = sbr.rel target = $region3
    $region8: #{tpu_custom_call.1} parent=1 // loop_exit
      _
    %3716 = vsyncpa [#allocation4], 1
    %s3717 = scalar_lea.sflag [#allocation4], 1
    %3718 = vsyncpa %s3717, 1
    %3719 = vsyncpa [#allocation5], 1
    %s3720 = scalar_lea.sflag [#allocation5], 1
    %3721 = vsyncpa %s3720, 1

</llo_original>
